<compile_context>
chip_gen: v6e
topology: v6e:2x2x1
jax: 0.10.0
libtpu: 0.0.40
codegen_flags: <defaults>
</compile_context>

<pallas_src>
import functools

import numpy as np
import jax
import jax.numpy as jnp
from jax.experimental import pallas as pl
from jax.experimental.pallas import tpu as pltpu


_WEIGHT_ORDER = (
    "c1_band", "c1_bias", "c1_rsel", "c1_csel",
    "c2_band", "c2_bias", "c2_rsel", "c2_csel",
    "f1_w", "f1_b", "f2_w", "f2_b", "f3_w", "f3_b",
)


# ------------------------------ Pallas kernel ------------------------------ #

def _net_kernel(bt,
                x_ref,
                c1a_ref, c1b_ref, r1_ref, c1s_ref,
                c2a_ref, c2b_ref, r2_ref, c2s_ref,
                f1w_ref, f1b_ref, f2w_ref, f2b_ref, f3w_ref, f3b_ref,
                o_ref):
    """Whole Net forward for a block of `bt` images, entirely in VMEM.

    x_ref   : (bt, 32, 96)  rows = h, lanes = w*3 + ci
    c1a_ref : (5, 96, 168)  conv1 banded weights (out lane = ow*6 + co)
    c1b_ref : (1, 84)       conv1 bias tiled over pooled width
    r1_ref  : (2, 14, 28)   pool1 row-select (even/odd) 0/1 matrices
    c1s_ref : (2, 168, 84)  pool1 lane-select (even/odd) 0/1 matrices
    c2a_ref : (5, 84, 160)  conv2 banded weights (out lane = ow*16 + co)
    c2b_ref : (1, 80)
    r2_ref  : (2, 5, 10)
    c2s_ref : (2, 160, 80)
    f1w_ref : (400, 120)    fc1 weight, rows permuted to h*80 + w*16 + c
    f1b_ref : (1, 120)
    f2w_ref : (120, 84)     f2b_ref: (1, 84)
    f3w_ref : (84, 128)     lane-padded, f3b_ref: (1, 128)
    o_ref   : (bt, 1, 128)  lane-padded logits (lanes >= 2 are zero)
    """
    def mm(a, b):
        return jnp.dot(a, b, preferred_element_type=jnp.float32)

    for n in range(bt):
        x = x_ref[n]                                                  # (32, 96)

        # conv1: 5 banded matmuls over contiguous row windows -> (28, 168)
        y = mm(x[0:28, :], c1a_ref[0])
        for i in range(1, 5):
            y = y + mm(x[i:i + 28, :], c1a_ref[i])

        # 2x2 max pool via exact 0/1 selection matmuls, then bias + ReLU
        # (bias is per-channel-uniform and ReLU monotone, so they commute
        # with the max).
        ph = jnp.maximum(mm(r1_ref[0], y), mm(r1_ref[1], y))          # (14, 168)
        a1 = jnp.maximum(mm(ph, c1s_ref[0]), mm(ph, c1s_ref[1]))      # (14, 84)
        a1 = jnp.maximum(a1 + c1b_ref[...], 0.0)

        # conv2: 5 banded matmuls -> (10, 160)
        y2 = mm(a1[0:10, :], c2a_ref[0])
        for i in range(1, 5):
            y2 = y2 + mm(a1[i:i + 10, :], c2a_ref[i])

        ph2 = jnp.maximum(mm(r2_ref[0], y2), mm(r2_ref[1], y2))       # (5, 160)
        a2 = jnp.maximum(mm(ph2, c2s_ref[0]), mm(ph2, c2s_ref[1]))    # (5, 80)
        a2 = jnp.maximum(a2 + c2b_ref[...], 0.0)

        # fc1: contract (5, 80) against (400, 120) as 5 row-slab matmuls.
        # The NCHW-flatten permutation is folded into f1w's row order, so no
        # in-kernel reshape/transpose is needed.
        h1 = mm(a2[0:1, :], f1w_ref[0:80, :])
        for hh in range(1, 5):
            h1 = h1 + mm(a2[hh:hh + 1, :], f1w_ref[80 * hh:80 * hh + 80, :])
        h1 = jnp.maximum(h1 + f1b_ref[...], 0.0)                      # (1, 120)

        h2 = jnp.maximum(mm(h1, f2w_ref[...]) + f2b_ref[...], 0.0)    # (1, 84)
        logits = mm(h2, f3w_ref[...]) + f3b_ref[...]                  # (1, 128)
        o_ref[n] = logits


# ------------------------------- JAX wrapper -------------------------------- #

def _pick_batch_tile(batch):
    # Largest tile in {8,4,2} dividing batch while keeping grid length >= 2
    # (so v7x's two TensorCores both get work); else 1.
    for bt in (8, 4, 2):
        if batch % bt == 0 and batch // bt >= 2:
            return bt
    return 1


def net_forward(prep, x_nchw):
    B = x_nchw.shape[0]
    bt = _pick_batch_tile(B)
    # Only XLA glue: relayout the tiny input so lanes are (w*3 + ci).
    x2d = jnp.transpose(x_nchw, (0, 2, 3, 1)).reshape(B, 32, 96).astype(jnp.float32)

    weights = [prep[k] for k in _WEIGHT_ORDER]
    in_specs = [pl.BlockSpec((bt, 32, 96), lambda b: (b, 0, 0))]
    for w in weights:
        in_specs.append(pl.BlockSpec(w.shape, lambda b, _nd=w.ndim: (0,) * _nd))

    out = pl.pallas_call(
        functools.partial(_net_kernel, bt),
        out_shape=jax.ShapeDtypeStruct((B, 1, 128), jnp.float32),
        grid=(B // bt,),
        in_specs=in_specs,
        out_specs=pl.BlockSpec((bt, 1, 128), lambda b: (b, 0, 0)),
        compiler_params=pltpu.CompilerParams(
            dimension_semantics=("parallel",),
            vmem_limit_bytes=32 * 1024 * 1024),
    )(x2d, *weights)
    return out[:, 0, :2]


# --------------------------- parameter preparation -------------------------- #

def init_params(key):
    """Deterministic PyTorch-default-like uniform(-1/sqrt(fan_in), +) init."""
    ks = jax.random.split(key, 10)

    def u(k, shape, fan_in):
        bound = 1.0 / jnp.sqrt(jnp.float32(fan_in))
        return jax.random.uniform(k, shape, jnp.float32, -bound, bound)

    return {
        "conv1_w": u(ks[0], (6, 3, 5, 5), 3 * 25),
        "conv1_b": u(ks[1], (6,), 3 * 25),
        "conv2_w": u(ks[2], (16, 6, 5, 5), 6 * 25),
        "conv2_b": u(ks[3], (16,), 6 * 25),
        "fc1_w": u(ks[4], (120, 400), 400),
        "fc1_b": u(ks[5], (120,), 400),
        "fc2_w": u(ks[6], (84, 120), 120),
        "fc2_b": u(ks[7], (84,), 120),
        "fc3_w": u(ks[8], (2, 84), 84),
        "fc3_b": u(ks[9], (2,), 84),
    }


def prepare_params(p):
    """One-time layout prep: banded conv weights, pool selection matrices,
    flatten-folded fc1, lane-padded fc3. All done once, off the hot path."""

    def np32(a):
        return np.asarray(a, dtype=np.float32)

    def conv_band(w, w_in, w_out):
        # w: (Cout, Cin, KH, KW) -> A: (KH, w_in*Cin, w_out*Cout) with
        # A[i, (ow+j)*Cin+ci, ow*Cout+co] = w[co, ci, i, j]
        cout, cin, kh, kw = w.shape
        A = np.zeros((kh, w_in * cin, w_out * cout), np.float32)
        for i in range(kh):
            for j in range(kw):
                wij = w[:, :, i, j].T                       # (Cin, Cout)
                for ow in range(w_out):
                    r = (ow + j) * cin
                    A[i, r:r + cin, ow * cout:(ow + 1) * cout] = wij
        return A

    def pool_row_sel(h_out):
        # (2, h_out, 2*h_out): even / odd row selectors.
        e = np.zeros((h_out, 2 * h_out), np.float32)
        o = np.zeros((h_out, 2 * h_out), np.float32)
        idx = np.arange(h_out)
        e[idx, 2 * idx] = 1.0
        o[idx, 2 * idx + 1] = 1.0
        return np.stack([e, o])

    def pool_col_sel(w_out, c):
        # (2, 2*w_out*c, w_out*c): even / odd width-group selectors.
        e = np.zeros((2 * w_out * c, w_out * c), np.float32)
        o = np.zeros((2 * w_out * c, w_out * c), np.float32)
        for pw in range(w_out):
            for ch in range(c):
                e[(2 * pw) * c + ch, pw * c + ch] = 1.0
                o[(2 * pw + 1) * c + ch, pw * c + ch] = 1.0
        return np.stack([e, o])

    c1w = np32(p["conv1_w"])
    c2w = np32(p["conv2_w"])

    # fc1: fold PyTorch's NCHW flatten (c*25 + h*5 + w) into the weight rows so
    # the kernel can consume the (h, w*16 + c) layout directly.
    f1 = np32(p["fc1_w"]).reshape(120, 16, 5, 5).transpose(2, 3, 1, 0).reshape(400, 120)
    f2 = np32(p["fc2_w"]).T                                  # (120, 84)
    f3 = np.zeros((84, 128), np.float32)
    f3[:, :2] = np32(p["fc3_w"]).T
    f3b = np.zeros((1, 128), np.float32)
    f3b[0, :2] = np32(p["fc3_b"])

    prep = {
        "c1_band": conv_band(c1w, 32, 28),                   # (5, 96, 168)
        "c1_bias": np.tile(np32(p["conv1_b"]), 14)[None, :], # (1, 84)
        "c1_rsel": pool_row_sel(14),                         # (2, 14, 28)
        "c1_csel": pool_col_sel(14, 6),                      # (2, 168, 84)
        "c2_band": conv_band(c2w, 14, 10),                   # (5, 84, 160)
        "c2_bias": np.tile(np32(p["conv2_b"]), 5)[None, :],  # (1, 80)
        "c2_rsel": pool_row_sel(5),                          # (2, 5, 10)
        "c2_csel": pool_col_sel(5, 16),                      # (2, 160, 80)
        "f1_w": f1, "f1_b": np32(p["fc1_b"])[None, :],       # (400,120), (1,120)
        "f2_w": f2, "f2_b": np32(p["fc2_b"])[None, :],       # (120,84), (1,84)
        "f3_w": f3, "f3_b": f3b,                             # (84,128), (1,128)
    }
    return {k: jnp.asarray(v) for k, v in prep.items()}


# ------------------------------ pure-JAX reference --------------------------- #

def net_reference(params, x_nchw):
    x = jnp.transpose(x_nchw, (0, 2, 3, 1))

    def conv(x, w, b):
        y = jax.lax.conv_general_dilated(
            x, jnp.transpose(w, (2, 3, 1, 0)), (1, 1), "VALID",
            dimension_numbers=("NHWC", "HWIO", "NHWC"))
        return jax.nn.relu(y + b)

    def pool(x):
        B, H, W, C = x.shape
        return jnp.max(x.reshape(B, H // 2, 2, W // 2, 2, C), axis=(2, 4))

    x = pool(conv(x, params["conv1_w"], params["conv1_b"]))
    x = pool(conv(x, params["conv2_w"], params["conv2_b"]))
    x = jnp.transpose(x, (0, 3, 1, 2)).reshape(x.shape[0], -1)
    x = jax.nn.relu(x @ params["fc1_w"].T + params["fc1_b"])
    x = jax.nn.relu(x @ params["fc2_w"].T + params["fc2_b"])
    return x @ params["fc3_w"].T + params["fc3_b"]


if __name__ == "__main__":
    key = jax.random.PRNGKey(0)
    k_params, k_x = jax.random.split(key)
    params = init_params(k_params)
    prep = prepare_params(params)
    # Input must be (B, 3, 32, 32) for the 16*5*5 flatten to be consistent.
    x = jax.random.normal(k_x, (2, 3, 32, 32), jnp.float32)

    fwd = jax.jit(net_forward)
    out = jax.block_until_ready(fwd(prep, x))
    ref = jax.block_until_ready(net_reference(params, x))

    assert out.shape == (2, 2), out.shape
    assert jnp.allclose(out, ref, rtol=1e-3, atol=1e-3), (out, ref)
    print("KERNEL_OK")
</pallas_src>

<mosaic_0001>
module attributes {stable_mosaic.version = 11 : i64} {
  func.func @_net_kernel(%arg0: i32, %arg1: memref<1x32x96xf32, #tpu.memory_space<vmem>>, %arg2: memref<5x96x168xf32, #tpu.memory_space<vmem>>, %arg3: memref<1x84xf32, #tpu.memory_space<vmem>>, %arg4: memref<2x14x28xf32, #tpu.memory_space<vmem>>, %arg5: memref<2x168x84xf32, #tpu.memory_space<vmem>>, %arg6: memref<5x84x160xf32, #tpu.memory_space<vmem>>, %arg7: memref<1x80xf32, #tpu.memory_space<vmem>>, %arg8: memref<2x5x10xf32, #tpu.memory_space<vmem>>, %arg9: memref<2x160x80xf32, #tpu.memory_space<vmem>>, %arg10: memref<400x120xf32, #tpu.memory_space<vmem>>, %arg11: memref<1x120xf32, #tpu.memory_space<vmem>>, %arg12: memref<120x84xf32, #tpu.memory_space<vmem>>, %arg13: memref<1x84xf32, #tpu.memory_space<vmem>>, %arg14: memref<84x128xf32, #tpu.memory_space<vmem>>, %arg15: memref<1x128xf32, #tpu.memory_space<vmem>>, %arg16: memref<1x1x128xf32, #tpu.memory_space<vmem>>) attributes {dimension_semantics = [#tpu.dimension_semantics<parallel>], iteration_bounds = array<i64: 2>, scalar_prefetch = 0 : i64, scratch_operands = 0 : i64, tpu.core_type = #tpu.core_type<tc>, window_params = [{transform_indices = @transform_0, window_bounds = array<i64: 1, 32, 96>}, {pipeline_mode = #tpu.pipeline_mode<synchronous>, transform_indices = @transform_1, window_bounds = array<i64: 5, 96, 168>}, {pipeline_mode = #tpu.pipeline_mode<synchronous>, transform_indices = @transform_2, window_bounds = array<i64: 1, 84>}, {pipeline_mode = #tpu.pipeline_mode<synchronous>, transform_indices = @transform_3, window_bounds = array<i64: 2, 14, 28>}, {pipeline_mode = #tpu.pipeline_mode<synchronous>, transform_indices = @transform_4, window_bounds = array<i64: 2, 168, 84>}, {pipeline_mode = #tpu.pipeline_mode<synchronous>, transform_indices = @transform_5, window_bounds = array<i64: 5, 84, 160>}, {pipeline_mode = #tpu.pipeline_mode<synchronous>, transform_indices = @transform_6, window_bounds = array<i64: 1, 80>}, {pipeline_mode = #tpu.pipeline_mode<synchronous>, transform_indices = @transform_7, window_bounds = array<i64: 2, 5, 10>}, {pipeline_mode = #tpu.pipeline_mode<synchronous>, transform_indices = @transform_8, window_bounds = array<i64: 2, 160, 80>}, {pipeline_mode = #tpu.pipeline_mode<synchronous>, transform_indices = @transform_9, window_bounds = array<i64: 400, 120>}, {pipeline_mode = #tpu.pipeline_mode<synchronous>, transform_indices = @transform_10, window_bounds = array<i64: 1, 120>}, {pipeline_mode = #tpu.pipeline_mode<synchronous>, transform_indices = @transform_11, window_bounds = array<i64: 120, 84>}, {pipeline_mode = #tpu.pipeline_mode<synchronous>, transform_indices = @transform_12, window_bounds = array<i64: 1, 84>}, {pipeline_mode = #tpu.pipeline_mode<synchronous>, transform_indices = @transform_13, window_bounds = array<i64: 84, 128>}, {pipeline_mode = #tpu.pipeline_mode<synchronous>, transform_indices = @transform_14, window_bounds = array<i64: 1, 128>}, {transform_indices = @transform_15, window_bounds = array<i64: 1, 1, 128>}]} {
    %c0 = arith.constant 0 : index
    %c0_0 = arith.constant 0 : index
    %c0_1 = arith.constant 0 : index
    %0 = vector.load %arg1[%c0, %c0_0, %c0_1] : memref<1x32x96xf32, #tpu.memory_space<vmem>>, vector<1x32x96xf32>
    %1 = vector.shape_cast %0 : vector<1x32x96xf32> to vector<32x96xf32>
    %2 = vector.extract_strided_slice %1 {offsets = [0, 0], sizes = [28, 96], strides = [1, 1]} : vector<32x96xf32> to vector<28x96xf32>
    %c0_2 = arith.constant 0 : index
    %c0_3 = arith.constant 0 : index
    %c0_4 = arith.constant 0 : index
    %3 = vector.load %arg2[%c0_2, %c0_3, %c0_4] : memref<5x96x168xf32, #tpu.memory_space<vmem>>, vector<1x96x168xf32>
    %4 = vector.shape_cast %3 : vector<1x96x168xf32> to vector<96x168xf32>
    %cst = arith.constant dense<0.000000e+00> : vector<28x168xf32>
    %5 = tpu.matmul %2, %4, %cst {dimension_numbers = #tpu.dot_dimension_numbers<[1], [0], [0], [1], [0, 0, 1, 1], [], []>} : vector<28x96xf32>, vector<96x168xf32>, vector<28x168xf32> -> vector<28x168xf32>
    %6 = vector.extract_strided_slice %1 {offsets = [1, 0], sizes = [28, 96], strides = [1, 1]} : vector<32x96xf32> to vector<28x96xf32>
    %c1 = arith.constant 1 : index
    %c0_5 = arith.constant 0 : index
    %c0_6 = arith.constant 0 : index
    %7 = vector.load %arg2[%c1, %c0_5, %c0_6] : memref<5x96x168xf32, #tpu.memory_space<vmem>>, vector<1x96x168xf32>
    %8 = vector.shape_cast %7 : vector<1x96x168xf32> to vector<96x168xf32>
    %cst_7 = arith.constant dense<0.000000e+00> : vector<28x168xf32>
    %9 = tpu.matmul %6, %8, %cst_7 {dimension_numbers = #tpu.dot_dimension_numbers<[1], [0], [0], [1], [0, 0, 1, 1], [], []>} : vector<28x96xf32>, vector<96x168xf32>, vector<28x168xf32> -> vector<28x168xf32>
    %10 = arith.addf %5, %9 : vector<28x168xf32>
    %11 = vector.extract_strided_slice %1 {offsets = [2, 0], sizes = [28, 96], strides = [1, 1]} : vector<32x96xf32> to vector<28x96xf32>
    %c2 = arith.constant 2 : index
    %c0_8 = arith.constant 0 : index
    %c0_9 = arith.constant 0 : index
    %12 = vector.load %arg2[%c2, %c0_8, %c0_9] : memref<5x96x168xf32, #tpu.memory_space<vmem>>, vector<1x96x168xf32>
    %13 = vector.shape_cast %12 : vector<1x96x168xf32> to vector<96x168xf32>
    %cst_10 = arith.constant dense<0.000000e+00> : vector<28x168xf32>
    %14 = tpu.matmul %11, %13, %cst_10 {dimension_numbers = #tpu.dot_dimension_numbers<[1], [0], [0], [1], [0, 0, 1, 1], [], []>} : vector<28x96xf32>, vector<96x168xf32>, vector<28x168xf32> -> vector<28x168xf32>
    %15 = arith.addf %10, %14 : vector<28x168xf32>
    %16 = vector.extract_strided_slice %1 {offsets = [3, 0], sizes = [28, 96], strides = [1, 1]} : vector<32x96xf32> to vector<28x96xf32>
    %c3 = arith.constant 3 : index
    %c0_11 = arith.constant 0 : index
    %c0_12 = arith.constant 0 : index
    %17 = vector.load %arg2[%c3, %c0_11, %c0_12] : memref<5x96x168xf32, #tpu.memory_space<vmem>>, vector<1x96x168xf32>
    %18 = vector.shape_cast %17 : vector<1x96x168xf32> to vector<96x168xf32>
    %cst_13 = arith.constant dense<0.000000e+00> : vector<28x168xf32>
    %19 = tpu.matmul %16, %18, %cst_13 {dimension_numbers = #tpu.dot_dimension_numbers<[1], [0], [0], [1], [0, 0, 1, 1], [], []>} : vector<28x96xf32>, vector<96x168xf32>, vector<28x168xf32> -> vector<28x168xf32>
    %20 = arith.addf %15, %19 : vector<28x168xf32>
    %21 = vector.extract_strided_slice %1 {offsets = [4, 0], sizes = [28, 96], strides = [1, 1]} : vector<32x96xf32> to vector<28x96xf32>
    %c4 = arith.constant 4 : index
    %c0_14 = arith.constant 0 : index
    %c0_15 = arith.constant 0 : index
    %22 = vector.load %arg2[%c4, %c0_14, %c0_15] : memref<5x96x168xf32, #tpu.memory_space<vmem>>, vector<1x96x168xf32>
    %23 = vector.shape_cast %22 : vector<1x96x168xf32> to vector<96x168xf32>
    %cst_16 = arith.constant dense<0.000000e+00> : vector<28x168xf32>
    %24 = tpu.matmul %21, %23, %cst_16 {dimension_numbers = #tpu.dot_dimension_numbers<[1], [0], [0], [1], [0, 0, 1, 1], [], []>} : vector<28x96xf32>, vector<96x168xf32>, vector<28x168xf32> -> vector<28x168xf32>
    %25 = arith.addf %20, %24 : vector<28x168xf32>
    %c0_17 = arith.constant 0 : index
    %c0_18 = arith.constant 0 : index
    %c0_19 = arith.constant 0 : index
    %26 = vector.load %arg4[%c0_17, %c0_18, %c0_19] : memref<2x14x28xf32, #tpu.memory_space<vmem>>, vector<1x14x28xf32>
    %27 = vector.shape_cast %26 : vector<1x14x28xf32> to vector<14x28xf32>
    %cst_20 = arith.constant dense<0.000000e+00> : vector<14x168xf32>
    %28 = tpu.matmul %27, %25, %cst_20 {dimension_numbers = #tpu.dot_dimension_numbers<[1], [0], [0], [1], [0, 0, 1, 1], [], []>} : vector<14x28xf32>, vector<28x168xf32>, vector<14x168xf32> -> vector<14x168xf32>
    %c1_21 = arith.constant 1 : index
    %c0_22 = arith.constant 0 : index
    %c0_23 = arith.constant 0 : index
    %29 = vector.load %arg4[%c1_21, %c0_22, %c0_23] : memref<2x14x28xf32, #tpu.memory_space<vmem>>, vector<1x14x28xf32>
    %30 = vector.shape_cast %29 : vector<1x14x28xf32> to vector<14x28xf32>
    %cst_24 = arith.constant dense<0.000000e+00> : vector<14x168xf32>
    %31 = tpu.matmul %30, %25, %cst_24 {dimension_numbers = #tpu.dot_dimension_numbers<[1], [0], [0], [1], [0, 0, 1, 1], [], []>} : vector<14x28xf32>, vector<28x168xf32>, vector<14x168xf32> -> vector<14x168xf32>
    %32 = arith.maximumf %28, %31 : vector<14x168xf32>
    %c0_25 = arith.constant 0 : index
    %c0_26 = arith.constant 0 : index
    %c0_27 = arith.constant 0 : index
    %33 = vector.load %arg5[%c0_25, %c0_26, %c0_27] : memref<2x168x84xf32, #tpu.memory_space<vmem>>, vector<1x168x84xf32>
    %34 = vector.shape_cast %33 : vector<1x168x84xf32> to vector<168x84xf32>
    %cst_28 = arith.constant dense<0.000000e+00> : vector<14x84xf32>
    %35 = tpu.matmul %32, %34, %cst_28 {dimension_numbers = #tpu.dot_dimension_numbers<[1], [0], [0], [1], [0, 0, 1, 1], [], []>} : vector<14x168xf32>, vector<168x84xf32>, vector<14x84xf32> -> vector<14x84xf32>
    %c1_29 = arith.constant 1 : index
    %c0_30 = arith.constant 0 : index
    %c0_31 = arith.constant 0 : index
    %36 = vector.load %arg5[%c1_29, %c0_30, %c0_31] : memref<2x168x84xf32, #tpu.memory_space<vmem>>, vector<1x168x84xf32>
    %37 = vector.shape_cast %36 : vector<1x168x84xf32> to vector<168x84xf32>
    %cst_32 = arith.constant dense<0.000000e+00> : vector<14x84xf32>
    %38 = tpu.matmul %32, %37, %cst_32 {dimension_numbers = #tpu.dot_dimension_numbers<[1], [0], [0], [1], [0, 0, 1, 1], [], []>} : vector<14x168xf32>, vector<168x84xf32>, vector<14x84xf32> -> vector<14x84xf32>
    %39 = arith.maximumf %35, %38 : vector<14x84xf32>
    %c0_33 = arith.constant 0 : index
    %c0_34 = arith.constant 0 : index
    %40 = vector.load %arg3[%c0_33, %c0_34] : memref<1x84xf32, #tpu.memory_space<vmem>>, vector<1x84xf32>
    %41 = vector.broadcast %40 : vector<1x84xf32> to vector<14x84xf32>
    %42 = arith.addf %39, %41 : vector<14x84xf32>
    %cst_35 = arith.constant 0.000000e+00 : f32
    %43 = vector.broadcast %cst_35 : f32 to vector<14x84xf32>
    %44 = arith.maximumf %42, %43 : vector<14x84xf32>
    %45 = vector.extract_strided_slice %44 {offsets = [0, 0], sizes = [10, 84], strides = [1, 1]} : vector<14x84xf32> to vector<10x84xf32>
    %c0_36 = arith.constant 0 : index
    %c0_37 = arith.constant 0 : index
    %c0_38 = arith.constant 0 : index
    %46 = vector.load %arg6[%c0_36, %c0_37, %c0_38] : memref<5x84x160xf32, #tpu.memory_space<vmem>>, vector<1x84x160xf32>
    %47 = vector.shape_cast %46 : vector<1x84x160xf32> to vector<84x160xf32>
    %cst_39 = arith.constant dense<0.000000e+00> : vector<10x160xf32>
    %48 = tpu.matmul %45, %47, %cst_39 {dimension_numbers = #tpu.dot_dimension_numbers<[1], [0], [0], [1], [0, 0, 1, 1], [], []>} : vector<10x84xf32>, vector<84x160xf32>, vector<10x160xf32> -> vector<10x160xf32>
    %49 = vector.extract_strided_slice %44 {offsets = [1, 0], sizes = [10, 84], strides = [1, 1]} : vector<14x84xf32> to vector<10x84xf32>
    %c1_40 = arith.constant 1 : index
    %c0_41 = arith.constant 0 : index
    %c0_42 = arith.constant 0 : index
    %50 = vector.load %arg6[%c1_40, %c0_41, %c0_42] : memref<5x84x160xf32, #tpu.memory_space<vmem>>, vector<1x84x160xf32>
    %51 = vector.shape_cast %50 : vector<1x84x160xf32> to vector<84x160xf32>
    %cst_43 = arith.constant dense<0.000000e+00> : vector<10x160xf32>
    %52 = tpu.matmul %49, %51, %cst_43 {dimension_numbers = #tpu.dot_dimension_numbers<[1], [0], [0], [1], [0, 0, 1, 1], [], []>} : vector<10x84xf32>, vector<84x160xf32>, vector<10x160xf32> -> vector<10x160xf32>
    %53 = arith.addf %48, %52 : vector<10x160xf32>
    %54 = vector.extract_strided_slice %44 {offsets = [2, 0], sizes = [10, 84], strides = [1, 1]} : vector<14x84xf32> to vector<10x84xf32>
    %c2_44 = arith.constant 2 : index
    %c0_45 = arith.constant 0 : index
    %c0_46 = arith.constant 0 : index
    %55 = vector.load %arg6[%c2_44, %c0_45, %c0_46] : memref<5x84x160xf32, #tpu.memory_space<vmem>>, vector<1x84x160xf32>
    %56 = vector.shape_cast %55 : vector<1x84x160xf32> to vector<84x160xf32>
    %cst_47 = arith.constant dense<0.000000e+00> : vector<10x160xf32>
    %57 = tpu.matmul %54, %56, %cst_47 {dimension_numbers = #tpu.dot_dimension_numbers<[1], [0], [0], [1], [0, 0, 1, 1], [], []>} : vector<10x84xf32>, vector<84x160xf32>, vector<10x160xf32> -> vector<10x160xf32>
    %58 = arith.addf %53, %57 : vector<10x160xf32>
    %59 = vector.extract_strided_slice %44 {offsets = [3, 0], sizes = [10, 84], strides = [1, 1]} : vector<14x84xf32> to vector<10x84xf32>
    %c3_48 = arith.constant 3 : index
    %c0_49 = arith.constant 0 : index
    %c0_50 = arith.constant 0 : index
    %60 = vector.load %arg6[%c3_48, %c0_49, %c0_50] : memref<5x84x160xf32, #tpu.memory_space<vmem>>, vector<1x84x160xf32>
    %61 = vector.shape_cast %60 : vector<1x84x160xf32> to vector<84x160xf32>
    %cst_51 = arith.constant dense<0.000000e+00> : vector<10x160xf32>
    %62 = tpu.matmul %59, %61, %cst_51 {dimension_numbers = #tpu.dot_dimension_numbers<[1], [0], [0], [1], [0, 0, 1, 1], [], []>} : vector<10x84xf32>, vector<84x160xf32>, vector<10x160xf32> -> vector<10x160xf32>
    %63 = arith.addf %58, %62 : vector<10x160xf32>
    %64 = vector.extract_strided_slice %44 {offsets = [4, 0], sizes = [10, 84], strides = [1, 1]} : vector<14x84xf32> to vector<10x84xf32>
    %c4_52 = arith.constant 4 : index
    %c0_53 = arith.constant 0 : index
    %c0_54 = arith.constant 0 : index
    %65 = vector.load %arg6[%c4_52, %c0_53, %c0_54] : memref<5x84x160xf32, #tpu.memory_space<vmem>>, vector<1x84x160xf32>
    %66 = vector.shape_cast %65 : vector<1x84x160xf32> to vector<84x160xf32>
    %cst_55 = arith.constant dense<0.000000e+00> : vector<10x160xf32>
    %67 = tpu.matmul %64, %66, %cst_55 {dimension_numbers = #tpu.dot_dimension_numbers<[1], [0], [0], [1], [0, 0, 1, 1], [], []>} : vector<10x84xf32>, vector<84x160xf32>, vector<10x160xf32> -> vector<10x160xf32>
    %68 = arith.addf %63, %67 : vector<10x160xf32>
    %c0_56 = arith.constant 0 : index
    %c0_57 = arith.constant 0 : index
    %c0_58 = arith.constant 0 : index
    %69 = vector.load %arg8[%c0_56, %c0_57, %c0_58] : memref<2x5x10xf32, #tpu.memory_space<vmem>>, vector<1x5x10xf32>
    %70 = vector.shape_cast %69 : vector<1x5x10xf32> to vector<5x10xf32>
    %cst_59 = arith.constant dense<0.000000e+00> : vector<5x160xf32>
    %71 = tpu.matmul %70, %68, %cst_59 {dimension_numbers = #tpu.dot_dimension_numbers<[1], [0], [0], [1], [0, 0, 1, 1], [], []>} : vector<5x10xf32>, vector<10x160xf32>, vector<5x160xf32> -> vector<5x160xf32>
    %c1_60 = arith.constant 1 : index
    %c0_61 = arith.constant 0 : index
    %c0_62 = arith.constant 0 : index
    %72 = vector.load %arg8[%c1_60, %c0_61, %c0_62] : memref<2x5x10xf32, #tpu.memory_space<vmem>>, vector<1x5x10xf32>
    %73 = vector.shape_cast %72 : vector<1x5x10xf32> to vector<5x10xf32>
    %cst_63 = arith.constant dense<0.000000e+00> : vector<5x160xf32>
    %74 = tpu.matmul %73, %68, %cst_63 {dimension_numbers = #tpu.dot_dimension_numbers<[1], [0], [0], [1], [0, 0, 1, 1], [], []>} : vector<5x10xf32>, vector<10x160xf32>, vector<5x160xf32> -> vector<5x160xf32>
    %75 = arith.maximumf %71, %74 : vector<5x160xf32>
    %c0_64 = arith.constant 0 : index
    %c0_65 = arith.constant 0 : index
    %c0_66 = arith.constant 0 : index
    %76 = vector.load %arg9[%c0_64, %c0_65, %c0_66] : memref<2x160x80xf32, #tpu.memory_space<vmem>>, vector<1x160x80xf32>
    %77 = vector.shape_cast %76 : vector<1x160x80xf32> to vector<160x80xf32>
    %cst_67 = arith.constant dense<0.000000e+00> : vector<5x80xf32>
    %78 = tpu.matmul %75, %77, %cst_67 {dimension_numbers = #tpu.dot_dimension_numbers<[1], [0], [0], [1], [0, 0, 1, 1], [], []>} : vector<5x160xf32>, vector<160x80xf32>, vector<5x80xf32> -> vector<5x80xf32>
    %c1_68 = arith.constant 1 : index
    %c0_69 = arith.constant 0 : index
    %c0_70 = arith.constant 0 : index
    %79 = vector.load %arg9[%c1_68, %c0_69, %c0_70] : memref<2x160x80xf32, #tpu.memory_space<vmem>>, vector<1x160x80xf32>
    %80 = vector.shape_cast %79 : vector<1x160x80xf32> to vector<160x80xf32>
    %cst_71 = arith.constant dense<0.000000e+00> : vector<5x80xf32>
    %81 = tpu.matmul %75, %80, %cst_71 {dimension_numbers = #tpu.dot_dimension_numbers<[1], [0], [0], [1], [0, 0, 1, 1], [], []>} : vector<5x160xf32>, vector<160x80xf32>, vector<5x80xf32> -> vector<5x80xf32>
    %82 = arith.maximumf %78, %81 : vector<5x80xf32>
    %c0_72 = arith.constant 0 : index
    %c0_73 = arith.constant 0 : index
    %83 = vector.load %arg7[%c0_72, %c0_73] : memref<1x80xf32, #tpu.memory_space<vmem>>, vector<1x80xf32>
    %84 = vector.broadcast %83 : vector<1x80xf32> to vector<5x80xf32>
    %85 = arith.addf %82, %84 : vector<5x80xf32>
    %cst_74 = arith.constant 0.000000e+00 : f32
    %86 = vector.broadcast %cst_74 : f32 to vector<5x80xf32>
    %87 = arith.maximumf %85, %86 : vector<5x80xf32>
    %88 = vector.extract_strided_slice %87 {offsets = [0, 0], sizes = [1, 80], strides = [1, 1]} : vector<5x80xf32> to vector<1x80xf32>
    %c0_75 = arith.constant 0 : index
    %c0_76 = arith.constant 0 : index
    %89 = vector.load %arg10[%c0_75, %c0_76] : memref<400x120xf32, #tpu.memory_space<vmem>>, vector<80x120xf32>
    %cst_77 = arith.constant dense<0.000000e+00> : vector<1x120xf32>
    %90 = tpu.matmul %88, %89, %cst_77 {dimension_numbers = #tpu.dot_dimension_numbers<[1], [0], [0], [1], [0, 0, 1, 1], [], []>} : vector<1x80xf32>, vector<80x120xf32>, vector<1x120xf32> -> vector<1x120xf32>
    %91 = vector.extract_strided_slice %87 {offsets = [1, 0], sizes = [1, 80], strides = [1, 1]} : vector<5x80xf32> to vector<1x80xf32>
    %c80 = arith.constant 80 : index
    %c0_78 = arith.constant 0 : index
    %92 = vector.load %arg10[%c80, %c0_78] : memref<400x120xf32, #tpu.memory_space<vmem>>, vector<80x120xf32>
    %cst_79 = arith.constant dense<0.000000e+00> : vector<1x120xf32>
    %93 = tpu.matmul %91, %92, %cst_79 {dimension_numbers = #tpu.dot_dimension_numbers<[1], [0], [0], [1], [0, 0, 1, 1], [], []>} : vector<1x80xf32>, vector<80x120xf32>, vector<1x120xf32> -> vector<1x120xf32>
    %94 = arith.addf %90, %93 : vector<1x120xf32>
    %95 = vector.extract_strided_slice %87 {offsets = [2, 0], sizes = [1, 80], strides = [1, 1]} : vector<5x80xf32> to vector<1x80xf32>
    %c160 = arith.constant 160 : index
    %c0_80 = arith.constant 0 : index
    %96 = vector.load %arg10[%c160, %c0_80] : memref<400x120xf32, #tpu.memory_space<vmem>>, vector<80x120xf32>
    %cst_81 = arith.constant dense<0.000000e+00> : vector<1x120xf32>
    %97 = tpu.matmul %95, %96, %cst_81 {dimension_numbers = #tpu.dot_dimension_numbers<[1], [0], [0], [1], [0, 0, 1, 1], [], []>} : vector<1x80xf32>, vector<80x120xf32>, vector<1x120xf32> -> vector<1x120xf32>
    %98 = arith.addf %94, %97 : vector<1x120xf32>
    %99 = vector.extract_strided_slice %87 {offsets = [3, 0], sizes = [1, 80], strides = [1, 1]} : vector<5x80xf32> to vector<1x80xf32>
    %c240 = arith.constant 240 : index
    %c0_82 = arith.constant 0 : index
    %100 = vector.load %arg10[%c240, %c0_82] : memref<400x120xf32, #tpu.memory_space<vmem>>, vector<80x120xf32>
    %cst_83 = arith.constant dense<0.000000e+00> : vector<1x120xf32>
    %101 = tpu.matmul %99, %100, %cst_83 {dimension_numbers = #tpu.dot_dimension_numbers<[1], [0], [0], [1], [0, 0, 1, 1], [], []>} : vector<1x80xf32>, vector<80x120xf32>, vector<1x120xf32> -> vector<1x120xf32>
    %102 = arith.addf %98, %101 : vector<1x120xf32>
    %103 = vector.extract_strided_slice %87 {offsets = [4, 0], sizes = [1, 80], strides = [1, 1]} : vector<5x80xf32> to vector<1x80xf32>
    %c320 = arith.constant 320 : index
    %c0_84 = arith.constant 0 : index
    %104 = vector.load %arg10[%c320, %c0_84] : memref<400x120xf32, #tpu.memory_space<vmem>>, vector<80x120xf32>
    %cst_85 = arith.constant dense<0.000000e+00> : vector<1x120xf32>
    %105 = tpu.matmul %103, %104, %cst_85 {dimension_numbers = #tpu.dot_dimension_numbers<[1], [0], [0], [1], [0, 0, 1, 1], [], []>} : vector<1x80xf32>, vector<80x120xf32>, vector<1x120xf32> -> vector<1x120xf32>
    %106 = arith.addf %102, %105 : vector<1x120xf32>
    %c0_86 = arith.constant 0 : index
    %c0_87 = arith.constant 0 : index
    %107 = vector.load %arg11[%c0_86, %c0_87] : memref<1x120xf32, #tpu.memory_space<vmem>>, vector<1x120xf32>
    %108 = arith.addf %106, %107 : vector<1x120xf32>
    %cst_88 = arith.constant 0.000000e+00 : f32
    %109 = vector.broadcast %cst_88 : f32 to vector<1x120xf32>
    %110 = arith.maximumf %108, %109 : vector<1x120xf32>
    %c0_89 = arith.constant 0 : index
    %c0_90 = arith.constant 0 : index
    %111 = vector.load %arg12[%c0_89, %c0_90] : memref<120x84xf32, #tpu.memory_space<vmem>>, vector<120x84xf32>
    %cst_91 = arith.constant dense<0.000000e+00> : vector<1x84xf32>
    %112 = tpu.matmul %110, %111, %cst_91 {dimension_numbers = #tpu.dot_dimension_numbers<[1], [0], [0], [1], [0, 0, 1, 1], [], []>} : vector<1x120xf32>, vector<120x84xf32>, vector<1x84xf32> -> vector<1x84xf32>
    %c0_92 = arith.constant 0 : index
    %c0_93 = arith.constant 0 : index
    %113 = vector.load %arg13[%c0_92, %c0_93] : memref<1x84xf32, #tpu.memory_space<vmem>>, vector<1x84xf32>
    %114 = arith.addf %112, %113 : vector<1x84xf32>
    %cst_94 = arith.constant 0.000000e+00 : f32
    %115 = vector.broadcast %cst_94 : f32 to vector<1x84xf32>
    %116 = arith.maximumf %114, %115 : vector<1x84xf32>
    %c0_95 = arith.constant 0 : index
    %c0_96 = arith.constant 0 : index
    %117 = vector.load %arg14[%c0_95, %c0_96] : memref<84x128xf32, #tpu.memory_space<vmem>>, vector<84x128xf32>
    %cst_97 = arith.constant dense<0.000000e+00> : vector<1x128xf32>
    %118 = tpu.matmul %116, %117, %cst_97 {dimension_numbers = #tpu.dot_dimension_numbers<[1], [0], [0], [1], [0, 0, 1, 1], [], []>} : vector<1x84xf32>, vector<84x128xf32>, vector<1x128xf32> -> vector<1x128xf32>
    %c0_98 = arith.constant 0 : index
    %c0_99 = arith.constant 0 : index
    %119 = vector.load %arg15[%c0_98, %c0_99] : memref<1x128xf32, #tpu.memory_space<vmem>>, vector<1x128xf32>
    %120 = arith.addf %118, %119 : vector<1x128xf32>
    %c0_100 = arith.constant 0 : index
    %c0_101 = arith.constant 0 : index
    %c0_102 = arith.constant 0 : index
    %121 = vector.load %arg16[%c0_100, %c0_101, %c0_102] : memref<1x1x128xf32, #tpu.memory_space<vmem>>, vector<1x1x128xf32>
    %122 = vector.shape_cast %121 : vector<1x1x128xf32> to vector<1x128xf32>
    %123 = vector.shape_cast %120 : vector<1x128xf32> to vector<1x1x128xf32>
    tpu.vector_store %arg16[%c0_100, %c0_101, %c0_102], %123 {strides = array<i32>} : memref<1x1x128xf32, #tpu.memory_space<vmem>>, vector<1x1x128xf32>,
    return
  }
  func.func @transform_0(%arg0: i32) -> (i32, i32, i32) {
    %c0_i32 = arith.constant 0 : i32
    %c0_i32_0 = arith.constant 0 : i32
    %c0_i32_1 = arith.constant 0 : i32
    return %arg0, %c0_i32, %c0_i32_0 : i32, i32, i32
  }
  func.func @transform_1(%arg0: i32) -> (i32, i32, i32) {
    %c0_i32 = arith.constant 0 : i32
    %c0_i32_0 = arith.constant 0 : i32
    %c0_i32_1 = arith.constant 0 : i32
    %c0_i32_2 = arith.constant 0 : i32
    return %c0_i32, %c0_i32_0, %c0_i32_1 : i32, i32, i32
  }
  func.func @transform_2(%arg0: i32) -> (i32, i32) {
    %c0_i32 = arith.constant 0 : i32
    %c0_i32_0 = arith.constant 0 : i32
    %c0_i32_1 = arith.constant 0 : i32
    return %c0_i32, %c0_i32_0 : i32, i32
  }
  func.func @transform_3(%arg0: i32) -> (i32, i32, i32) {
    %c0_i32 = arith.constant 0 : i32
    %c0_i32_0 = arith.constant 0 : i32
    %c0_i32_1 = arith.constant 0 : i32
    %c0_i32_2 = arith.constant 0 : i32
    return %c0_i32, %c0_i32_0, %c0_i32_1 : i32, i32, i32
  }
  func.func @transform_4(%arg0: i32) -> (i32, i32, i32) {
    %c0_i32 = arith.constant 0 : i32
    %c0_i32_0 = arith.constant 0 : i32
    %c0_i32_1 = arith.constant 0 : i32
    %c0_i32_2 = arith.constant 0 : i32
    return %c0_i32, %c0_i32_0, %c0_i32_1 : i32, i32, i32
  }
  func.func @transform_5(%arg0: i32) -> (i32, i32, i32) {
    %c0_i32 = arith.constant 0 : i32
    %c0_i32_0 = arith.constant 0 : i32
    %c0_i32_1 = arith.constant 0 : i32
    %c0_i32_2 = arith.constant 0 : i32
    return %c0_i32, %c0_i32_0, %c0_i32_1 : i32, i32, i32
  }
  func.func @transform_6(%arg0: i32) -> (i32, i32) {
    %c0_i32 = arith.constant 0 : i32
    %c0_i32_0 = arith.constant 0 : i32
    %c0_i32_1 = arith.constant 0 : i32
    return %c0_i32, %c0_i32_0 : i32, i32
  }
  func.func @transform_7(%arg0: i32) -> (i32, i32, i32) {
    %c0_i32 = arith.constant 0 : i32
    %c0_i32_0 = arith.constant 0 : i32
    %c0_i32_1 = arith.constant 0 : i32
    %c0_i32_2 = arith.constant 0 : i32
    return %c0_i32, %c0_i32_0, %c0_i32_1 : i32, i32, i32
  }
  func.func @transform_8(%arg0: i32) -> (i32, i32, i32) {
    %c0_i32 = arith.constant 0 : i32
    %c0_i32_0 = arith.constant 0 : i32
    %c0_i32_1 = arith.constant 0 : i32
    %c0_i32_2 = arith.constant 0 : i32
    return %c0_i32, %c0_i32_0, %c0_i32_1 : i32, i32, i32
  }
  func.func @transform_9(%arg0: i32) -> (i32, i32) {
    %c0_i32 = arith.constant 0 : i32
    %c0_i32_0 = arith.constant 0 : i32
    %c0_i32_1 = arith.constant 0 : i32
    return %c0_i32, %c0_i32_0 : i32, i32
  }
  func.func @transform_10(%arg0: i32) -> (i32, i32) {
    %c0_i32 = arith.constant 0 : i32
    %c0_i32_0 = arith.constant 0 : i32
    %c0_i32_1 = arith.constant 0 : i32
    return %c0_i32, %c0_i32_0 : i32, i32
  }
  func.func @transform_11(%arg0: i32) -> (i32, i32) {
    %c0_i32 = arith.constant 0 : i32
    %c0_i32_0 = arith.constant 0 : i32
    %c0_i32_1 = arith.constant 0 : i32
    return %c0_i32, %c0_i32_0 : i32, i32
  }
  func.func @transform_12(%arg0: i32) -> (i32, i32) {
    %c0_i32 = arith.constant 0 : i32
    %c0_i32_0 = arith.constant 0 : i32
    %c0_i32_1 = arith.constant 0 : i32
    return %c0_i32, %c0_i32_0 : i32, i32
  }
  func.func @transform_13(%arg0: i32) -> (i32, i32) {
    %c0_i32 = arith.constant 0 : i32
    %c0_i32_0 = arith.constant 0 : i32
    %c0_i32_1 = arith.constant 0 : i32
    return %c0_i32, %c0_i32_0 : i32, i32
  }
  func.func @transform_14(%arg0: i32) -> (i32, i32) {
    %c0_i32 = arith.constant 0 : i32
    %c0_i32_0 = arith.constant 0 : i32
    %c0_i32_1 = arith.constant 0 : i32
    return %c0_i32, %c0_i32_0 : i32, i32
  }
  func.func @transform_15(%arg0: i32) -> (i32, i32, i32) {
    %c0_i32 = arith.constant 0 : i32
    %c0_i32_0 = arith.constant 0 : i32
    %c0_i32_1 = arith.constant 0 : i32
    return %arg0, %c0_i32, %c0_i32_0 : i32, i32, i32
  }
}

</mosaic_0001>

<llo_original>
// kernel: net_forward.1
$region0: #{net_forward.1}
  #allocation0 [shape = 'u32[]', space=smem, size = 0x4, offset = 0x4, fixed_abs, tag = 'smem constant byte address 0x4 - core index']
  #allocation1 [shape = 'u32[144,128]{1,0:T(1,128)}', space=vmem, size = 0x12000, scoped, tag = 'internal scratch']
  %s0 = inlined_call_operand.vmem [shape: f32[2,32,96], index: 0, kind: input, shape index: {}]
  %s1 = inlined_call_operand.vmem [shape: f32[5,96,168], index: 1, kind: input, shape index: {}]
  %s2 = inlined_call_operand.vmem [shape: f32[1,84], index: 2, kind: input, shape index: {}]
  %s3 = inlined_call_operand.vmem [shape: f32[2,14,28], index: 3, kind: input, shape index: {}]
  %s4 = inlined_call_operand.vmem [shape: f32[2,168,84], index: 4, kind: input, shape index: {}]
  %s5 = inlined_call_operand.vmem [shape: f32[5,84,160], index: 5, kind: input, shape index: {}]
  %s6 = inlined_call_operand.vmem [shape: f32[1,80], index: 6, kind: input, shape index: {}]
  %s7 = inlined_call_operand.vmem [shape: f32[2,5,10], index: 7, kind: input, shape index: {}]
  %s8 = inlined_call_operand.vmem [shape: f32[2,160,80], index: 8, kind: input, shape index: {}]
  %s9 = inlined_call_operand.vmem [shape: f32[400,120], index: 9, kind: input, shape index: {}]
  %s10 = inlined_call_operand.vmem [shape: f32[1,120], index: 10, kind: input, shape index: {}]
  %s11 = inlined_call_operand.vmem [shape: f32[120,84], index: 11, kind: input, shape index: {}]
  %s12 = inlined_call_operand.vmem [shape: f32[1,84], index: 12, kind: input, shape index: {}]
  %s13 = inlined_call_operand.vmem [shape: f32[84,128], index: 13, kind: input, shape index: {}]
  %s14 = inlined_call_operand.vmem [shape: f32[1,128], index: 14, kind: input, shape index: {}]
  %s15 = inlined_call_operand.hbm [shape: f32[2,1,128], index: 15, kind: output, shape index: {}]
  %s16 = sld [smem:[#allocation0]]
  $region93: #{net_forward.1} parent=0
    _
  %s18 = ssub.s32 1, %s16
  %s19 = scalar_select 0, %s18, %s16
  $region1: #{net_forward.1} parent=0
    #allocation2 [shape = 'u8[1024]{0}', space=vmem, size = 0x400, scoped, tag = 'output window, operand 0']
    #allocation3 [shape = 's32[2]{0}', space=sflag, size = 0x8, scoped, tag = 'scoped memory for net_forward.1']
    %20 = vsyncpa [#allocation3], 0
    %s21 = scalar_lea.sflag [#allocation3], 1
    %22 = vsyncpa %s21, 0
    loop: start=0, step=1, limit=4
    $region2: #{net_forward.1} parent=1 // loop_pre_header
      _
    $region3: #{net_forward.1} parent=1 // loop_header
      %s24 = sphi 0, %s28
      %p25 = scmp.ge.s32.totalorder %s24, 4
      %s34 = sphi 0, %s36
      %s37 = sphi 0, %s34
      %s38 = sphi 0, %s37
      %s54 = sphi 0, %s38
      %s58 = sphi 0, %s58
      %s60 = sphi 0, %s58
      %s61 = sphi 0, %s60
      %s75 = sphi 0, %s61
      %s79 = sphi 0, %s79
      %s81 = sphi 0, %s79
      %s82 = sphi 0, %s81
      %s96 = sphi 0, %s82
      %s100 = sphi 0, %s100
      %s102 = sphi 0, %s100
      %s103 = sphi 0, %s102
      %s117 = sphi 0, %s103
      %s121 = sphi 0, %s121
      %s123 = sphi 0, %s121
      %s124 = sphi 0, %s123
      %s138 = sphi 0, %s124
      %s142 = sphi 0, %s142
      %s144 = sphi 0, %s142
      %s145 = sphi 0, %s144
      %s159 = sphi 0, %s145
      %s163 = sphi 0, %s163
      %s165 = sphi 0, %s163
      %s166 = sphi 0, %s165
      %s180 = sphi 0, %s166
      %s184 = sphi 0, %s184
      %s186 = sphi 0, %s184
      %s187 = sphi 0, %s186
      %s201 = sphi 0, %s187
      %s205 = sphi 0, %s205
      %s207 = sphi 0, %s205
      %s208 = sphi 0, %s207
      %s222 = sphi 0, %s208
      %s226 = sphi 0, %s226
      %s228 = sphi 0, %s226
      %s229 = sphi 0, %s228
      %s243 = sphi 0, %s229
      %s247 = sphi 0, %s247
      %s249 = sphi 0, %s247
      %s250 = sphi 0, %s249
      %s264 = sphi 0, %s250
      %s268 = sphi 0, %s268
      %s270 = sphi 0, %s268
      %s271 = sphi 0, %s270
      %s285 = sphi 0, %s271
      %s289 = sphi 0, %s289
      %s291 = sphi 0, %s289
      %s292 = sphi 0, %s291
      %s306 = sphi 0, %s292
      %s310 = sphi 0, %s310
      %s312 = sphi 0, %s310
      %s313 = sphi 0, %s312
      %s327 = sphi 0, %s313
      %s331 = sphi 0, %s331
      %s333 = sphi 0, %s331
      %s334 = sphi 0, %s333
      %s348 = sphi 0, %s334
      %s354 = sphi 0, %s356
      %s357 = sphi 0, %s354
      %s358 = sphi 0, %s357
      %s374 = sphi 0, %s358
    $region4: #{net_forward.1} parent=1 // loop_header_branch
      %27 = sbr.rel (%p25) target = $region8
    $region5: #{net_forward.1} parent=1 // loop_body
      %s29 = ssub.s32 %s24, 1
      %s30 = ssub.s32 %s24, 2
      %s31 = sadd.s32 %s24, 1
      %s32 = ssub.s32 %s24, %s31
      %p33 = scmp.eq.s32.totalorder %s32, 0
      %s35 = sadd.s32 %s34, 1
      %s36 = scalar_select %p33, %s34, %s35
      %p39 = pneg %p33
      %p40 = scmp.eq.s32.totalorder %s24, 1
      %p41 = por %p39, %p40
      %p42 = scmp.ne.s32.totalorder %s34, %s37
      %p43 = scmp.eq.s32.totalorder %s24, 0
      %p44 = por %p42, %p43
      %p45 = scmp.ne.s32.totalorder %s34, %s37
      %p46 = scmp.eq.s32.totalorder %s29, 1
      %p47 = por %p45, %p46
      %p48 = scmp.ne.s32.totalorder %s37, %s38
      %p49 = scmp.eq.s32.totalorder %s29, 0
      %p50 = por %p48, %p49
      %p51 = scmp.ne.s32.totalorder %s37, %s38
      %p52 = scmp.eq.s32.totalorder %s30, 1
      %p53 = por %p51, %p52
      %p55 = scmp.ne.s32.totalorder %s38, %s54
      %p56 = scmp.eq.s32.totalorder %s30, 0
      %p57 = por %p55, %p56
      %s59 = sadd.s32 %s58, 1
      %p62 = scmp.eq.s32.totalorder %s24, 1
      %p63 = scmp.ne.s32.totalorder %s58, %s60
      %p64 = scmp.eq.s32.totalorder %s24, 0
      %p65 = por %p63, %p64
      %p66 = scmp.ne.s32.totalorder %s58, %s60
      %p67 = scmp.eq.s32.totalorder %s29, 1
      %p68 = por %p66, %p67
      %p69 = scmp.ne.s32.totalorder %s60, %s61
      %p70 = scmp.eq.s32.totalorder %s29, 0
      %p71 = por %p69, %p70
      %p72 = scmp.ne.s32.totalorder %s60, %s61
      %p73 = scmp.eq.s32.totalorder %s30, 1
      %p74 = por %p72, %p73
      %p76 = scmp.ne.s32.totalorder %s61, %s75
      %p77 = scmp.eq.s32.totalorder %s30, 0
      %p78 = por %p76, %p77
      %s80 = sadd.s32 %s79, 1
      %p83 = scmp.eq.s32.totalorder %s24, 1
      %p84 = scmp.ne.s32.totalorder %s79, %s81
      %p85 = scmp.eq.s32.totalorder %s24, 0
      %p86 = por %p84, %p85
      %p87 = scmp.ne.s32.totalorder %s79, %s81
      %p88 = scmp.eq.s32.totalorder %s29, 1
      %p89 = por %p87, %p88
      %p90 = scmp.ne.s32.totalorder %s81, %s82
      %p91 = scmp.eq.s32.totalorder %s29, 0
      %p92 = por %p90, %p91
      %p93 = scmp.ne.s32.totalorder %s81, %s82
      %p94 = scmp.eq.s32.totalorder %s30, 1
      %p95 = por %p93, %p94
      %p97 = scmp.ne.s32.totalorder %s82, %s96
      %p98 = scmp.eq.s32.totalorder %s30, 0
      %p99 = por %p97, %p98
      %s101 = sadd.s32 %s100, 1
      %p104 = scmp.eq.s32.totalorder %s24, 1
      %p105 = scmp.ne.s32.totalorder %s100, %s102
      %p106 = scmp.eq.s32.totalorder %s24, 0
      %p107 = por %p105, %p106
      %p108 = scmp.ne.s32.totalorder %s100, %s102
      %p109 = scmp.eq.s32.totalorder %s29, 1
      %p110 = por %p108, %p109
      %p111 = scmp.ne.s32.totalorder %s102, %s103
      %p112 = scmp.eq.s32.totalorder %s29, 0
      %p113 = por %p111, %p112
      %p114 = scmp.ne.s32.totalorder %s102, %s103
      %p115 = scmp.eq.s32.totalorder %s30, 1
      %p116 = por %p114, %p115
      %p118 = scmp.ne.s32.totalorder %s103, %s117
      %p119 = scmp.eq.s32.totalorder %s30, 0
      %p120 = por %p118, %p119
      %s122 = sadd.s32 %s121, 1
      %p125 = scmp.eq.s32.totalorder %s24, 1
      %p126 = scmp.ne.s32.totalorder %s121, %s123
      %p127 = scmp.eq.s32.totalorder %s24, 0
      %p128 = por %p126, %p127
      %p129 = scmp.ne.s32.totalorder %s121, %s123
      %p130 = scmp.eq.s32.totalorder %s29, 1
      %p131 = por %p129, %p130
      %p132 = scmp.ne.s32.totalorder %s123, %s124
      %p133 = scmp.eq.s32.totalorder %s29, 0
      %p134 = por %p132, %p133
      %p135 = scmp.ne.s32.totalorder %s123, %s124
      %p136 = scmp.eq.s32.totalorder %s30, 1
      %p137 = por %p135, %p136
      %p139 = scmp.ne.s32.totalorder %s124, %s138
      %p140 = scmp.eq.s32.totalorder %s30, 0
      %p141 = por %p139, %p140
      %s143 = sadd.s32 %s142, 1
      %p146 = scmp.eq.s32.totalorder %s24, 1
      %p147 = scmp.ne.s32.totalorder %s142, %s144
      %p148 = scmp.eq.s32.totalorder %s24, 0
      %p149 = por %p147, %p148
      %p150 = scmp.ne.s32.totalorder %s142, %s144
      %p151 = scmp.eq.s32.totalorder %s29, 1
      %p152 = por %p150, %p151
      %p153 = scmp.ne.s32.totalorder %s144, %s145
      %p154 = scmp.eq.s32.totalorder %s29, 0
      %p155 = por %p153, %p154
      %p156 = scmp.ne.s32.totalorder %s144, %s145
      %p157 = scmp.eq.s32.totalorder %s30, 1
      %p158 = por %p156, %p157
      %p160 = scmp.ne.s32.totalorder %s145, %s159
      %p161 = scmp.eq.s32.totalorder %s30, 0
      %p162 = por %p160, %p161
      %s164 = sadd.s32 %s163, 1
      %p167 = scmp.eq.s32.totalorder %s24, 1
      %p168 = scmp.ne.s32.totalorder %s163, %s165
      %p169 = scmp.eq.s32.totalorder %s24, 0
      %p170 = por %p168, %p169
      %p171 = scmp.ne.s32.totalorder %s163, %s165
      %p172 = scmp.eq.s32.totalorder %s29, 1
      %p173 = por %p171, %p172
      %p174 = scmp.ne.s32.totalorder %s165, %s166
      %p175 = scmp.eq.s32.totalorder %s29, 0
      %p176 = por %p174, %p175
      %p177 = scmp.ne.s32.totalorder %s165, %s166
      %p178 = scmp.eq.s32.totalorder %s30, 1
      %p179 = por %p177, %p178
      %p181 = scmp.ne.s32.totalorder %s166, %s180
      %p182 = scmp.eq.s32.totalorder %s30, 0
      %p183 = por %p181, %p182
      %s185 = sadd.s32 %s184, 1
      %p188 = scmp.eq.s32.totalorder %s24, 1
      %p189 = scmp.ne.s32.totalorder %s184, %s186
      %p190 = scmp.eq.s32.totalorder %s24, 0
      %p191 = por %p189, %p190
      %p192 = scmp.ne.s32.totalorder %s184, %s186
      %p193 = scmp.eq.s32.totalorder %s29, 1
      %p194 = por %p192, %p193
      %p195 = scmp.ne.s32.totalorder %s186, %s187
      %p196 = scmp.eq.s32.totalorder %s29, 0
      %p197 = por %p195, %p196
      %p198 = scmp.ne.s32.totalorder %s186, %s187
      %p199 = scmp.eq.s32.totalorder %s30, 1
      %p200 = por %p198, %p199
      %p202 = scmp.ne.s32.totalorder %s187, %s201
      %p203 = scmp.eq.s32.totalorder %s30, 0
      %p204 = por %p202, %p203
      %s206 = sadd.s32 %s205, 1
      %p209 = scmp.eq.s32.totalorder %s24, 1
      %p210 = scmp.ne.s32.totalorder %s205, %s207
      %p211 = scmp.eq.s32.totalorder %s24, 0
      %p212 = por %p210, %p211
      %p213 = scmp.ne.s32.totalorder %s205, %s207
      %p214 = scmp.eq.s32.totalorder %s29, 1
      %p215 = por %p213, %p214
      %p216 = scmp.ne.s32.totalorder %s207, %s208
      %p217 = scmp.eq.s32.totalorder %s29, 0
      %p218 = por %p216, %p217
      %p219 = scmp.ne.s32.totalorder %s207, %s208
      %p220 = scmp.eq.s32.totalorder %s30, 1
      %p221 = por %p219, %p220
      %p223 = scmp.ne.s32.totalorder %s208, %s222
      %p224 = scmp.eq.s32.totalorder %s30, 0
      %p225 = por %p223, %p224
      %s227 = sadd.s32 %s226, 1
      %p230 = scmp.eq.s32.totalorder %s24, 1
      %p231 = scmp.ne.s32.totalorder %s226, %s228
      %p232 = scmp.eq.s32.totalorder %s24, 0
      %p233 = por %p231, %p232
      %p234 = scmp.ne.s32.totalorder %s226, %s228
      %p235 = scmp.eq.s32.totalorder %s29, 1
      %p236 = por %p234, %p235
      %p237 = scmp.ne.s32.totalorder %s228, %s229
      %p238 = scmp.eq.s32.totalorder %s29, 0
      %p239 = por %p237, %p238
      %p240 = scmp.ne.s32.totalorder %s228, %s229
      %p241 = scmp.eq.s32.totalorder %s30, 1
      %p242 = por %p240, %p241
      %p244 = scmp.ne.s32.totalorder %s229, %s243
      %p245 = scmp.eq.s32.totalorder %s30, 0
      %p246 = por %p244, %p245
      %s248 = sadd.s32 %s247, 1
      %p251 = scmp.eq.s32.totalorder %s24, 1
      %p252 = scmp.ne.s32.totalorder %s247, %s249
      %p253 = scmp.eq.s32.totalorder %s24, 0
      %p254 = por %p252, %p253
      %p255 = scmp.ne.s32.totalorder %s247, %s249
      %p256 = scmp.eq.s32.totalorder %s29, 1
      %p257 = por %p255, %p256
      %p258 = scmp.ne.s32.totalorder %s249, %s250
      %p259 = scmp.eq.s32.totalorder %s29, 0
      %p260 = por %p258, %p259
      %p261 = scmp.ne.s32.totalorder %s249, %s250
      %p262 = scmp.eq.s32.totalorder %s30, 1
      %p263 = por %p261, %p262
      %p265 = scmp.ne.s32.totalorder %s250, %s264
      %p266 = scmp.eq.s32.totalorder %s30, 0
      %p267 = por %p265, %p266
      %s269 = sadd.s32 %s268, 1
      %p272 = scmp.eq.s32.totalorder %s24, 1
      %p273 = scmp.ne.s32.totalorder %s268, %s270
      %p274 = scmp.eq.s32.totalorder %s24, 0
      %p275 = por %p273, %p274
      %p276 = scmp.ne.s32.totalorder %s268, %s270
      %p277 = scmp.eq.s32.totalorder %s29, 1
      %p278 = por %p276, %p277
      %p279 = scmp.ne.s32.totalorder %s270, %s271
      %p280 = scmp.eq.s32.totalorder %s29, 0
      %p281 = por %p279, %p280
      %p282 = scmp.ne.s32.totalorder %s270, %s271
      %p283 = scmp.eq.s32.totalorder %s30, 1
      %p284 = por %p282, %p283
      %p286 = scmp.ne.s32.totalorder %s271, %s285
      %p287 = scmp.eq.s32.totalorder %s30, 0
      %p288 = por %p286, %p287
      %s290 = sadd.s32 %s289, 1
      %p293 = scmp.eq.s32.totalorder %s24, 1
      %p294 = scmp.ne.s32.totalorder %s289, %s291
      %p295 = scmp.eq.s32.totalorder %s24, 0
      %p296 = por %p294, %p295
      %p297 = scmp.ne.s32.totalorder %s289, %s291
      %p298 = scmp.eq.s32.totalorder %s29, 1
      %p299 = por %p297, %p298
      %p300 = scmp.ne.s32.totalorder %s291, %s292
      %p301 = scmp.eq.s32.totalorder %s29, 0
      %p302 = por %p300, %p301
      %p303 = scmp.ne.s32.totalorder %s291, %s292
      %p304 = scmp.eq.s32.totalorder %s30, 1
      %p305 = por %p303, %p304
      %p307 = scmp.ne.s32.totalorder %s292, %s306
      %p308 = scmp.eq.s32.totalorder %s30, 0
      %p309 = por %p307, %p308
      %s311 = sadd.s32 %s310, 1
      %p314 = scmp.eq.s32.totalorder %s24, 1
      %p315 = scmp.ne.s32.totalorder %s310, %s312
      %p316 = scmp.eq.s32.totalorder %s24, 0
      %p317 = por %p315, %p316
      %p318 = scmp.ne.s32.totalorder %s310, %s312
      %p319 = scmp.eq.s32.totalorder %s29, 1
      %p320 = por %p318, %p319
      %p321 = scmp.ne.s32.totalorder %s312, %s313
      %p322 = scmp.eq.s32.totalorder %s29, 0
      %p323 = por %p321, %p322
      %p324 = scmp.ne.s32.totalorder %s312, %s313
      %p325 = scmp.eq.s32.totalorder %s30, 1
      %p326 = por %p324, %p325
      %p328 = scmp.ne.s32.totalorder %s313, %s327
      %p329 = scmp.eq.s32.totalorder %s30, 0
      %p330 = por %p328, %p329
      %s332 = sadd.s32 %s331, 1
      %p335 = scmp.eq.s32.totalorder %s24, 1
      %p336 = scmp.ne.s32.totalorder %s331, %s333
      %p337 = scmp.eq.s32.totalorder %s24, 0
      %p338 = por %p336, %p337
      %p339 = scmp.ne.s32.totalorder %s331, %s333
      %p340 = scmp.eq.s32.totalorder %s29, 1
      %p341 = por %p339, %p340
      %p342 = scmp.ne.s32.totalorder %s333, %s334
      %p343 = scmp.eq.s32.totalorder %s29, 0
      %p344 = por %p342, %p343
      %p345 = scmp.ne.s32.totalorder %s333, %s334
      %p346 = scmp.eq.s32.totalorder %s30, 1
      %p347 = por %p345, %p346
      %p349 = scmp.ne.s32.totalorder %s334, %s348
      %p350 = scmp.eq.s32.totalorder %s30, 0
      %p351 = por %p349, %p350
      %s352 = ssub.s32 %s24, %s31
      %p353 = scmp.eq.s32.totalorder %s352, 0
      %s355 = sadd.s32 %s354, 1
      %s356 = scalar_select %p353, %s354, %s355
      %p359 = pneg %p353
      %p360 = scmp.eq.s32.totalorder %s24, 1
      %p361 = por %p359, %p360
      %p362 = scmp.ne.s32.totalorder %s354, %s357
      %p363 = scmp.eq.s32.totalorder %s24, 0
      %p364 = por %p362, %p363
      %p365 = scmp.ne.s32.totalorder %s354, %s357
      %p366 = scmp.eq.s32.totalorder %s29, 1
      %p367 = por %p365, %p366
      %p368 = scmp.ne.s32.totalorder %s357, %s358
      %p369 = scmp.eq.s32.totalorder %s29, 0
      %p370 = por %p368, %p369
      %p371 = scmp.ne.s32.totalorder %s357, %s358
      %p372 = scmp.eq.s32.totalorder %s30, 1
      %p373 = por %p371, %p372
      %p375 = scmp.ne.s32.totalorder %s358, %s374
      %p376 = scmp.eq.s32.totalorder %s30, 0
      %p377 = por %p375, %p376
      %p378 = scmp.le.s32.totalorder 1, %s24
      %p379 = scmp.lt.s32.totalorder %s24, 3
      %p380 = pnand %p378, %p379
      %p381 = pneg %p380
      // Predicated region
      $region9: #{net_forward.1} parent=5 // pred_check
        _
      $region10: #{net_forward.1} parent=5 // pred_check_branch
        %383 = sbr.rel (%p380) target = $region12
      $region11: #{net_forward.1} parent=5 // pred_region
        %s384 = ssub.s32 %s24, 1
        // Predicated region
        $region13: #{net_forward.1} parent=11 // pred_check
          %p385 = pneg %p71
        $region14: #{net_forward.1} parent=11 // pred_check_branch
          %387 = sbr.rel (%p385) target = $region16
        $region15: #{net_forward.1} parent=11 // pred_region
          _
        $region16: #{net_forward.1} parent=11 // pred_fallthru
          _
        // Predicated region
        $region17: #{net_forward.1} parent=11 // pred_check
          %p388 = pneg %p92
        $region18: #{net_forward.1} parent=11 // pred_check_branch
          %390 = sbr.rel (%p388) target = $region20
        $region19: #{net_forward.1} parent=11 // pred_region
          _
        $region20: #{net_forward.1} parent=11 // pred_fallthru
          _
        // Predicated region
        $region21: #{net_forward.1} parent=11 // pred_check
          %p391 = pneg %p113
        $region22: #{net_forward.1} parent=11 // pred_check_branch
          %393 = sbr.rel (%p391) target = $region24
        $region23: #{net_forward.1} parent=11 // pred_region
          _
        $region24: #{net_forward.1} parent=11 // pred_fallthru
          _
        // Predicated region
        $region25: #{net_forward.1} parent=11 // pred_check
          %p394 = pneg %p134
        $region26: #{net_forward.1} parent=11 // pred_check_branch
          %396 = sbr.rel (%p394) target = $region28
        $region27: #{net_forward.1} parent=11 // pred_region
          _
        $region28: #{net_forward.1} parent=11 // pred_fallthru
          _
        // Predicated region
        $region29: #{net_forward.1} parent=11 // pred_check
          %p397 = pneg %p155
        $region30: #{net_forward.1} parent=11 // pred_check_branch
          %399 = sbr.rel (%p397) target = $region32
        $region31: #{net_forward.1} parent=11 // pred_region
          _
        $region32: #{net_forward.1} parent=11 // pred_fallthru
          _
        // Predicated region
        $region33: #{net_forward.1} parent=11 // pred_check
          %p400 = pneg %p176
        $region34: #{net_forward.1} parent=11 // pred_check_branch
          %402 = sbr.rel (%p400) target = $region36
        $region35: #{net_forward.1} parent=11 // pred_region
          _
        $region36: #{net_forward.1} parent=11 // pred_fallthru
          _
        // Predicated region
        $region37: #{net_forward.1} parent=11 // pred_check
          %p403 = pneg %p197
        $region38: #{net_forward.1} parent=11 // pred_check_branch
          %405 = sbr.rel (%p403) target = $region40
        $region39: #{net_forward.1} parent=11 // pred_region
          _
        $region40: #{net_forward.1} parent=11 // pred_fallthru
          _
        // Predicated region
        $region41: #{net_forward.1} parent=11 // pred_check
          %p406 = pneg %p218
        $region42: #{net_forward.1} parent=11 // pred_check_branch
          %408 = sbr.rel (%p406) target = $region44
        $region43: #{net_forward.1} parent=11 // pred_region
          _
        $region44: #{net_forward.1} parent=11 // pred_fallthru
          _
        // Predicated region
        $region45: #{net_forward.1} parent=11 // pred_check
          %p409 = pneg %p239
        $region46: #{net_forward.1} parent=11 // pred_check_branch
          %411 = sbr.rel (%p409) target = $region48
        $region47: #{net_forward.1} parent=11 // pred_region
          _
        $region48: #{net_forward.1} parent=11 // pred_fallthru
          _
        // Predicated region
        $region49: #{net_forward.1} parent=11 // pred_check
          %p412 = pneg %p260
        $region50: #{net_forward.1} parent=11 // pred_check_branch
          %414 = sbr.rel (%p412) target = $region52
        $region51: #{net_forward.1} parent=11 // pred_region
          _
        $region52: #{net_forward.1} parent=11 // pred_fallthru
          _
        // Predicated region
        $region53: #{net_forward.1} parent=11 // pred_check
          %p415 = pneg %p281
        $region54: #{net_forward.1} parent=11 // pred_check_branch
          %417 = sbr.rel (%p415) target = $region56
        $region55: #{net_forward.1} parent=11 // pred_region
          _
        $region56: #{net_forward.1} parent=11 // pred_fallthru
          _
        // Predicated region
        $region57: #{net_forward.1} parent=11 // pred_check
          %p418 = pneg %p302
        $region58: #{net_forward.1} parent=11 // pred_check_branch
          %420 = sbr.rel (%p418) target = $region60
        $region59: #{net_forward.1} parent=11 // pred_region
          _
        $region60: #{net_forward.1} parent=11 // pred_fallthru
          _
        // Predicated region
        $region61: #{net_forward.1} parent=11 // pred_check
          %p421 = pneg %p323
        $region62: #{net_forward.1} parent=11 // pred_check_branch
          %423 = sbr.rel (%p421) target = $region64
        $region63: #{net_forward.1} parent=11 // pred_region
          _
        $region64: #{net_forward.1} parent=11 // pred_fallthru
          _
        // Predicated region
        $region65: #{net_forward.1} parent=11 // pred_check
          %p424 = pneg %p344
        $region66: #{net_forward.1} parent=11 // pred_check_branch
          %426 = sbr.rel (%p424) target = $region68
        $region67: #{net_forward.1} parent=11 // pred_region
          _
        $region68: #{net_forward.1} parent=11 // pred_fallthru
          _
      $region12: #{net_forward.1} parent=5 // pred_fallthru
        _
      %p427 = scmp.lt.s32.totalorder %s24, 2
      // Predicated region
      $region69: #{net_forward.1} parent=5 // pred_check
        %p428 = pneg %p427
      $region70: #{net_forward.1} parent=5 // pred_check_branch
        %430 = sbr.rel (%p428) target = $region72
      $region71: #{net_forward.1} parent=5 // pred_region
        // Predicated region
        $region73: #{net_forward.1} parent=71 // pred_check
          %p431 = pneg %p44
        $region74: #{net_forward.1} parent=71 // pred_check_branch
          %433 = sbr.rel (%p431) target = $region76
        $region75: #{net_forward.1} parent=71 // pred_region
          %p434 = scmp.lt.s32.totalorder %s24, 1
          %s435 = scalar_select %p434, %s24, 1
          %s436 = smul.addr %s435, 4
          %s437 = smul.addr %s436, 8
          %s438 = scalar_lea.vmem %s0, %s437
        $region76: #{net_forward.1} parent=71 // pred_fallthru
          _
      $region72: #{net_forward.1} parent=5 // pred_fallthru
        _
      %p439 = scmp.le.s32.totalorder 1, %s24
      %p440 = scmp.lt.s32.totalorder %s24, 3
      %p441 = pnand %p439, %p440
      %p442 = pneg %p441
      // Predicated region
      $region77: #{net_forward.1} parent=5 // pred_check
        _
      $region78: #{net_forward.1} parent=5 // pred_check_branch
        %444 = sbr.rel (%p441) target = $region80
      $region79: #{net_forward.1} parent=5 // pred_region
        %s445 = ssub.s32 %s24, 1
        %p446 = scmp.lt.s32.totalorder %s29, 1
        %s447 = scalar_select %p446, %s29, 1
        %s448 = smul.addr %s447, 4
        %s449 = smul.addr %s448, 8
        %s450 = scalar_lea.vmem %s0, %s449
        %p451 = pneg %p50
        %p452 = pneg %p47
        %p453 = pneg %p71
        %p454 = pneg %p68
        %p455 = pneg %p92
        %p456 = pneg %p89
        %p457 = pneg %p113
        %p458 = pneg %p110
        %p459 = pneg %p134
        %p460 = pneg %p131
        %p461 = pneg %p155
        %p462 = pneg %p152
        %p463 = pneg %p176
        %p464 = pneg %p173
        %p465 = pneg %p197
        %p466 = pneg %p194
        %p467 = pneg %p218
        %p468 = pneg %p215
        %p469 = pneg %p239
        %p470 = pneg %p236
        %p471 = pneg %p260
        %p472 = pneg %p257
        %p473 = pneg %p281
        %p474 = pneg %p278
        %p475 = pneg %p302
        %p476 = pneg %p299
        %p477 = pneg %p323
        %p478 = pneg %p320
        %p479 = pneg %p344
        %p480 = pneg %p341
        %p481 = pneg %p370
        %p482 = pneg %p367
        %s483 = sand.u32 %s357, 1
        %s484 = scalar_lea.sflag [#allocation3], %s483
        %s485 = sand.u32 %s357, 1
        %s486 = scalar_lea.vmem [#allocation2], %s485
        %p487 = scmp.lt.s32.totalorder %s29, 1
        %s488 = scalar_select %p487, %s29, 1
        %s489 = smul.addr %s488, 4
        %s490 = smul.addr %s489, 8
        %s491 = scalar_lea.vmem %s0, %s490
        %v492 = vld [vmem:[%s491] sm:$0xff]
        %v493 = vld [vmem:[%s491 + $0x8] sm:$0xff]
        %v494 = vld [vmem:[%s491 + $0x10] sm:$0xff]
        %v495 = vld [vmem:[%s491 + $0x18] sm:$0xff]
        %v496 = vld [vmem:[%s1] sm:$0xff]
        %v497 = vld [vmem:[%s1 + $0x8] sm:$0xff]
        %v498 = vld [vmem:[%s1 + $0x10] sm:$0xff]
        %v499 = vld [vmem:[%s1 + $0x18] sm:$0xff]
        %v500 = vld [vmem:[%s1 + $0x20] sm:$0xff]
        %v501 = vld [vmem:[%s1 + $0x28] sm:$0xff]
        %v502 = vld [vmem:[%s1 + $0x30] sm:$0xff]
        %v503 = vld [vmem:[%s1 + $0x38] sm:$0xff]
        %v504 = vld [vmem:[%s1 + $0x40] sm:$0xff]
        %v505 = vld [vmem:[%s1 + $0x48] sm:$0xff]
        %v506 = vld [vmem:[%s1 + $0x50] sm:$0xff]
        %v507 = vld [vmem:[%s1 + $0x58] sm:$0xff]
        %v508 = vld [vmem:[%s1 + $0x60] sm:$0xff]
        %v509 = vld [vmem:[%s1 + $0x68] sm:$0xff]
        %v510 = vld [vmem:[%s1 + $0x70] sm:$0xff]
        %v511 = vld [vmem:[%s1 + $0x78] sm:$0xff]
        %v512 = vld [vmem:[%s1 + $0x80] sm:$0xff]
        %v513 = vld [vmem:[%s1 + $0x88] sm:$0xff]
        %v514 = vld [vmem:[%s1 + $0x90] sm:$0xff]
        %v515 = vld [vmem:[%s1 + $0x98] sm:$0xff]
        %v516 = vld [vmem:[%s1 + $0xa0] sm:$0xff]
        %v517 = vld [vmem:[%s1 + $0xa8] sm:$0xff]
        %v518 = vld [vmem:[%s1 + $0xb0] sm:$0xff]
        %v519 = vld [vmem:[%s1 + $0xb8] sm:$0xff]
        %s520 = scalar_lea.vmem %s1, 192
        %v521 = vld [vmem:[%s520] sm:$0xff]
        %v522 = vld [vmem:[%s520 + $0x8] sm:$0xff]
        %v523 = vld [vmem:[%s520 + $0x10] sm:$0xff]
        %v524 = vld [vmem:[%s520 + $0x18] sm:$0xff]
        %v525 = vld [vmem:[%s520 + $0x20] sm:$0xff]
        %v526 = vld [vmem:[%s520 + $0x28] sm:$0xff]
        %v527 = vld [vmem:[%s520 + $0x30] sm:$0xff]
        %v528 = vld [vmem:[%s520 + $0x38] sm:$0xff]
        %v529 = vld [vmem:[%s520 + $0x40] sm:$0xff]
        %v530 = vld [vmem:[%s520 + $0x48] sm:$0xff]
        %v531 = vld [vmem:[%s520 + $0x50] sm:$0xff]
        %v532 = vld [vmem:[%s520 + $0x58] sm:$0xff]
        %v533 = vld [vmem:[%s520 + $0x60] sm:$0xff]
        %v534 = vld [vmem:[%s520 + $0x68] sm:$0xff]
        %v535 = vld [vmem:[%s520 + $0x70] sm:$0xff]
        %v536 = vld [vmem:[%s520 + $0x78] sm:$0xff]
        %v537 = vld [vmem:[%s520 + $0x80] sm:$0xff]
        %v538 = vld [vmem:[%s520 + $0x88] sm:$0xff]
        %v539 = vld [vmem:[%s520 + $0x90] sm:$0xff]
        %v540 = vld [vmem:[%s520 + $0x98] sm:$0xff]
        %v541 = vld [vmem:[%s520 + $0xa0] sm:$0xff]
        %v542 = vld [vmem:[%s520 + $0xa8] sm:$0xff]
        %v543 = vld [vmem:[%s520 + $0xb0] sm:$0xff]
        %v544 = vld [vmem:[%s520 + $0xb8] sm:$0xff]
        %vm549 = vcmask 1046528
        %v550 = vrot.slane %v492, 1
        %v551 = vrot.slane %v493, 1
        %v552 = vsel %vm549, %v550, %v551
        %v553 = vrot.slane %v494, 1
        %v554 = vsel %vm549, %v551, %v553
        %v555 = vrot.slane %v495, 1
        %v556 = vsel %vm549, %v553, %v555
        %vm557 = vcmask 785408
        %v558 = vsel %vm557, %v552, 0
        %v560 = vsel %vm557, %v554, 0
        %v562 = vsel %vm557, %v556, 0
        %v564 = vsel %vm557, %v555, 0
        %566 = vmatprep.subr.mxu0 0.0
        %567 = vmatpush1.msra.mxu0 0.0
        %568 = vmatprep.subr.mxu0 0.0
        %569 = vmatpush1.msra.mxu0 0.0
        %570 = vmatprep.subr.mxu0 0.0
        %571 = vmatpush1.msra.mxu0 0.0
        %572 = vmatprep.subr.mxu0 0.0
        %573 = vmatpush1.msra.mxu0 0.0
        %574 = vmatprep.subr.mxu0 %v544
        %575 = vmatpush1.msra.mxu0 %v543
        %576 = vmatprep.subr.mxu0 %v542
        %577 = vmatpush1.msra.mxu0 %v541
        %578 = vmatprep.subr.mxu0 %v540
        %579 = vmatpush1.msra.mxu0 %v539
        %580 = vmatprep.subr.mxu0 %v538
        %581 = vmatpush1.msra.mxu0 %v537
        %582 = vmatprep.subr.mxu0 %v536
        %583 = vmatpush1.msra.mxu0 %v535
        %584 = vmatprep.subr.mxu0 %v534
        %585 = vmatpush1.msra.mxu0 %v533
        %586 = vmatprep.subr.mxu0 %v532
        %587 = vmatpush1.msra.mxu0 %v531
        %588 = vmatprep.subr.mxu0 %v530
        %589 = vmatpush1.msra.mxu0 %v529
        %590 = vmatprep.subr.mxu0 %v528
        %591 = vmatpush1.msra.mxu0 %v527
        %592 = vmatprep.subr.mxu0 %v526
        %593 = vmatpush1.msra.mxu0 %v525
        %594 = vmatprep.subr.mxu0 %v524
        %595 = vmatpush1.msra.mxu0 %v523
        %596 = vmatprep.subr.mxu0 %v522
        %597 = vmatpush1.msra.mxu0 %v521
        %598 = vmatprep.subr.mxu0 0.0
        %599 = vmatpush2.msra.mxu0 0.0
        %600 = vmatprep.subr.mxu0 0.0
        %601 = vmatpush2.msra.mxu0 0.0
        %602 = vmatprep.subr.mxu0 0.0
        %603 = vmatpush2.msra.mxu0 0.0
        %604 = vmatprep.subr.mxu0 0.0
        %605 = vmatpush2.msra.mxu0 0.0
        %606 = vmatprep.subr.mxu0 0.0
        %607 = vmatpush2.msra.mxu0 0.0
        %608 = vmatprep.subr.mxu0 0.0
        %609 = vmatpush2.msra.mxu0 0.0
        %610 = vmatprep.subr.mxu0 0.0
        %611 = vmatpush2.msra.mxu0 0.0
        %612 = vmatprep.subr.mxu0 0.0
        %613 = vmatpush2.msra.mxu0 0.0
        %614 = vmatprep.subr.mxu0 0.0
        %615 = vmatpush2.msra.mxu0 0.0
        %616 = vmatprep.subr.mxu0 0.0
        %617 = vmatpush2.msra.mxu0 0.0
        %618 = vmatprep.subr.mxu0 0.0
        %619 = vmatpush2.msra.mxu0 0.0
        %620 = vmatprep.subr.mxu0 0.0
        %621 = vmatpush2.msra.mxu0 0.0
        %622 = vmatprep.subr.mxu0 0.0
        %623 = vmatpush2.msra.mxu0 0.0
        %624 = vmatprep.subr.mxu0 0.0
        %625 = vmatpush2.msra.mxu0 0.0
        %626 = vmatprep.subr.mxu0 0.0
        %627 = vmatpush2.msra.mxu0 0.0
        %628 = vmatprep.subr.mxu0 0.0
        %629 = vmatpush2.msra.mxu0 0.0
        %630 = vmatprep.mubr.f32.mxu0 0.0
        %631 = vmatmul.mubr.f32.gmra.mxu0 %v558
        %v632 = vpop.f32.mrf.mxu0
        %v633 = vadd.f32 0.0, %v632
        %v634 = vpop.f32.mrf.mxu0
        %v635 = vadd.f32 0.0, %v634
        %636 = vmatprep.mubr.f32.mxu0 0.0
        %637 = vmatmul.mubr.f32.gmra.mxu0 %v560
        %v638 = vpop.f32.mrf.mxu0
        %v639 = vadd.f32 0.0, %v638
        %v640 = vpop.f32.mrf.mxu0
        %v641 = vadd.f32 0.0, %v640
        %642 = vmatprep.mubr.f32.mxu0 0.0
        %643 = vmatmul.mubr.f32.gmra.mxu0 %v562
        %v644 = vpop.f32.mrf.mxu0
        %v645 = vadd.f32 0.0, %v644
        %v646 = vpop.f32.mrf.mxu0
        %v647 = vadd.f32 0.0, %v646
        %648 = vmatprep.mubr.f32.mxu0 0.0
        %649 = vmatmul.mubr.f32.gmra.mxu0 %v564
        %v650 = vpop.f32.mrf.mxu0
        %v651 = vadd.f32 0.0, %v650
        %v652 = vpop.f32.mrf.mxu0
        %v653 = vadd.f32 0.0, %v652
        %654 = vdwg.mxu0
        %v655 = vsel %vm557, %v492, 0
        %v657 = vsel %vm557, %v493, 0
        %v659 = vsel %vm557, %v494, 0
        %v661 = vsel %vm557, %v495, 0
        %663 = vmatprep.subr.mxu0 0.0
        %664 = vmatpush1.msra.mxu0 0.0
        %665 = vmatprep.subr.mxu0 0.0
        %666 = vmatpush1.msra.mxu0 0.0
        %667 = vmatprep.subr.mxu0 0.0
        %668 = vmatpush1.msra.mxu0 0.0
        %669 = vmatprep.subr.mxu0 0.0
        %670 = vmatpush1.msra.mxu0 0.0
        %671 = vmatprep.subr.mxu0 %v519
        %672 = vmatpush1.msra.mxu0 %v518
        %673 = vmatprep.subr.mxu0 %v517
        %674 = vmatpush1.msra.mxu0 %v516
        %675 = vmatprep.subr.mxu0 %v515
        %676 = vmatpush1.msra.mxu0 %v514
        %677 = vmatprep.subr.mxu0 %v513
        %678 = vmatpush1.msra.mxu0 %v512
        %679 = vmatprep.subr.mxu0 %v511
        %680 = vmatpush1.msra.mxu0 %v510
        %681 = vmatprep.subr.mxu0 %v509
        %682 = vmatpush1.msra.mxu0 %v508
        %683 = vmatprep.subr.mxu0 %v507
        %684 = vmatpush1.msra.mxu0 %v506
        %685 = vmatprep.subr.mxu0 %v505
        %686 = vmatpush1.msra.mxu0 %v504
        %687 = vmatprep.subr.mxu0 %v503
        %688 = vmatpush1.msra.mxu0 %v502
        %689 = vmatprep.subr.mxu0 %v501
        %690 = vmatpush1.msra.mxu0 %v500
        %691 = vmatprep.subr.mxu0 %v499
        %692 = vmatpush1.msra.mxu0 %v498
        %693 = vmatprep.subr.mxu0 %v497
        %694 = vmatpush1.msra.mxu0 %v496
        %695 = vmatprep.subr.mxu0 0.0
        %696 = vmatpush2.msra.mxu0 0.0
        %697 = vmatprep.subr.mxu0 0.0
        %698 = vmatpush2.msra.mxu0 0.0
        %699 = vmatprep.subr.mxu0 0.0
        %700 = vmatpush2.msra.mxu0 0.0
        %701 = vmatprep.subr.mxu0 0.0
        %702 = vmatpush2.msra.mxu0 0.0
        %703 = vmatprep.subr.mxu0 0.0
        %704 = vmatpush2.msra.mxu0 0.0
        %705 = vmatprep.subr.mxu0 0.0
        %706 = vmatpush2.msra.mxu0 0.0
        %707 = vmatprep.subr.mxu0 0.0
        %708 = vmatpush2.msra.mxu0 0.0
        %709 = vmatprep.subr.mxu0 0.0
        %710 = vmatpush2.msra.mxu0 0.0
        %711 = vmatprep.subr.mxu0 0.0
        %712 = vmatpush2.msra.mxu0 0.0
        %713 = vmatprep.subr.mxu0 0.0
        %714 = vmatpush2.msra.mxu0 0.0
        %715 = vmatprep.subr.mxu0 0.0
        %716 = vmatpush2.msra.mxu0 0.0
        %717 = vmatprep.subr.mxu0 0.0
        %718 = vmatpush2.msra.mxu0 0.0
        %719 = vmatprep.subr.mxu0 0.0
        %720 = vmatpush2.msra.mxu0 0.0
        %721 = vmatprep.subr.mxu0 0.0
        %722 = vmatpush2.msra.mxu0 0.0
        %723 = vmatprep.subr.mxu0 0.0
        %724 = vmatpush2.msra.mxu0 0.0
        %725 = vmatprep.subr.mxu0 0.0
        %726 = vmatpush2.msra.mxu0 0.0
        %727 = vmatprep.mubr.f32.mxu0 0.0
        %728 = vmatmul.mubr.f32.gmra.mxu0 %v655
        %v729 = vpop.f32.mrf.mxu0
        %v730 = vadd.f32 %v633, %v729
        %v731 = vpop.f32.mrf.mxu0
        %v732 = vadd.f32 %v635, %v731
        %733 = vmatprep.mubr.f32.mxu0 0.0
        %734 = vmatmul.mubr.f32.gmra.mxu0 %v657
        %v735 = vpop.f32.mrf.mxu0
        %v736 = vadd.f32 %v639, %v735
        %v737 = vpop.f32.mrf.mxu0
        %v738 = vadd.f32 %v641, %v737
        %739 = vmatprep.mubr.f32.mxu0 0.0
        %740 = vmatmul.mubr.f32.gmra.mxu0 %v659
        %v741 = vpop.f32.mrf.mxu0
        %v742 = vadd.f32 %v645, %v741
        %v743 = vpop.f32.mrf.mxu0
        %v744 = vadd.f32 %v647, %v743
        %745 = vmatprep.mubr.f32.mxu0 0.0
        %746 = vmatmul.mubr.f32.gmra.mxu0 %v661
        %v747 = vpop.f32.mrf.mxu0
        %v748 = vadd.f32 %v651, %v747
        %v749 = vpop.f32.mrf.mxu0
        %v750 = vadd.f32 %v653, %v749
        %751 = vdwg.mxu0
        %s752 = scalar_lea.vmem %s1, 384
        %v753 = vld [vmem:[%s752] sm:$0xff]
        %v754 = vld [vmem:[%s752 + $0x8] sm:$0xff]
        %v755 = vld [vmem:[%s752 + $0x10] sm:$0xff]
        %v756 = vld [vmem:[%s752 + $0x18] sm:$0xff]
        %v757 = vld [vmem:[%s752 + $0x20] sm:$0xff]
        %v758 = vld [vmem:[%s752 + $0x28] sm:$0xff]
        %v759 = vld [vmem:[%s752 + $0x30] sm:$0xff]
        %v760 = vld [vmem:[%s752 + $0x38] sm:$0xff]
        %v761 = vld [vmem:[%s752 + $0x40] sm:$0xff]
        %v762 = vld [vmem:[%s752 + $0x48] sm:$0xff]
        %v763 = vld [vmem:[%s752 + $0x50] sm:$0xff]
        %v764 = vld [vmem:[%s752 + $0x58] sm:$0xff]
        %v765 = vld [vmem:[%s752 + $0x60] sm:$0xff]
        %v766 = vld [vmem:[%s752 + $0x68] sm:$0xff]
        %v767 = vld [vmem:[%s752 + $0x70] sm:$0xff]
        %v768 = vld [vmem:[%s752 + $0x78] sm:$0xff]
        %v769 = vld [vmem:[%s752 + $0x80] sm:$0xff]
        %v770 = vld [vmem:[%s752 + $0x88] sm:$0xff]
        %v771 = vld [vmem:[%s752 + $0x90] sm:$0xff]
        %v772 = vld [vmem:[%s752 + $0x98] sm:$0xff]
        %v773 = vld [vmem:[%s752 + $0xa0] sm:$0xff]
        %v774 = vld [vmem:[%s752 + $0xa8] sm:$0xff]
        %v775 = vld [vmem:[%s752 + $0xb0] sm:$0xff]
        %v776 = vld [vmem:[%s752 + $0xb8] sm:$0xff]
        %vm777 = vcmask 1045504
        %v778 = vrot.slane %v492, 2
        %v779 = vrot.slane %v493, 2
        %v780 = vsel %vm777, %v778, %v779
        %v781 = vrot.slane %v494, 2
        %v782 = vsel %vm777, %v779, %v781
        %v783 = vrot.slane %v495, 2
        %v784 = vsel %vm777, %v781, %v783
        %v785 = vsel %vm557, %v780, 0
        %v787 = vsel %vm557, %v782, 0
        %v789 = vsel %vm557, %v784, 0
        %v791 = vsel %vm557, %v783, 0
        %793 = vmatprep.subr.mxu0 0.0
        %794 = vmatpush1.msra.mxu0 0.0
        %795 = vmatprep.subr.mxu0 0.0
        %796 = vmatpush1.msra.mxu0 0.0
        %797 = vmatprep.subr.mxu0 0.0
        %798 = vmatpush1.msra.mxu0 0.0
        %799 = vmatprep.subr.mxu0 0.0
        %800 = vmatpush1.msra.mxu0 0.0
        %801 = vmatprep.subr.mxu0 %v776
        %802 = vmatpush1.msra.mxu0 %v775
        %803 = vmatprep.subr.mxu0 %v774
        %804 = vmatpush1.msra.mxu0 %v773
        %805 = vmatprep.subr.mxu0 %v772
        %806 = vmatpush1.msra.mxu0 %v771
        %807 = vmatprep.subr.mxu0 %v770
        %808 = vmatpush1.msra.mxu0 %v769
        %809 = vmatprep.subr.mxu0 %v768
        %810 = vmatpush1.msra.mxu0 %v767
        %811 = vmatprep.subr.mxu0 %v766
        %812 = vmatpush1.msra.mxu0 %v765
        %813 = vmatprep.subr.mxu0 %v764
        %814 = vmatpush1.msra.mxu0 %v763
        %815 = vmatprep.subr.mxu0 %v762
        %816 = vmatpush1.msra.mxu0 %v761
        %817 = vmatprep.subr.mxu0 %v760
        %818 = vmatpush1.msra.mxu0 %v759
        %819 = vmatprep.subr.mxu0 %v758
        %820 = vmatpush1.msra.mxu0 %v757
        %821 = vmatprep.subr.mxu0 %v756
        %822 = vmatpush1.msra.mxu0 %v755
        %823 = vmatprep.subr.mxu0 %v754
        %824 = vmatpush1.msra.mxu0 %v753
        %825 = vmatprep.subr.mxu0 0.0
        %826 = vmatpush2.msra.mxu0 0.0
        %827 = vmatprep.subr.mxu0 0.0
        %828 = vmatpush2.msra.mxu0 0.0
        %829 = vmatprep.subr.mxu0 0.0
        %830 = vmatpush2.msra.mxu0 0.0
        %831 = vmatprep.subr.mxu0 0.0
        %832 = vmatpush2.msra.mxu0 0.0
        %833 = vmatprep.subr.mxu0 0.0
        %834 = vmatpush2.msra.mxu0 0.0
        %835 = vmatprep.subr.mxu0 0.0
        %836 = vmatpush2.msra.mxu0 0.0
        %837 = vmatprep.subr.mxu0 0.0
        %838 = vmatpush2.msra.mxu0 0.0
        %839 = vmatprep.subr.mxu0 0.0
        %840 = vmatpush2.msra.mxu0 0.0
        %841 = vmatprep.subr.mxu0 0.0
        %842 = vmatpush2.msra.mxu0 0.0
        %843 = vmatprep.subr.mxu0 0.0
        %844 = vmatpush2.msra.mxu0 0.0
        %845 = vmatprep.subr.mxu0 0.0
        %846 = vmatpush2.msra.mxu0 0.0
        %847 = vmatprep.subr.mxu0 0.0
        %848 = vmatpush2.msra.mxu0 0.0
        %849 = vmatprep.subr.mxu0 0.0
        %850 = vmatpush2.msra.mxu0 0.0
        %851 = vmatprep.subr.mxu0 0.0
        %852 = vmatpush2.msra.mxu0 0.0
        %853 = vmatprep.subr.mxu0 0.0
        %854 = vmatpush2.msra.mxu0 0.0
        %855 = vmatprep.subr.mxu0 0.0
        %856 = vmatpush2.msra.mxu0 0.0
        %857 = vmatprep.mubr.f32.mxu0 0.0
        %858 = vmatmul.mubr.f32.gmra.mxu0 %v785
        %v859 = vpop.f32.mrf.mxu0
        %v860 = vadd.f32 0.0, %v859
        %v861 = vpop.f32.mrf.mxu0
        %v862 = vadd.f32 0.0, %v861
        %863 = vmatprep.mubr.f32.mxu0 0.0
        %864 = vmatmul.mubr.f32.gmra.mxu0 %v787
        %v865 = vpop.f32.mrf.mxu0
        %v866 = vadd.f32 0.0, %v865
        %v867 = vpop.f32.mrf.mxu0
        %v868 = vadd.f32 0.0, %v867
        %869 = vmatprep.mubr.f32.mxu0 0.0
        %870 = vmatmul.mubr.f32.gmra.mxu0 %v789
        %v871 = vpop.f32.mrf.mxu0
        %v872 = vadd.f32 0.0, %v871
        %v873 = vpop.f32.mrf.mxu0
        %v874 = vadd.f32 0.0, %v873
        %875 = vmatprep.mubr.f32.mxu0 0.0
        %876 = vmatmul.mubr.f32.gmra.mxu0 %v791
        %v877 = vpop.f32.mrf.mxu0
        %v878 = vadd.f32 0.0, %v877
        %v879 = vpop.f32.mrf.mxu0
        %v880 = vadd.f32 0.0, %v879
        %881 = vdwg.mxu0
        %v882 = vadd.f32 %v730, %v860
        %v883 = vadd.f32 %v732, %v862
        %v884 = vadd.f32 %v736, %v866
        %v885 = vadd.f32 %v738, %v868
        %v886 = vadd.f32 %v742, %v872
        %v887 = vadd.f32 %v744, %v874
        %v888 = vadd.f32 %v748, %v878
        %v889 = vadd.f32 %v750, %v880
        %s890 = scalar_lea.vmem %s1, 576
        %v891 = vld [vmem:[%s890] sm:$0xff]
        %v892 = vld [vmem:[%s890 + $0x8] sm:$0xff]
        %v893 = vld [vmem:[%s890 + $0x10] sm:$0xff]
        %v894 = vld [vmem:[%s890 + $0x18] sm:$0xff]
        %v895 = vld [vmem:[%s890 + $0x20] sm:$0xff]
        %v896 = vld [vmem:[%s890 + $0x28] sm:$0xff]
        %v897 = vld [vmem:[%s890 + $0x30] sm:$0xff]
        %v898 = vld [vmem:[%s890 + $0x38] sm:$0xff]
        %v899 = vld [vmem:[%s890 + $0x40] sm:$0xff]
        %v900 = vld [vmem:[%s890 + $0x48] sm:$0xff]
        %v901 = vld [vmem:[%s890 + $0x50] sm:$0xff]
        %v902 = vld [vmem:[%s890 + $0x58] sm:$0xff]
        %v903 = vld [vmem:[%s890 + $0x60] sm:$0xff]
        %v904 = vld [vmem:[%s890 + $0x68] sm:$0xff]
        %v905 = vld [vmem:[%s890 + $0x70] sm:$0xff]
        %v906 = vld [vmem:[%s890 + $0x78] sm:$0xff]
        %v907 = vld [vmem:[%s890 + $0x80] sm:$0xff]
        %v908 = vld [vmem:[%s890 + $0x88] sm:$0xff]
        %v909 = vld [vmem:[%s890 + $0x90] sm:$0xff]
        %v910 = vld [vmem:[%s890 + $0x98] sm:$0xff]
        %v911 = vld [vmem:[%s890 + $0xa0] sm:$0xff]
        %v912 = vld [vmem:[%s890 + $0xa8] sm:$0xff]
        %v913 = vld [vmem:[%s890 + $0xb0] sm:$0xff]
        %v914 = vld [vmem:[%s890 + $0xb8] sm:$0xff]
        %vm915 = vcmask 1044480
        %v916 = vrot.slane %v492, 3
        %v917 = vrot.slane %v493, 3
        %v918 = vsel %vm915, %v916, %v917
        %v919 = vrot.slane %v494, 3
        %v920 = vsel %vm915, %v917, %v919
        %v921 = vrot.slane %v495, 3
        %v922 = vsel %vm915, %v919, %v921
        %v923 = vsel %vm557, %v918, 0
        %v925 = vsel %vm557, %v920, 0
        %v927 = vsel %vm557, %v922, 0
        %v929 = vsel %vm557, %v921, 0
        %931 = vmatprep.subr.mxu0 0.0
        %932 = vmatpush1.msra.mxu0 0.0
        %933 = vmatprep.subr.mxu0 0.0
        %934 = vmatpush1.msra.mxu0 0.0
        %935 = vmatprep.subr.mxu0 0.0
        %936 = vmatpush1.msra.mxu0 0.0
        %937 = vmatprep.subr.mxu0 0.0
        %938 = vmatpush1.msra.mxu0 0.0
        %939 = vmatprep.subr.mxu0 %v914
        %940 = vmatpush1.msra.mxu0 %v913
        %941 = vmatprep.subr.mxu0 %v912
        %942 = vmatpush1.msra.mxu0 %v911
        %943 = vmatprep.subr.mxu0 %v910
        %944 = vmatpush1.msra.mxu0 %v909
        %945 = vmatprep.subr.mxu0 %v908
        %946 = vmatpush1.msra.mxu0 %v907
        %947 = vmatprep.subr.mxu0 %v906
        %948 = vmatpush1.msra.mxu0 %v905
        %949 = vmatprep.subr.mxu0 %v904
        %950 = vmatpush1.msra.mxu0 %v903
        %951 = vmatprep.subr.mxu0 %v902
        %952 = vmatpush1.msra.mxu0 %v901
        %953 = vmatprep.subr.mxu0 %v900
        %954 = vmatpush1.msra.mxu0 %v899
        %955 = vmatprep.subr.mxu0 %v898
        %956 = vmatpush1.msra.mxu0 %v897
        %957 = vmatprep.subr.mxu0 %v896
        %958 = vmatpush1.msra.mxu0 %v895
        %959 = vmatprep.subr.mxu0 %v894
        %960 = vmatpush1.msra.mxu0 %v893
        %961 = vmatprep.subr.mxu0 %v892
        %962 = vmatpush1.msra.mxu0 %v891
        %963 = vmatprep.subr.mxu0 0.0
        %964 = vmatpush2.msra.mxu0 0.0
        %965 = vmatprep.subr.mxu0 0.0
        %966 = vmatpush2.msra.mxu0 0.0
        %967 = vmatprep.subr.mxu0 0.0
        %968 = vmatpush2.msra.mxu0 0.0
        %969 = vmatprep.subr.mxu0 0.0
        %970 = vmatpush2.msra.mxu0 0.0
        %971 = vmatprep.subr.mxu0 0.0
        %972 = vmatpush2.msra.mxu0 0.0
        %973 = vmatprep.subr.mxu0 0.0
        %974 = vmatpush2.msra.mxu0 0.0
        %975 = vmatprep.subr.mxu0 0.0
        %976 = vmatpush2.msra.mxu0 0.0
        %977 = vmatprep.subr.mxu0 0.0
        %978 = vmatpush2.msra.mxu0 0.0
        %979 = vmatprep.subr.mxu0 0.0
        %980 = vmatpush2.msra.mxu0 0.0
        %981 = vmatprep.subr.mxu0 0.0
        %982 = vmatpush2.msra.mxu0 0.0
        %983 = vmatprep.subr.mxu0 0.0
        %984 = vmatpush2.msra.mxu0 0.0
        %985 = vmatprep.subr.mxu0 0.0
        %986 = vmatpush2.msra.mxu0 0.0
        %987 = vmatprep.subr.mxu0 0.0
        %988 = vmatpush2.msra.mxu0 0.0
        %989 = vmatprep.subr.mxu0 0.0
        %990 = vmatpush2.msra.mxu0 0.0
        %991 = vmatprep.subr.mxu0 0.0
        %992 = vmatpush2.msra.mxu0 0.0
        %993 = vmatprep.subr.mxu0 0.0
        %994 = vmatpush2.msra.mxu0 0.0
        %995 = vmatprep.mubr.f32.mxu0 0.0
        %996 = vmatmul.mubr.f32.gmra.mxu0 %v923
        %v997 = vpop.f32.mrf.mxu0
        %v998 = vadd.f32 0.0, %v997
        %v999 = vpop.f32.mrf.mxu0
        %v1000 = vadd.f32 0.0, %v999
        %1001 = vmatprep.mubr.f32.mxu0 0.0
        %1002 = vmatmul.mubr.f32.gmra.mxu0 %v925
        %v1003 = vpop.f32.mrf.mxu0
        %v1004 = vadd.f32 0.0, %v1003
        %v1005 = vpop.f32.mrf.mxu0
        %v1006 = vadd.f32 0.0, %v1005
        %1007 = vmatprep.mubr.f32.mxu0 0.0
        %1008 = vmatmul.mubr.f32.gmra.mxu0 %v927
        %v1009 = vpop.f32.mrf.mxu0
        %v1010 = vadd.f32 0.0, %v1009
        %v1011 = vpop.f32.mrf.mxu0
        %v1012 = vadd.f32 0.0, %v1011
        %1013 = vmatprep.mubr.f32.mxu0 0.0
        %1014 = vmatmul.mubr.f32.gmra.mxu0 %v929
        %v1015 = vpop.f32.mrf.mxu0
        %v1016 = vadd.f32 0.0, %v1015
        %v1017 = vpop.f32.mrf.mxu0
        %v1018 = vadd.f32 0.0, %v1017
        %1019 = vdwg.mxu0
        %v1020 = vadd.f32 %v882, %v998
        %v1021 = vadd.f32 %v883, %v1000
        %v1022 = vadd.f32 %v884, %v1004
        %v1023 = vadd.f32 %v885, %v1006
        %v1024 = vadd.f32 %v886, %v1010
        %v1025 = vadd.f32 %v887, %v1012
        %v1026 = vadd.f32 %v888, %v1016
        %v1027 = vadd.f32 %v889, %v1018
        %s1028 = scalar_lea.vmem %s1, 768
        %v1029 = vld [vmem:[%s1028] sm:$0xff]
        %v1030 = vld [vmem:[%s1028 + $0x8] sm:$0xff]
        %v1031 = vld [vmem:[%s1028 + $0x10] sm:$0xff]
        %v1032 = vld [vmem:[%s1028 + $0x18] sm:$0xff]
        %v1033 = vld [vmem:[%s1028 + $0x20] sm:$0xff]
        %v1034 = vld [vmem:[%s1028 + $0x28] sm:$0xff]
        %v1035 = vld [vmem:[%s1028 + $0x30] sm:$0xff]
        %v1036 = vld [vmem:[%s1028 + $0x38] sm:$0xff]
        %v1037 = vld [vmem:[%s1028 + $0x40] sm:$0xff]
        %v1038 = vld [vmem:[%s1028 + $0x48] sm:$0xff]
        %v1039 = vld [vmem:[%s1028 + $0x50] sm:$0xff]
        %v1040 = vld [vmem:[%s1028 + $0x58] sm:$0xff]
        %v1041 = vld [vmem:[%s1028 + $0x60] sm:$0xff]
        %v1042 = vld [vmem:[%s1028 + $0x68] sm:$0xff]
        %v1043 = vld [vmem:[%s1028 + $0x70] sm:$0xff]
        %v1044 = vld [vmem:[%s1028 + $0x78] sm:$0xff]
        %v1045 = vld [vmem:[%s1028 + $0x80] sm:$0xff]
        %v1046 = vld [vmem:[%s1028 + $0x88] sm:$0xff]
        %v1047 = vld [vmem:[%s1028 + $0x90] sm:$0xff]
        %v1048 = vld [vmem:[%s1028 + $0x98] sm:$0xff]
        %v1049 = vld [vmem:[%s1028 + $0xa0] sm:$0xff]
        %v1050 = vld [vmem:[%s1028 + $0xa8] sm:$0xff]
        %v1051 = vld [vmem:[%s1028 + $0xb0] sm:$0xff]
        %v1052 = vld [vmem:[%s1028 + $0xb8] sm:$0xff]
        %vm1053 = vcmask 1043456
        %v1054 = vrot.slane %v492, 4
        %v1055 = vrot.slane %v493, 4
        %v1056 = vsel %vm1053, %v1054, %v1055
        %v1057 = vrot.slane %v494, 4
        %v1058 = vsel %vm1053, %v1055, %v1057
        %v1059 = vrot.slane %v495, 4
        %v1060 = vsel %vm1053, %v1057, %v1059
        %v1061 = vsel %vm557, %v1056, 0
        %v1063 = vsel %vm557, %v1058, 0
        %v1065 = vsel %vm557, %v1060, 0
        %v1067 = vsel %vm557, %v1059, 0
        %1069 = vmatprep.subr.mxu0 0.0
        %1070 = vmatpush1.msra.mxu0 0.0
        %1071 = vmatprep.subr.mxu0 0.0
        %1072 = vmatpush1.msra.mxu0 0.0
        %1073 = vmatprep.subr.mxu0 0.0
        %1074 = vmatpush1.msra.mxu0 0.0
        %1075 = vmatprep.subr.mxu0 0.0
        %1076 = vmatpush1.msra.mxu0 0.0
        %1077 = vmatprep.subr.mxu0 %v1052
        %1078 = vmatpush1.msra.mxu0 %v1051
        %1079 = vmatprep.subr.mxu0 %v1050
        %1080 = vmatpush1.msra.mxu0 %v1049
        %1081 = vmatprep.subr.mxu0 %v1048
        %1082 = vmatpush1.msra.mxu0 %v1047
        %1083 = vmatprep.subr.mxu0 %v1046
        %1084 = vmatpush1.msra.mxu0 %v1045
        %1085 = vmatprep.subr.mxu0 %v1044
        %1086 = vmatpush1.msra.mxu0 %v1043
        %1087 = vmatprep.subr.mxu0 %v1042
        %1088 = vmatpush1.msra.mxu0 %v1041
        %1089 = vmatprep.subr.mxu0 %v1040
        %1090 = vmatpush1.msra.mxu0 %v1039
        %1091 = vmatprep.subr.mxu0 %v1038
        %1092 = vmatpush1.msra.mxu0 %v1037
        %1093 = vmatprep.subr.mxu0 %v1036
        %1094 = vmatpush1.msra.mxu0 %v1035
        %1095 = vmatprep.subr.mxu0 %v1034
        %1096 = vmatpush1.msra.mxu0 %v1033
        %1097 = vmatprep.subr.mxu0 %v1032
        %1098 = vmatpush1.msra.mxu0 %v1031
        %1099 = vmatprep.subr.mxu0 %v1030
        %1100 = vmatpush1.msra.mxu0 %v1029
        %1101 = vmatprep.subr.mxu0 0.0
        %1102 = vmatpush2.msra.mxu0 0.0
        %1103 = vmatprep.subr.mxu0 0.0
        %1104 = vmatpush2.msra.mxu0 0.0
        %1105 = vmatprep.subr.mxu0 0.0
        %1106 = vmatpush2.msra.mxu0 0.0
        %1107 = vmatprep.subr.mxu0 0.0
        %1108 = vmatpush2.msra.mxu0 0.0
        %1109 = vmatprep.subr.mxu0 0.0
        %1110 = vmatpush2.msra.mxu0 0.0
        %1111 = vmatprep.subr.mxu0 0.0
        %1112 = vmatpush2.msra.mxu0 0.0
        %1113 = vmatprep.subr.mxu0 0.0
        %1114 = vmatpush2.msra.mxu0 0.0
        %1115 = vmatprep.subr.mxu0 0.0
        %1116 = vmatpush2.msra.mxu0 0.0
        %1117 = vmatprep.subr.mxu0 0.0
        %1118 = vmatpush2.msra.mxu0 0.0
        %1119 = vmatprep.subr.mxu0 0.0
        %1120 = vmatpush2.msra.mxu0 0.0
        %1121 = vmatprep.subr.mxu0 0.0
        %1122 = vmatpush2.msra.mxu0 0.0
        %1123 = vmatprep.subr.mxu0 0.0
        %1124 = vmatpush2.msra.mxu0 0.0
        %1125 = vmatprep.subr.mxu0 0.0
        %1126 = vmatpush2.msra.mxu0 0.0
        %1127 = vmatprep.subr.mxu0 0.0
        %1128 = vmatpush2.msra.mxu0 0.0
        %1129 = vmatprep.subr.mxu0 0.0
        %1130 = vmatpush2.msra.mxu0 0.0
        %1131 = vmatprep.subr.mxu0 0.0
        %1132 = vmatpush2.msra.mxu0 0.0
        %1133 = vmatprep.mubr.f32.mxu0 0.0
        %1134 = vmatmul.mubr.f32.gmra.mxu0 %v1061
        %v1135 = vpop.f32.mrf.mxu0
        %v1136 = vadd.f32 0.0, %v1135
        %v1137 = vpop.f32.mrf.mxu0
        %v1138 = vadd.f32 0.0, %v1137
        %1139 = vmatprep.mubr.f32.mxu0 0.0
        %1140 = vmatmul.mubr.f32.gmra.mxu0 %v1063
        %v1141 = vpop.f32.mrf.mxu0
        %v1142 = vadd.f32 0.0, %v1141
        %v1143 = vpop.f32.mrf.mxu0
        %v1144 = vadd.f32 0.0, %v1143
        %1145 = vmatprep.mubr.f32.mxu0 0.0
        %1146 = vmatmul.mubr.f32.gmra.mxu0 %v1065
        %v1147 = vpop.f32.mrf.mxu0
        %v1148 = vadd.f32 0.0, %v1147
        %v1149 = vpop.f32.mrf.mxu0
        %v1150 = vadd.f32 0.0, %v1149
        %1151 = vmatprep.mubr.f32.mxu0 0.0
        %1152 = vmatmul.mubr.f32.gmra.mxu0 %v1067
        %v1153 = vpop.f32.mrf.mxu0
        %v1154 = vadd.f32 0.0, %v1153
        %v1155 = vpop.f32.mrf.mxu0
        %v1156 = vadd.f32 0.0, %v1155
        %1157 = vdwg.mxu0
        %v1158 = vadd.f32 %v1020, %v1136
        %v1159 = vadd.f32 %v1021, %v1138
        %v1160 = vadd.f32 %v1022, %v1142
        %v1161 = vadd.f32 %v1023, %v1144
        %v1162 = vadd.f32 %v1024, %v1148
        %v1163 = vadd.f32 %v1025, %v1150
        %v1164 = vadd.f32 %v1026, %v1154
        %v1165 = vadd.f32 %v1027, %v1156
        %v1166 = vld [vmem:[%s3] sm:$0xff]
        %v1167 = vld [vmem:[%s3 + $0x8] sm:$0x3f]
        %vm1168 = vcmask 228352
        %v1170 = vsel %vm1168, %v1166, 0
        %v1173 = vsel %vm1168, %v1167, 0
        %v1176 = vsel %vm1053, %v1164, 0
        %v1179 = vsel %vm1053, %v1165, 0
        %1181 = vmatprep.subr.mxu0 0.0
        %1182 = vmatpush1.msra.mxu0 0.0
        %1183 = vmatprep.subr.mxu0 0.0
        %1184 = vmatpush1.msra.mxu0 0.0
        %1185 = vmatprep.subr.mxu0 0.0
        %1186 = vmatpush1.msra.mxu0 0.0
        %1187 = vmatprep.subr.mxu0 0.0
        %1188 = vmatpush1.msra.mxu0 0.0
        %1189 = vmatprep.subr.mxu0 0.0
        %1190 = vmatpush1.msra.mxu0 0.0
        %1191 = vmatprep.subr.mxu0 0.0
        %1192 = vmatpush1.msra.mxu0 0.0
        %1193 = vmatprep.subr.mxu0 0.0
        %1194 = vmatpush1.msra.mxu0 0.0
        %1195 = vmatprep.subr.mxu0 0.0
        %1196 = vmatpush1.msra.mxu0 0.0
        %1197 = vmatprep.subr.mxu0 0.0
        %1198 = vmatpush1.msra.mxu0 0.0
        %1199 = vmatprep.subr.mxu0 0.0
        %1200 = vmatpush1.msra.mxu0 0.0
        %1201 = vmatprep.subr.mxu0 0.0
        %1202 = vmatpush1.msra.mxu0 0.0
        %1203 = vmatprep.subr.mxu0 0.0
        %1204 = vmatpush1.msra.mxu0 0.0
        %1205 = vmatprep.subr.mxu0 %v1179
        %1206 = vmatpush1.msra.mxu0 %v1176
        %1207 = vmatprep.subr.mxu0 %v1163
        %1208 = vmatpush1.msra.mxu0 %v1162
        %1209 = vmatprep.subr.mxu0 %v1161
        %1210 = vmatpush1.msra.mxu0 %v1160
        %1211 = vmatprep.subr.mxu0 %v1159
        %1212 = vmatpush1.msra.mxu0 %v1158
        %1213 = vmatprep.subr.mxu0 0.0
        %1214 = vmatpush2.msra.mxu0 0.0
        %1215 = vmatprep.subr.mxu0 0.0
        %1216 = vmatpush2.msra.mxu0 0.0
        %1217 = vmatprep.subr.mxu0 0.0
        %1218 = vmatpush2.msra.mxu0 0.0
        %1219 = vmatprep.subr.mxu0 0.0
        %1220 = vmatpush2.msra.mxu0 0.0
        %1221 = vmatprep.subr.mxu0 0.0
        %1222 = vmatpush2.msra.mxu0 0.0
        %1223 = vmatprep.subr.mxu0 0.0
        %1224 = vmatpush2.msra.mxu0 0.0
        %1225 = vmatprep.subr.mxu0 0.0
        %1226 = vmatpush2.msra.mxu0 0.0
        %1227 = vmatprep.subr.mxu0 0.0
        %1228 = vmatpush2.msra.mxu0 0.0
        %1229 = vmatprep.subr.mxu0 0.0
        %1230 = vmatpush2.msra.mxu0 0.0
        %1231 = vmatprep.subr.mxu0 0.0
        %1232 = vmatpush2.msra.mxu0 0.0
        %1233 = vmatprep.subr.mxu0 0.0
        %1234 = vmatpush2.msra.mxu0 0.0
        %1235 = vmatprep.subr.mxu0 0.0
        %1236 = vmatpush2.msra.mxu0 0.0
        %1237 = vmatprep.subr.mxu0 0.0
        %1238 = vmatpush2.msra.mxu0 0.0
        %1239 = vmatprep.subr.mxu0 0.0
        %1240 = vmatpush2.msra.mxu0 0.0
        %1241 = vmatprep.subr.mxu0 0.0
        %1242 = vmatpush2.msra.mxu0 0.0
        %1243 = vmatprep.subr.mxu0 0.0
        %1244 = vmatpush2.msra.mxu0 0.0
        %1245 = vmatprep.mubr.f32.mxu0 0.0
        %1246 = vmatmul.mubr.f32.gmra.mxu0 %v1170
        %v1247 = vpop.f32.mrf.mxu0
        %v1248 = vadd.f32 0.0, %v1247
        %v1249 = vpop.f32.mrf.mxu0
        %v1250 = vadd.f32 0.0, %v1249
        %1251 = vmatprep.mubr.f32.mxu0 0.0
        %1252 = vmatmul.mubr.f32.gmra.mxu0 %v1173
        %v1253 = vpop.f32.mrf.mxu0
        %v1254 = vadd.f32 0.0, %v1253
        %v1255 = vpop.f32.mrf.mxu0
        %v1256 = vadd.f32 0.0, %v1255
        %1257 = vdwg.mxu0
        %s1258 = scalar_lea.vmem %s3, 16
        %v1259 = vld [vmem:[%s1258] sm:$0xff]
        %v1260 = vld [vmem:[%s1258 + $0x8] sm:$0x3f]
        %v1262 = vsel %vm1168, %v1259, 0
        %v1265 = vsel %vm1168, %v1260, 0
        %1267 = vmatprep.subr.mxu0 0.0
        %1268 = vmatpush1.msra.mxu0 0.0
        %1269 = vmatprep.subr.mxu0 0.0
        %1270 = vmatpush1.msra.mxu0 0.0
        %1271 = vmatprep.subr.mxu0 0.0
        %1272 = vmatpush1.msra.mxu0 0.0
        %1273 = vmatprep.subr.mxu0 0.0
        %1274 = vmatpush1.msra.mxu0 0.0
        %1275 = vmatprep.subr.mxu0 0.0
        %1276 = vmatpush1.msra.mxu0 0.0
        %1277 = vmatprep.subr.mxu0 0.0
        %1278 = vmatpush1.msra.mxu0 0.0
        %1279 = vmatprep.subr.mxu0 0.0
        %1280 = vmatpush1.msra.mxu0 0.0
        %1281 = vmatprep.subr.mxu0 0.0
        %1282 = vmatpush1.msra.mxu0 0.0
        %1283 = vmatprep.subr.mxu0 0.0
        %1284 = vmatpush1.msra.mxu0 0.0
        %1285 = vmatprep.subr.mxu0 0.0
        %1286 = vmatpush1.msra.mxu0 0.0
        %1287 = vmatprep.subr.mxu0 0.0
        %1288 = vmatpush1.msra.mxu0 0.0
        %1289 = vmatprep.subr.mxu0 0.0
        %1290 = vmatpush1.msra.mxu0 0.0
        %1291 = vmatprep.subr.mxu0 %v1179
        %1292 = vmatpush1.msra.mxu0 %v1176
        %1293 = vmatprep.subr.mxu0 %v1163
        %1294 = vmatpush1.msra.mxu0 %v1162
        %1295 = vmatprep.subr.mxu0 %v1161
        %1296 = vmatpush1.msra.mxu0 %v1160
        %1297 = vmatprep.subr.mxu0 %v1159
        %1298 = vmatpush1.msra.mxu0 %v1158
        %1299 = vmatprep.subr.mxu0 0.0
        %1300 = vmatpush2.msra.mxu0 0.0
        %1301 = vmatprep.subr.mxu0 0.0
        %1302 = vmatpush2.msra.mxu0 0.0
        %1303 = vmatprep.subr.mxu0 0.0
        %1304 = vmatpush2.msra.mxu0 0.0
        %1305 = vmatprep.subr.mxu0 0.0
        %1306 = vmatpush2.msra.mxu0 0.0
        %1307 = vmatprep.subr.mxu0 0.0
        %1308 = vmatpush2.msra.mxu0 0.0
        %1309 = vmatprep.subr.mxu0 0.0
        %1310 = vmatpush2.msra.mxu0 0.0
        %1311 = vmatprep.subr.mxu0 0.0
        %1312 = vmatpush2.msra.mxu0 0.0
        %1313 = vmatprep.subr.mxu0 0.0
        %1314 = vmatpush2.msra.mxu0 0.0
        %1315 = vmatprep.subr.mxu0 0.0
        %1316 = vmatpush2.msra.mxu0 0.0
        %1317 = vmatprep.subr.mxu0 0.0
        %1318 = vmatpush2.msra.mxu0 0.0
        %1319 = vmatprep.subr.mxu0 0.0
        %1320 = vmatpush2.msra.mxu0 0.0
        %1321 = vmatprep.subr.mxu0 0.0
        %1322 = vmatpush2.msra.mxu0 0.0
        %1323 = vmatprep.subr.mxu0 0.0
        %1324 = vmatpush2.msra.mxu0 0.0
        %1325 = vmatprep.subr.mxu0 0.0
        %1326 = vmatpush2.msra.mxu0 0.0
        %1327 = vmatprep.subr.mxu0 0.0
        %1328 = vmatpush2.msra.mxu0 0.0
        %1329 = vmatprep.subr.mxu0 0.0
        %1330 = vmatpush2.msra.mxu0 0.0
        %1331 = vmatprep.mubr.f32.mxu0 0.0
        %1332 = vmatmul.mubr.f32.gmra.mxu0 %v1262
        %v1333 = vpop.f32.mrf.mxu0
        %v1334 = vadd.f32 0.0, %v1333
        %v1335 = vpop.f32.mrf.mxu0
        %v1336 = vadd.f32 0.0, %v1335
        %1337 = vmatprep.mubr.f32.mxu0 0.0
        %1338 = vmatmul.mubr.f32.gmra.mxu0 %v1265
        %v1339 = vpop.f32.mrf.mxu0
        %v1340 = vadd.f32 0.0, %v1339
        %v1341 = vpop.f32.mrf.mxu0
        %v1342 = vadd.f32 0.0, %v1341
        %1343 = vdwg.mxu0
        %v1344 = vmax.f32 %v1248, %v1334
        %v1345 = vmax.f32 %v1250, %v1336
        %v1346 = vmax.f32 %v1254, %v1340
        %v1347 = vmax.f32 %v1256, %v1342
        %v1348 = vld [vmem:[%s4] sm:$0xff]
        %v1349 = vld [vmem:[%s4 + $0x8] sm:$0xff]
        %v1350 = vld [vmem:[%s4 + $0x10] sm:$0xff]
        %v1351 = vld [vmem:[%s4 + $0x18] sm:$0xff]
        %v1352 = vld [vmem:[%s4 + $0x20] sm:$0xff]
        %v1353 = vld [vmem:[%s4 + $0x28] sm:$0xff]
        %v1354 = vld [vmem:[%s4 + $0x30] sm:$0xff]
        %v1355 = vld [vmem:[%s4 + $0x38] sm:$0xff]
        %v1356 = vld [vmem:[%s4 + $0x40] sm:$0xff]
        %v1357 = vld [vmem:[%s4 + $0x48] sm:$0xff]
        %v1358 = vld [vmem:[%s4 + $0x50] sm:$0xff]
        %v1359 = vld [vmem:[%s4 + $0x58] sm:$0xff]
        %v1360 = vld [vmem:[%s4 + $0x60] sm:$0xff]
        %v1361 = vld [vmem:[%s4 + $0x68] sm:$0xff]
        %v1362 = vld [vmem:[%s4 + $0x70] sm:$0xff]
        %v1363 = vld [vmem:[%s4 + $0x78] sm:$0xff]
        %v1364 = vld [vmem:[%s4 + $0x80] sm:$0xff]
        %v1365 = vld [vmem:[%s4 + $0x88] sm:$0xff]
        %v1366 = vld [vmem:[%s4 + $0x90] sm:$0xff]
        %v1367 = vld [vmem:[%s4 + $0x98] sm:$0xff]
        %v1368 = vld [vmem:[%s4 + $0xa0] sm:$0xff]
        %vm1369 = vcmask 326656
        %v1371 = vsel %vm1369, %v1345, 0
        %v1374 = vsel %vm1369, %v1347, 0
        %1376 = vmatprep.subr.mxu0 0.0
        %1377 = vmatpush1.msra.mxu0 %v1363
        %1378 = vmatprep.subr.mxu0 0.0
        %1379 = vmatpush1.msra.mxu0 %v1362
        %1380 = vmatprep.subr.mxu0 0.0
        %1381 = vmatpush1.msra.mxu0 %v1361
        %1382 = vmatprep.subr.mxu0 0.0
        %1383 = vmatpush1.msra.mxu0 %v1360
        %1384 = vmatprep.subr.mxu0 0.0
        %1385 = vmatpush1.msra.mxu0 %v1359
        %1386 = vmatprep.subr.mxu0 0.0
        %1387 = vmatpush1.msra.mxu0 %v1358
        %1388 = vmatprep.subr.mxu0 0.0
        %1389 = vmatpush1.msra.mxu0 %v1357
        %1390 = vmatprep.subr.mxu0 0.0
        %1391 = vmatpush1.msra.mxu0 %v1356
        %1392 = vmatprep.subr.mxu0 0.0
        %1393 = vmatpush1.msra.mxu0 %v1355
        %1394 = vmatprep.subr.mxu0 0.0
        %1395 = vmatpush1.msra.mxu0 %v1354
        %1396 = vmatprep.subr.mxu0 0.0
        %1397 = vmatpush1.msra.mxu0 %v1353
        %1398 = vmatprep.subr.mxu0 0.0
        %1399 = vmatpush1.msra.mxu0 %v1352
        %1400 = vmatprep.subr.mxu0 0.0
        %1401 = vmatpush1.msra.mxu0 %v1351
        %1402 = vmatprep.subr.mxu0 0.0
        %1403 = vmatpush1.msra.mxu0 %v1350
        %1404 = vmatprep.subr.mxu0 0.0
        %1405 = vmatpush1.msra.mxu0 %v1349
        %1406 = vmatprep.subr.mxu0 0.0
        %1407 = vmatpush1.msra.mxu0 %v1348
        %1408 = vmatprep.subr.mxu0 0.0
        %1409 = vmatpush2.msra.mxu0 0.0
        %1410 = vmatprep.subr.mxu0 0.0
        %1411 = vmatpush2.msra.mxu0 0.0
        %1412 = vmatprep.subr.mxu0 0.0
        %1413 = vmatpush2.msra.mxu0 0.0
        %1414 = vmatprep.subr.mxu0 0.0
        %1415 = vmatpush2.msra.mxu0 0.0
        %1416 = vmatprep.subr.mxu0 0.0
        %1417 = vmatpush2.msra.mxu0 0.0
        %1418 = vmatprep.subr.mxu0 0.0
        %1419 = vmatpush2.msra.mxu0 0.0
        %1420 = vmatprep.subr.mxu0 0.0
        %1421 = vmatpush2.msra.mxu0 0.0
        %1422 = vmatprep.subr.mxu0 0.0
        %1423 = vmatpush2.msra.mxu0 0.0
        %1424 = vmatprep.subr.mxu0 0.0
        %1425 = vmatpush2.msra.mxu0 0.0
        %1426 = vmatprep.subr.mxu0 0.0
        %1427 = vmatpush2.msra.mxu0 0.0
        %1428 = vmatprep.subr.mxu0 0.0
        %1429 = vmatpush2.msra.mxu0 0.0
        %1430 = vmatprep.subr.mxu0 0.0
        %1431 = vmatpush2.msra.mxu0 %v1368
        %1432 = vmatprep.subr.mxu0 0.0
        %1433 = vmatpush2.msra.mxu0 %v1367
        %1434 = vmatprep.subr.mxu0 0.0
        %1435 = vmatpush2.msra.mxu0 %v1366
        %1436 = vmatprep.subr.mxu0 0.0
        %1437 = vmatpush2.msra.mxu0 %v1365
        %1438 = vmatprep.subr.mxu0 0.0
        %1439 = vmatpush2.msra.mxu0 %v1364
        %1440 = vmatprep.mubr.f32.mxu0 %v1371
        %1441 = vmatmul.mubr.f32.gmra.mxu0 %v1344
        %v1442 = vpop.f32.mrf.mxu0
        %v1443 = vadd.f32 0.0, %v1442
        %v1444 = vpop.f32.mrf.mxu0
        %1445 = vmatprep.mubr.f32.mxu0 %v1374
        %1446 = vmatmul.mubr.f32.gmra.mxu0 %v1346
        %v1447 = vpop.f32.mrf.mxu0
        %v1448 = vadd.f32 0.0, %v1447
        %v1449 = vpop.f32.mrf.mxu0
        %1450 = vdwg.mxu0
        %s1451 = scalar_lea.vmem %s4, 168
        %v1452 = vld [vmem:[%s1451] sm:$0xff]
        %v1453 = vld [vmem:[%s1451 + $0x8] sm:$0xff]
        %v1454 = vld [vmem:[%s1451 + $0x10] sm:$0xff]
        %v1455 = vld [vmem:[%s1451 + $0x18] sm:$0xff]
        %v1456 = vld [vmem:[%s1451 + $0x20] sm:$0xff]
        %v1457 = vld [vmem:[%s1451 + $0x28] sm:$0xff]
        %v1458 = vld [vmem:[%s1451 + $0x30] sm:$0xff]
        %v1459 = vld [vmem:[%s1451 + $0x38] sm:$0xff]
        %v1460 = vld [vmem:[%s1451 + $0x40] sm:$0xff]
        %v1461 = vld [vmem:[%s1451 + $0x48] sm:$0xff]
        %v1462 = vld [vmem:[%s1451 + $0x50] sm:$0xff]
        %v1463 = vld [vmem:[%s1451 + $0x58] sm:$0xff]
        %v1464 = vld [vmem:[%s1451 + $0x60] sm:$0xff]
        %v1465 = vld [vmem:[%s1451 + $0x68] sm:$0xff]
        %v1466 = vld [vmem:[%s1451 + $0x70] sm:$0xff]
        %v1467 = vld [vmem:[%s1451 + $0x78] sm:$0xff]
        %v1468 = vld [vmem:[%s1451 + $0x80] sm:$0xff]
        %v1469 = vld [vmem:[%s1451 + $0x88] sm:$0xff]
        %v1470 = vld [vmem:[%s1451 + $0x90] sm:$0xff]
        %v1471 = vld [vmem:[%s1451 + $0x98] sm:$0xff]
        %v1472 = vld [vmem:[%s1451 + $0xa0] sm:$0xff]
        %1473 = vmatprep.subr.mxu0 0.0
        %1474 = vmatpush1.msra.mxu0 %v1467
        %1475 = vmatprep.subr.mxu0 0.0
        %1476 = vmatpush1.msra.mxu0 %v1466
        %1477 = vmatprep.subr.mxu0 0.0
        %1478 = vmatpush1.msra.mxu0 %v1465
        %1479 = vmatprep.subr.mxu0 0.0
        %1480 = vmatpush1.msra.mxu0 %v1464
        %1481 = vmatprep.subr.mxu0 0.0
        %1482 = vmatpush1.msra.mxu0 %v1463
        %1483 = vmatprep.subr.mxu0 0.0
        %1484 = vmatpush1.msra.mxu0 %v1462
        %1485 = vmatprep.subr.mxu0 0.0
        %1486 = vmatpush1.msra.mxu0 %v1461
        %1487 = vmatprep.subr.mxu0 0.0
        %1488 = vmatpush1.msra.mxu0 %v1460
        %1489 = vmatprep.subr.mxu0 0.0
        %1490 = vmatpush1.msra.mxu0 %v1459
        %1491 = vmatprep.subr.mxu0 0.0
        %1492 = vmatpush1.msra.mxu0 %v1458
        %1493 = vmatprep.subr.mxu0 0.0
        %1494 = vmatpush1.msra.mxu0 %v1457
        %1495 = vmatprep.subr.mxu0 0.0
        %1496 = vmatpush1.msra.mxu0 %v1456
        %1497 = vmatprep.subr.mxu0 0.0
        %1498 = vmatpush1.msra.mxu0 %v1455
        %1499 = vmatprep.subr.mxu0 0.0
        %1500 = vmatpush1.msra.mxu0 %v1454
        %1501 = vmatprep.subr.mxu0 0.0
        %1502 = vmatpush1.msra.mxu0 %v1453
        %1503 = vmatprep.subr.mxu0 0.0
        %1504 = vmatpush1.msra.mxu0 %v1452
        %1505 = vmatprep.subr.mxu0 0.0
        %1506 = vmatpush2.msra.mxu0 0.0
        %1507 = vmatprep.subr.mxu0 0.0
        %1508 = vmatpush2.msra.mxu0 0.0
        %1509 = vmatprep.subr.mxu0 0.0
        %1510 = vmatpush2.msra.mxu0 0.0
        %1511 = vmatprep.subr.mxu0 0.0
        %1512 = vmatpush2.msra.mxu0 0.0
        %1513 = vmatprep.subr.mxu0 0.0
        %1514 = vmatpush2.msra.mxu0 0.0
        %1515 = vmatprep.subr.mxu0 0.0
        %1516 = vmatpush2.msra.mxu0 0.0
        %1517 = vmatprep.subr.mxu0 0.0
        %1518 = vmatpush2.msra.mxu0 0.0
        %1519 = vmatprep.subr.mxu0 0.0
        %1520 = vmatpush2.msra.mxu0 0.0
        %1521 = vmatprep.subr.mxu0 0.0
        %1522 = vmatpush2.msra.mxu0 0.0
        %1523 = vmatprep.subr.mxu0 0.0
        %1524 = vmatpush2.msra.mxu0 0.0
        %1525 = vmatprep.subr.mxu0 0.0
        %1526 = vmatpush2.msra.mxu0 0.0
        %1527 = vmatprep.subr.mxu0 0.0
        %1528 = vmatpush2.msra.mxu0 %v1472
        %1529 = vmatprep.subr.mxu0 0.0
        %1530 = vmatpush2.msra.mxu0 %v1471
        %1531 = vmatprep.subr.mxu0 0.0
        %1532 = vmatpush2.msra.mxu0 %v1470
        %1533 = vmatprep.subr.mxu0 0.0
        %1534 = vmatpush2.msra.mxu0 %v1469
        %1535 = vmatprep.subr.mxu0 0.0
        %1536 = vmatpush2.msra.mxu0 %v1468
        %1537 = vmatprep.mubr.f32.mxu0 %v1371
        %1538 = vmatmul.mubr.f32.gmra.mxu0 %v1344
        %v1539 = vpop.f32.mrf.mxu0
        %v1540 = vadd.f32 0.0, %v1539
        %v1541 = vpop.f32.mrf.mxu0
        %1542 = vmatprep.mubr.f32.mxu0 %v1374
        %1543 = vmatmul.mubr.f32.gmra.mxu0 %v1346
        %v1544 = vpop.f32.mrf.mxu0
        %v1545 = vadd.f32 0.0, %v1544
        %v1546 = vpop.f32.mrf.mxu0
        %1547 = vdwg.mxu0
        %v1548 = vmax.f32 %v1443, %v1540
        %v1549 = vmax.f32 %v1448, %v1545
        %v1550 = vld [vmem:[%s2] sm:$0x1]
        %v1552 = vlaneseq
        %v1553 = vshrl.u32 %v1552, 7
        %v1554 = vsub.s32 0, %v1553
        %v1555 = vrot.slane %v1550, %v1554
        %v1557 = vadd.f32 %v1548, %v1555
        %v1558 = vadd.f32 %v1549, %v1555
        %v1559 = vmax.f32 %v1557, 0.0
        %v1560 = vmax.f32 %v1558, 0.0
        %v1561 = vld [vmem:[%s5] sm:$0xff]
        %v1562 = vld [vmem:[%s5 + $0x8] sm:$0xff]
        %v1563 = vld [vmem:[%s5 + $0x10] sm:$0xff]
        %v1564 = vld [vmem:[%s5 + $0x18] sm:$0xff]
        %v1565 = vld [vmem:[%s5 + $0x20] sm:$0xff]
        %v1566 = vld [vmem:[%s5 + $0x28] sm:$0xff]
        %v1567 = vld [vmem:[%s5 + $0x30] sm:$0xff]
        %v1568 = vld [vmem:[%s5 + $0x38] sm:$0xff]
        %v1569 = vld [vmem:[%s5 + $0x40] sm:$0xff]
        %v1570 = vld [vmem:[%s5 + $0x48] sm:$0xff]
        %v1571 = vld [vmem:[%s5 + $0x50] sm:$0xff]
        %v1572 = vld [vmem:[%s5 + $0x58] sm:$0xff]
        %v1573 = vld [vmem:[%s5 + $0x60] sm:$0xff]
        %v1574 = vld [vmem:[%s5 + $0x68] sm:$0xff]
        %v1575 = vld [vmem:[%s5 + $0x70] sm:$0xff]
        %v1576 = vld [vmem:[%s5 + $0x78] sm:$0xff]
        %v1577 = vld [vmem:[%s5 + $0x80] sm:$0xff]
        %v1578 = vld [vmem:[%s5 + $0x88] sm:$0xff]
        %v1579 = vld [vmem:[%s5 + $0x90] sm:$0xff]
        %v1580 = vld [vmem:[%s5 + $0x98] sm:$0xff]
        %v1581 = vld [vmem:[%s5 + $0xa0] sm:$0xf]
        %v1582 = vld [vmem:[%s5 + $0xa8] sm:$0xf]
        %s1583 = scalar_lea.vmem %s5, 176
        %v1584 = vld [vmem:[%s1583] sm:$0xff]
        %v1585 = vld [vmem:[%s1583 + $0x8] sm:$0xff]
        %v1586 = vld [vmem:[%s1583 + $0x10] sm:$0xff]
        %v1587 = vld [vmem:[%s1583 + $0x18] sm:$0xff]
        %v1588 = vld [vmem:[%s1583 + $0x20] sm:$0xff]
        %v1589 = vld [vmem:[%s1583 + $0x28] sm:$0xff]
        %v1590 = vld [vmem:[%s1583 + $0x30] sm:$0xff]
        %v1591 = vld [vmem:[%s1583 + $0x38] sm:$0xff]
        %v1592 = vld [vmem:[%s1583 + $0x40] sm:$0xff]
        %v1593 = vld [vmem:[%s1583 + $0x48] sm:$0xff]
        %v1594 = vld [vmem:[%s1583 + $0x50] sm:$0xff]
        %v1595 = vld [vmem:[%s1583 + $0x58] sm:$0xff]
        %v1596 = vld [vmem:[%s1583 + $0x60] sm:$0xff]
        %v1597 = vld [vmem:[%s1583 + $0x68] sm:$0xff]
        %v1598 = vld [vmem:[%s1583 + $0x70] sm:$0xff]
        %v1599 = vld [vmem:[%s1583 + $0x78] sm:$0xff]
        %v1600 = vld [vmem:[%s1583 + $0x80] sm:$0xff]
        %v1601 = vld [vmem:[%s1583 + $0x88] sm:$0xff]
        %v1602 = vld [vmem:[%s1583 + $0x90] sm:$0xff]
        %v1603 = vld [vmem:[%s1583 + $0x98] sm:$0xff]
        %v1604 = vld [vmem:[%s1583 + $0xa0] sm:$0xf]
        %v1605 = vld [vmem:[%s1583 + $0xa8] sm:$0xf]
        %v1608 = vrot.slane %v1559, 1
        %v1609 = vrot.slane %v1560, 1
        %v1610 = vsel %vm549, %v1608, %v1609
        %vm1611 = vcmask 687104
        %v1612 = vsel %vm1611, %v1610, 0
        %v1614 = vsel %vm1611, %v1609, 0
        %v1617 = vsel %vm1053, %v1604, 0
        %v1620 = vsel %vm1053, %v1605, 0
        %1622 = vmatprep.subr.mxu0 0.0
        %1623 = vmatpush1.msra.mxu0 0.0
        %1624 = vmatprep.subr.mxu0 0.0
        %1625 = vmatpush1.msra.mxu0 0.0
        %1626 = vmatprep.subr.mxu0 0.0
        %1627 = vmatpush1.msra.mxu0 0.0
        %1628 = vmatprep.subr.mxu0 0.0
        %1629 = vmatpush1.msra.mxu0 0.0
        %1630 = vmatprep.subr.mxu0 0.0
        %1631 = vmatpush1.msra.mxu0 0.0
        %1632 = vmatprep.subr.mxu0 %v1620
        %1633 = vmatpush1.msra.mxu0 %v1617
        %1634 = vmatprep.subr.mxu0 %v1603
        %1635 = vmatpush1.msra.mxu0 %v1602
        %1636 = vmatprep.subr.mxu0 %v1601
        %1637 = vmatpush1.msra.mxu0 %v1600
        %1638 = vmatprep.subr.mxu0 %v1599
        %1639 = vmatpush1.msra.mxu0 %v1598
        %1640 = vmatprep.subr.mxu0 %v1597
        %1641 = vmatpush1.msra.mxu0 %v1596
        %1642 = vmatprep.subr.mxu0 %v1595
        %1643 = vmatpush1.msra.mxu0 %v1594
        %1644 = vmatprep.subr.mxu0 %v1593
        %1645 = vmatpush1.msra.mxu0 %v1592
        %1646 = vmatprep.subr.mxu0 %v1591
        %1647 = vmatpush1.msra.mxu0 %v1590
        %1648 = vmatprep.subr.mxu0 %v1589
        %1649 = vmatpush1.msra.mxu0 %v1588
        %1650 = vmatprep.subr.mxu0 %v1587
        %1651 = vmatpush1.msra.mxu0 %v1586
        %1652 = vmatprep.subr.mxu0 %v1585
        %1653 = vmatpush1.msra.mxu0 %v1584
        %1654 = vmatprep.subr.mxu0 0.0
        %1655 = vmatpush2.msra.mxu0 0.0
        %1656 = vmatprep.subr.mxu0 0.0
        %1657 = vmatpush2.msra.mxu0 0.0
        %1658 = vmatprep.subr.mxu0 0.0
        %1659 = vmatpush2.msra.mxu0 0.0
        %1660 = vmatprep.subr.mxu0 0.0
        %1661 = vmatpush2.msra.mxu0 0.0
        %1662 = vmatprep.subr.mxu0 0.0
        %1663 = vmatpush2.msra.mxu0 0.0
        %1664 = vmatprep.subr.mxu0 0.0
        %1665 = vmatpush2.msra.mxu0 0.0
        %1666 = vmatprep.subr.mxu0 0.0
        %1667 = vmatpush2.msra.mxu0 0.0
        %1668 = vmatprep.subr.mxu0 0.0
        %1669 = vmatpush2.msra.mxu0 0.0
        %1670 = vmatprep.subr.mxu0 0.0
        %1671 = vmatpush2.msra.mxu0 0.0
        %1672 = vmatprep.subr.mxu0 0.0
        %1673 = vmatpush2.msra.mxu0 0.0
        %1674 = vmatprep.subr.mxu0 0.0
        %1675 = vmatpush2.msra.mxu0 0.0
        %1676 = vmatprep.subr.mxu0 0.0
        %1677 = vmatpush2.msra.mxu0 0.0
        %1678 = vmatprep.subr.mxu0 0.0
        %1679 = vmatpush2.msra.mxu0 0.0
        %1680 = vmatprep.subr.mxu0 0.0
        %1681 = vmatpush2.msra.mxu0 0.0
        %1682 = vmatprep.subr.mxu0 0.0
        %1683 = vmatpush2.msra.mxu0 0.0
        %1684 = vmatprep.subr.mxu0 0.0
        %1685 = vmatpush2.msra.mxu0 0.0
        %1686 = vmatprep.mubr.f32.mxu0 0.0
        %1687 = vmatmul.mubr.f32.gmra.mxu0 %v1612
        %v1688 = vpop.f32.mrf.mxu0
        %v1689 = vadd.f32 0.0, %v1688
        %v1690 = vpop.f32.mrf.mxu0
        %v1691 = vadd.f32 0.0, %v1690
        %1692 = vmatprep.mubr.f32.mxu0 0.0
        %1693 = vmatmul.mubr.f32.gmra.mxu0 %v1614
        %v1694 = vpop.f32.mrf.mxu0
        %v1695 = vadd.f32 0.0, %v1694
        %v1696 = vpop.f32.mrf.mxu0
        %v1697 = vadd.f32 0.0, %v1696
        %1698 = vdwg.mxu0
        %v1699 = vsel %vm1611, %v1559, 0
        %v1701 = vsel %vm1611, %v1560, 0
        %v1704 = vsel %vm1053, %v1581, 0
        %v1707 = vsel %vm1053, %v1582, 0
        %1709 = vmatprep.subr.mxu0 0.0
        %1710 = vmatpush1.msra.mxu0 0.0
        %1711 = vmatprep.subr.mxu0 0.0
        %1712 = vmatpush1.msra.mxu0 0.0
        %1713 = vmatprep.subr.mxu0 0.0
        %1714 = vmatpush1.msra.mxu0 0.0
        %1715 = vmatprep.subr.mxu0 0.0
        %1716 = vmatpush1.msra.mxu0 0.0
        %1717 = vmatprep.subr.mxu0 0.0
        %1718 = vmatpush1.msra.mxu0 0.0
        %1719 = vmatprep.subr.mxu0 %v1707
        %1720 = vmatpush1.msra.mxu0 %v1704
        %1721 = vmatprep.subr.mxu0 %v1580
        %1722 = vmatpush1.msra.mxu0 %v1579
        %1723 = vmatprep.subr.mxu0 %v1578
        %1724 = vmatpush1.msra.mxu0 %v1577
        %1725 = vmatprep.subr.mxu0 %v1576
        %1726 = vmatpush1.msra.mxu0 %v1575
        %1727 = vmatprep.subr.mxu0 %v1574
        %1728 = vmatpush1.msra.mxu0 %v1573
        %1729 = vmatprep.subr.mxu0 %v1572
        %1730 = vmatpush1.msra.mxu0 %v1571
        %1731 = vmatprep.subr.mxu0 %v1570
        %1732 = vmatpush1.msra.mxu0 %v1569
        %1733 = vmatprep.subr.mxu0 %v1568
        %1734 = vmatpush1.msra.mxu0 %v1567
        %1735 = vmatprep.subr.mxu0 %v1566
        %1736 = vmatpush1.msra.mxu0 %v1565
        %1737 = vmatprep.subr.mxu0 %v1564
        %1738 = vmatpush1.msra.mxu0 %v1563
        %1739 = vmatprep.subr.mxu0 %v1562
        %1740 = vmatpush1.msra.mxu0 %v1561
        %1741 = vmatprep.subr.mxu0 0.0
        %1742 = vmatpush2.msra.mxu0 0.0
        %1743 = vmatprep.subr.mxu0 0.0
        %1744 = vmatpush2.msra.mxu0 0.0
        %1745 = vmatprep.subr.mxu0 0.0
        %1746 = vmatpush2.msra.mxu0 0.0
        %1747 = vmatprep.subr.mxu0 0.0
        %1748 = vmatpush2.msra.mxu0 0.0
        %1749 = vmatprep.subr.mxu0 0.0
        %1750 = vmatpush2.msra.mxu0 0.0
        %1751 = vmatprep.subr.mxu0 0.0
        %1752 = vmatpush2.msra.mxu0 0.0
        %1753 = vmatprep.subr.mxu0 0.0
        %1754 = vmatpush2.msra.mxu0 0.0
        %1755 = vmatprep.subr.mxu0 0.0
        %1756 = vmatpush2.msra.mxu0 0.0
        %1757 = vmatprep.subr.mxu0 0.0
        %1758 = vmatpush2.msra.mxu0 0.0
        %1759 = vmatprep.subr.mxu0 0.0
        %1760 = vmatpush2.msra.mxu0 0.0
        %1761 = vmatprep.subr.mxu0 0.0
        %1762 = vmatpush2.msra.mxu0 0.0
        %1763 = vmatprep.subr.mxu0 0.0
        %1764 = vmatpush2.msra.mxu0 0.0
        %1765 = vmatprep.subr.mxu0 0.0
        %1766 = vmatpush2.msra.mxu0 0.0
        %1767 = vmatprep.subr.mxu0 0.0
        %1768 = vmatpush2.msra.mxu0 0.0
        %1769 = vmatprep.subr.mxu0 0.0
        %1770 = vmatpush2.msra.mxu0 0.0
        %1771 = vmatprep.subr.mxu0 0.0
        %1772 = vmatpush2.msra.mxu0 0.0
        %1773 = vmatprep.mubr.f32.mxu0 0.0
        %1774 = vmatmul.mubr.f32.gmra.mxu0 %v1699
        %v1775 = vpop.f32.mrf.mxu0
        %v1776 = vadd.f32 %v1689, %v1775
        %v1777 = vpop.f32.mrf.mxu0
        %v1778 = vadd.f32 %v1691, %v1777
        %1779 = vmatprep.mubr.f32.mxu0 0.0
        %1780 = vmatmul.mubr.f32.gmra.mxu0 %v1701
        %v1781 = vpop.f32.mrf.mxu0
        %v1782 = vadd.f32 %v1695, %v1781
        %v1783 = vpop.f32.mrf.mxu0
        %v1784 = vadd.f32 %v1697, %v1783
        %1785 = vdwg.mxu0
        %s1786 = scalar_lea.vmem %s5, 352
        %v1787 = vld [vmem:[%s1786] sm:$0xff]
        %v1788 = vld [vmem:[%s1786 + $0x8] sm:$0xff]
        %v1789 = vld [vmem:[%s1786 + $0x10] sm:$0xff]
        %v1790 = vld [vmem:[%s1786 + $0x18] sm:$0xff]
        %v1791 = vld [vmem:[%s1786 + $0x20] sm:$0xff]
        %v1792 = vld [vmem:[%s1786 + $0x28] sm:$0xff]
        %v1793 = vld [vmem:[%s1786 + $0x30] sm:$0xff]
        %v1794 = vld [vmem:[%s1786 + $0x38] sm:$0xff]
        %v1795 = vld [vmem:[%s1786 + $0x40] sm:$0xff]
        %v1796 = vld [vmem:[%s1786 + $0x48] sm:$0xff]
        %v1797 = vld [vmem:[%s1786 + $0x50] sm:$0xff]
        %v1798 = vld [vmem:[%s1786 + $0x58] sm:$0xff]
        %v1799 = vld [vmem:[%s1786 + $0x60] sm:$0xff]
        %v1800 = vld [vmem:[%s1786 + $0x68] sm:$0xff]
        %v1801 = vld [vmem:[%s1786 + $0x70] sm:$0xff]
        %v1802 = vld [vmem:[%s1786 + $0x78] sm:$0xff]
        %v1803 = vld [vmem:[%s1786 + $0x80] sm:$0xff]
        %v1804 = vld [vmem:[%s1786 + $0x88] sm:$0xff]
        %v1805 = vld [vmem:[%s1786 + $0x90] sm:$0xff]
        %v1806 = vld [vmem:[%s1786 + $0x98] sm:$0xff]
        %v1807 = vld [vmem:[%s1786 + $0xa0] sm:$0xf]
        %v1808 = vld [vmem:[%s1786 + $0xa8] sm:$0xf]
        %v1809 = vrot.slane %v1559, 2
        %v1810 = vrot.slane %v1560, 2
        %v1811 = vsel %vm777, %v1809, %v1810
        %v1812 = vsel %vm1611, %v1811, 0
        %v1814 = vsel %vm1611, %v1810, 0
        %v1817 = vsel %vm1053, %v1807, 0
        %v1820 = vsel %vm1053, %v1808, 0
        %1822 = vmatprep.subr.mxu0 0.0
        %1823 = vmatpush1.msra.mxu0 0.0
        %1824 = vmatprep.subr.mxu0 0.0
        %1825 = vmatpush1.msra.mxu0 0.0
        %1826 = vmatprep.subr.mxu0 0.0
        %1827 = vmatpush1.msra.mxu0 0.0
        %1828 = vmatprep.subr.mxu0 0.0
        %1829 = vmatpush1.msra.mxu0 0.0
        %1830 = vmatprep.subr.mxu0 0.0
        %1831 = vmatpush1.msra.mxu0 0.0
        %1832 = vmatprep.subr.mxu0 %v1820
        %1833 = vmatpush1.msra.mxu0 %v1817
        %1834 = vmatprep.subr.mxu0 %v1806
        %1835 = vmatpush1.msra.mxu0 %v1805
        %1836 = vmatprep.subr.mxu0 %v1804
        %1837 = vmatpush1.msra.mxu0 %v1803
        %1838 = vmatprep.subr.mxu0 %v1802
        %1839 = vmatpush1.msra.mxu0 %v1801
        %1840 = vmatprep.subr.mxu0 %v1800
        %1841 = vmatpush1.msra.mxu0 %v1799
        %1842 = vmatprep.subr.mxu0 %v1798
        %1843 = vmatpush1.msra.mxu0 %v1797
        %1844 = vmatprep.subr.mxu0 %v1796
        %1845 = vmatpush1.msra.mxu0 %v1795
        %1846 = vmatprep.subr.mxu0 %v1794
        %1847 = vmatpush1.msra.mxu0 %v1793
        %1848 = vmatprep.subr.mxu0 %v1792
        %1849 = vmatpush1.msra.mxu0 %v1791
        %1850 = vmatprep.subr.mxu0 %v1790
        %1851 = vmatpush1.msra.mxu0 %v1789
        %1852 = vmatprep.subr.mxu0 %v1788
        %1853 = vmatpush1.msra.mxu0 %v1787
        %1854 = vmatprep.subr.mxu0 0.0
        %1855 = vmatpush2.msra.mxu0 0.0
        %1856 = vmatprep.subr.mxu0 0.0
        %1857 = vmatpush2.msra.mxu0 0.0
        %1858 = vmatprep.subr.mxu0 0.0
        %1859 = vmatpush2.msra.mxu0 0.0
        %1860 = vmatprep.subr.mxu0 0.0
        %1861 = vmatpush2.msra.mxu0 0.0
        %1862 = vmatprep.subr.mxu0 0.0
        %1863 = vmatpush2.msra.mxu0 0.0
        %1864 = vmatprep.subr.mxu0 0.0
        %1865 = vmatpush2.msra.mxu0 0.0
        %1866 = vmatprep.subr.mxu0 0.0
        %1867 = vmatpush2.msra.mxu0 0.0
        %1868 = vmatprep.subr.mxu0 0.0
        %1869 = vmatpush2.msra.mxu0 0.0
        %1870 = vmatprep.subr.mxu0 0.0
        %1871 = vmatpush2.msra.mxu0 0.0
        %1872 = vmatprep.subr.mxu0 0.0
        %1873 = vmatpush2.msra.mxu0 0.0
        %1874 = vmatprep.subr.mxu0 0.0
        %1875 = vmatpush2.msra.mxu0 0.0
        %1876 = vmatprep.subr.mxu0 0.0
        %1877 = vmatpush2.msra.mxu0 0.0
        %1878 = vmatprep.subr.mxu0 0.0
        %1879 = vmatpush2.msra.mxu0 0.0
        %1880 = vmatprep.subr.mxu0 0.0
        %1881 = vmatpush2.msra.mxu0 0.0
        %1882 = vmatprep.subr.mxu0 0.0
        %1883 = vmatpush2.msra.mxu0 0.0
        %1884 = vmatprep.subr.mxu0 0.0
        %1885 = vmatpush2.msra.mxu0 0.0
        %1886 = vmatprep.mubr.f32.mxu0 0.0
        %1887 = vmatmul.mubr.f32.gmra.mxu0 %v1812
        %v1888 = vpop.f32.mrf.mxu0
        %v1889 = vadd.f32 0.0, %v1888
        %v1890 = vpop.f32.mrf.mxu0
        %v1891 = vadd.f32 0.0, %v1890
        %1892 = vmatprep.mubr.f32.mxu0 0.0
        %1893 = vmatmul.mubr.f32.gmra.mxu0 %v1814
        %v1894 = vpop.f32.mrf.mxu0
        %v1895 = vadd.f32 0.0, %v1894
        %v1896 = vpop.f32.mrf.mxu0
        %v1897 = vadd.f32 0.0, %v1896
        %1898 = vdwg.mxu0
        %v1899 = vadd.f32 %v1776, %v1889
        %v1900 = vadd.f32 %v1778, %v1891
        %v1901 = vadd.f32 %v1782, %v1895
        %v1902 = vadd.f32 %v1784, %v1897
        %s1903 = scalar_lea.vmem %s5, 528
        %v1904 = vld [vmem:[%s1903] sm:$0xff]
        %v1905 = vld [vmem:[%s1903 + $0x8] sm:$0xff]
        %v1906 = vld [vmem:[%s1903 + $0x10] sm:$0xff]
        %v1907 = vld [vmem:[%s1903 + $0x18] sm:$0xff]
        %v1908 = vld [vmem:[%s1903 + $0x20] sm:$0xff]
        %v1909 = vld [vmem:[%s1903 + $0x28] sm:$0xff]
        %v1910 = vld [vmem:[%s1903 + $0x30] sm:$0xff]
        %v1911 = vld [vmem:[%s1903 + $0x38] sm:$0xff]
        %v1912 = vld [vmem:[%s1903 + $0x40] sm:$0xff]
        %v1913 = vld [vmem:[%s1903 + $0x48] sm:$0xff]
        %v1914 = vld [vmem:[%s1903 + $0x50] sm:$0xff]
        %v1915 = vld [vmem:[%s1903 + $0x58] sm:$0xff]
        %v1916 = vld [vmem:[%s1903 + $0x60] sm:$0xff]
        %v1917 = vld [vmem:[%s1903 + $0x68] sm:$0xff]
        %v1918 = vld [vmem:[%s1903 + $0x70] sm:$0xff]
        %v1919 = vld [vmem:[%s1903 + $0x78] sm:$0xff]
        %v1920 = vld [vmem:[%s1903 + $0x80] sm:$0xff]
        %v1921 = vld [vmem:[%s1903 + $0x88] sm:$0xff]
        %v1922 = vld [vmem:[%s1903 + $0x90] sm:$0xff]
        %v1923 = vld [vmem:[%s1903 + $0x98] sm:$0xff]
        %v1924 = vld [vmem:[%s1903 + $0xa0] sm:$0xf]
        %v1925 = vld [vmem:[%s1903 + $0xa8] sm:$0xf]
        %v1926 = vrot.slane %v1559, 3
        %v1927 = vrot.slane %v1560, 3
        %v1928 = vsel %vm915, %v1926, %v1927
        %v1929 = vsel %vm1611, %v1928, 0
        %v1931 = vsel %vm1611, %v1927, 0
        %v1934 = vsel %vm1053, %v1924, 0
        %v1937 = vsel %vm1053, %v1925, 0
        %1939 = vmatprep.subr.mxu0 0.0
        %1940 = vmatpush1.msra.mxu0 0.0
        %1941 = vmatprep.subr.mxu0 0.0
        %1942 = vmatpush1.msra.mxu0 0.0
        %1943 = vmatprep.subr.mxu0 0.0
        %1944 = vmatpush1.msra.mxu0 0.0
        %1945 = vmatprep.subr.mxu0 0.0
        %1946 = vmatpush1.msra.mxu0 0.0
        %1947 = vmatprep.subr.mxu0 0.0
        %1948 = vmatpush1.msra.mxu0 0.0
        %1949 = vmatprep.subr.mxu0 %v1937
        %1950 = vmatpush1.msra.mxu0 %v1934
        %1951 = vmatprep.subr.mxu0 %v1923
        %1952 = vmatpush1.msra.mxu0 %v1922
        %1953 = vmatprep.subr.mxu0 %v1921
        %1954 = vmatpush1.msra.mxu0 %v1920
        %1955 = vmatprep.subr.mxu0 %v1919
        %1956 = vmatpush1.msra.mxu0 %v1918
        %1957 = vmatprep.subr.mxu0 %v1917
        %1958 = vmatpush1.msra.mxu0 %v1916
        %1959 = vmatprep.subr.mxu0 %v1915
        %1960 = vmatpush1.msra.mxu0 %v1914
        %1961 = vmatprep.subr.mxu0 %v1913
        %1962 = vmatpush1.msra.mxu0 %v1912
        %1963 = vmatprep.subr.mxu0 %v1911
        %1964 = vmatpush1.msra.mxu0 %v1910
        %1965 = vmatprep.subr.mxu0 %v1909
        %1966 = vmatpush1.msra.mxu0 %v1908
        %1967 = vmatprep.subr.mxu0 %v1907
        %1968 = vmatpush1.msra.mxu0 %v1906
        %1969 = vmatprep.subr.mxu0 %v1905
        %1970 = vmatpush1.msra.mxu0 %v1904
        %1971 = vmatprep.subr.mxu0 0.0
        %1972 = vmatpush2.msra.mxu0 0.0
        %1973 = vmatprep.subr.mxu0 0.0
        %1974 = vmatpush2.msra.mxu0 0.0
        %1975 = vmatprep.subr.mxu0 0.0
        %1976 = vmatpush2.msra.mxu0 0.0
        %1977 = vmatprep.subr.mxu0 0.0
        %1978 = vmatpush2.msra.mxu0 0.0
        %1979 = vmatprep.subr.mxu0 0.0
        %1980 = vmatpush2.msra.mxu0 0.0
        %1981 = vmatprep.subr.mxu0 0.0
        %1982 = vmatpush2.msra.mxu0 0.0
        %1983 = vmatprep.subr.mxu0 0.0
        %1984 = vmatpush2.msra.mxu0 0.0
        %1985 = vmatprep.subr.mxu0 0.0
        %1986 = vmatpush2.msra.mxu0 0.0
        %1987 = vmatprep.subr.mxu0 0.0
        %1988 = vmatpush2.msra.mxu0 0.0
        %1989 = vmatprep.subr.mxu0 0.0
        %1990 = vmatpush2.msra.mxu0 0.0
        %1991 = vmatprep.subr.mxu0 0.0
        %1992 = vmatpush2.msra.mxu0 0.0
        %1993 = vmatprep.subr.mxu0 0.0
        %1994 = vmatpush2.msra.mxu0 0.0
        %1995 = vmatprep.subr.mxu0 0.0
        %1996 = vmatpush2.msra.mxu0 0.0
        %1997 = vmatprep.subr.mxu0 0.0
        %1998 = vmatpush2.msra.mxu0 0.0
        %1999 = vmatprep.subr.mxu0 0.0
        %2000 = vmatpush2.msra.mxu0 0.0
        %2001 = vmatprep.subr.mxu0 0.0
        %2002 = vmatpush2.msra.mxu0 0.0
        %2003 = vmatprep.mubr.f32.mxu0 0.0
        %2004 = vmatmul.mubr.f32.gmra.mxu0 %v1929
        %v2005 = vpop.f32.mrf.mxu0
        %v2006 = vadd.f32 0.0, %v2005
        %v2007 = vpop.f32.mrf.mxu0
        %v2008 = vadd.f32 0.0, %v2007
        %2009 = vmatprep.mubr.f32.mxu0 0.0
        %2010 = vmatmul.mubr.f32.gmra.mxu0 %v1931
        %v2011 = vpop.f32.mrf.mxu0
        %v2012 = vadd.f32 0.0, %v2011
        %v2013 = vpop.f32.mrf.mxu0
        %v2014 = vadd.f32 0.0, %v2013
        %2015 = vdwg.mxu0
        %v2016 = vadd.f32 %v1899, %v2006
        %v2017 = vadd.f32 %v1900, %v2008
        %v2018 = vadd.f32 %v1901, %v2012
        %v2019 = vadd.f32 %v1902, %v2014
        %s2020 = scalar_lea.vmem %s5, 704
        %v2021 = vld [vmem:[%s2020] sm:$0xff]
        %v2022 = vld [vmem:[%s2020 + $0x8] sm:$0xff]
        %v2023 = vld [vmem:[%s2020 + $0x10] sm:$0xff]
        %v2024 = vld [vmem:[%s2020 + $0x18] sm:$0xff]
        %v2025 = vld [vmem:[%s2020 + $0x20] sm:$0xff]
        %v2026 = vld [vmem:[%s2020 + $0x28] sm:$0xff]
        %v2027 = vld [vmem:[%s2020 + $0x30] sm:$0xff]
        %v2028 = vld [vmem:[%s2020 + $0x38] sm:$0xff]
        %v2029 = vld [vmem:[%s2020 + $0x40] sm:$0xff]
        %v2030 = vld [vmem:[%s2020 + $0x48] sm:$0xff]
        %v2031 = vld [vmem:[%s2020 + $0x50] sm:$0xff]
        %v2032 = vld [vmem:[%s2020 + $0x58] sm:$0xff]
        %v2033 = vld [vmem:[%s2020 + $0x60] sm:$0xff]
        %v2034 = vld [vmem:[%s2020 + $0x68] sm:$0xff]
        %v2035 = vld [vmem:[%s2020 + $0x70] sm:$0xff]
        %v2036 = vld [vmem:[%s2020 + $0x78] sm:$0xff]
        %v2037 = vld [vmem:[%s2020 + $0x80] sm:$0xff]
        %v2038 = vld [vmem:[%s2020 + $0x88] sm:$0xff]
        %v2039 = vld [vmem:[%s2020 + $0x90] sm:$0xff]
        %v2040 = vld [vmem:[%s2020 + $0x98] sm:$0xff]
        %v2041 = vld [vmem:[%s2020 + $0xa0] sm:$0xf]
        %v2042 = vld [vmem:[%s2020 + $0xa8] sm:$0xf]
        %v2043 = vrot.slane %v1559, 4
        %v2044 = vrot.slane %v1560, 4
        %v2045 = vsel %vm1053, %v2043, %v2044
        %v2046 = vsel %vm1611, %v2045, 0
        %v2048 = vsel %vm1611, %v2044, 0
        %v2051 = vsel %vm1053, %v2041, 0
        %v2054 = vsel %vm1053, %v2042, 0
        %2056 = vmatprep.subr.mxu0 0.0
        %2057 = vmatpush1.msra.mxu0 0.0
        %2058 = vmatprep.subr.mxu0 0.0
        %2059 = vmatpush1.msra.mxu0 0.0
        %2060 = vmatprep.subr.mxu0 0.0
        %2061 = vmatpush1.msra.mxu0 0.0
        %2062 = vmatprep.subr.mxu0 0.0
        %2063 = vmatpush1.msra.mxu0 0.0
        %2064 = vmatprep.subr.mxu0 0.0
        %2065 = vmatpush1.msra.mxu0 0.0
        %2066 = vmatprep.subr.mxu0 %v2054
        %2067 = vmatpush1.msra.mxu0 %v2051
        %2068 = vmatprep.subr.mxu0 %v2040
        %2069 = vmatpush1.msra.mxu0 %v2039
        %2070 = vmatprep.subr.mxu0 %v2038
        %2071 = vmatpush1.msra.mxu0 %v2037
        %2072 = vmatprep.subr.mxu0 %v2036
        %2073 = vmatpush1.msra.mxu0 %v2035
        %2074 = vmatprep.subr.mxu0 %v2034
        %2075 = vmatpush1.msra.mxu0 %v2033
        %2076 = vmatprep.subr.mxu0 %v2032
        %2077 = vmatpush1.msra.mxu0 %v2031
        %2078 = vmatprep.subr.mxu0 %v2030
        %2079 = vmatpush1.msra.mxu0 %v2029
        %2080 = vmatprep.subr.mxu0 %v2028
        %2081 = vmatpush1.msra.mxu0 %v2027
        %2082 = vmatprep.subr.mxu0 %v2026
        %2083 = vmatpush1.msra.mxu0 %v2025
        %2084 = vmatprep.subr.mxu0 %v2024
        %2085 = vmatpush1.msra.mxu0 %v2023
        %2086 = vmatprep.subr.mxu0 %v2022
        %2087 = vmatpush1.msra.mxu0 %v2021
        %2088 = vmatprep.subr.mxu0 0.0
        %2089 = vmatpush2.msra.mxu0 0.0
        %2090 = vmatprep.subr.mxu0 0.0
        %2091 = vmatpush2.msra.mxu0 0.0
        %2092 = vmatprep.subr.mxu0 0.0
        %2093 = vmatpush2.msra.mxu0 0.0
        %2094 = vmatprep.subr.mxu0 0.0
        %2095 = vmatpush2.msra.mxu0 0.0
        %2096 = vmatprep.subr.mxu0 0.0
        %2097 = vmatpush2.msra.mxu0 0.0
        %2098 = vmatprep.subr.mxu0 0.0
        %2099 = vmatpush2.msra.mxu0 0.0
        %2100 = vmatprep.subr.mxu0 0.0
        %2101 = vmatpush2.msra.mxu0 0.0
        %2102 = vmatprep.subr.mxu0 0.0
        %2103 = vmatpush2.msra.mxu0 0.0
        %2104 = vmatprep.subr.mxu0 0.0
        %2105 = vmatpush2.msra.mxu0 0.0
        %2106 = vmatprep.subr.mxu0 0.0
        %2107 = vmatpush2.msra.mxu0 0.0
        %2108 = vmatprep.subr.mxu0 0.0
        %2109 = vmatpush2.msra.mxu0 0.0
        %2110 = vmatprep.subr.mxu0 0.0
        %2111 = vmatpush2.msra.mxu0 0.0
        %2112 = vmatprep.subr.mxu0 0.0
        %2113 = vmatpush2.msra.mxu0 0.0
        %2114 = vmatprep.subr.mxu0 0.0
        %2115 = vmatpush2.msra.mxu0 0.0
        %2116 = vmatprep.subr.mxu0 0.0
        %2117 = vmatpush2.msra.mxu0 0.0
        %2118 = vmatprep.subr.mxu0 0.0
        %2119 = vmatpush2.msra.mxu0 0.0
        %2120 = vmatprep.mubr.f32.mxu0 0.0
        %2121 = vmatmul.mubr.f32.gmra.mxu0 %v2046
        %v2122 = vpop.f32.mrf.mxu0
        %v2123 = vadd.f32 0.0, %v2122
        %v2124 = vpop.f32.mrf.mxu0
        %v2125 = vadd.f32 0.0, %v2124
        %2126 = vmatprep.mubr.f32.mxu0 0.0
        %2127 = vmatmul.mubr.f32.gmra.mxu0 %v2048
        %v2128 = vpop.f32.mrf.mxu0
        %v2129 = vadd.f32 0.0, %v2128
        %v2130 = vpop.f32.mrf.mxu0
        %v2131 = vadd.f32 0.0, %v2130
        %2132 = vdwg.mxu0
        %v2133 = vadd.f32 %v2016, %v2123
        %v2134 = vadd.f32 %v2017, %v2125
        %v2135 = vadd.f32 %v2018, %v2129
        %v2136 = vadd.f32 %v2019, %v2131
        %v2137 = vld [vmem:[%s7] sm:$0x1f]
        %vm2138 = vcmask 80896
        %v2140 = vsel %vm2138, %v2137, 0
        %vm2142 = vcmask 1041408
        %v2144 = vsel %vm2142, %v2135, 0
        %v2147 = vsel %vm2142, %v2136, 0
        %2149 = vmatprep.subr.mxu0 0.0
        %2150 = vmatpush1.msra.mxu0 0.0
        %2151 = vmatprep.subr.mxu0 0.0
        %2152 = vmatpush1.msra.mxu0 0.0
        %2153 = vmatprep.subr.mxu0 0.0
        %2154 = vmatpush1.msra.mxu0 0.0
        %2155 = vmatprep.subr.mxu0 0.0
        %2156 = vmatpush1.msra.mxu0 0.0
        %2157 = vmatprep.subr.mxu0 0.0
        %2158 = vmatpush1.msra.mxu0 0.0
        %2159 = vmatprep.subr.mxu0 0.0
        %2160 = vmatpush1.msra.mxu0 0.0
        %2161 = vmatprep.subr.mxu0 0.0
        %2162 = vmatpush1.msra.mxu0 0.0
        %2163 = vmatprep.subr.mxu0 0.0
        %2164 = vmatpush1.msra.mxu0 0.0
        %2165 = vmatprep.subr.mxu0 0.0
        %2166 = vmatpush1.msra.mxu0 0.0
        %2167 = vmatprep.subr.mxu0 0.0
        %2168 = vmatpush1.msra.mxu0 0.0
        %2169 = vmatprep.subr.mxu0 0.0
        %2170 = vmatpush1.msra.mxu0 0.0
        %2171 = vmatprep.subr.mxu0 0.0
        %2172 = vmatpush1.msra.mxu0 0.0
        %2173 = vmatprep.subr.mxu0 0.0
        %2174 = vmatpush1.msra.mxu0 0.0
        %2175 = vmatprep.subr.mxu0 0.0
        %2176 = vmatpush1.msra.mxu0 0.0
        %2177 = vmatprep.subr.mxu0 %v2147
        %2178 = vmatpush1.msra.mxu0 %v2144
        %2179 = vmatprep.subr.mxu0 %v2134
        %2180 = vmatpush1.msra.mxu0 %v2133
        %2181 = vmatprep.subr.mxu0 0.0
        %2182 = vmatpush2.msra.mxu0 0.0
        %2183 = vmatprep.subr.mxu0 0.0
        %2184 = vmatpush2.msra.mxu0 0.0
        %2185 = vmatprep.subr.mxu0 0.0
        %2186 = vmatpush2.msra.mxu0 0.0
        %2187 = vmatprep.subr.mxu0 0.0
        %2188 = vmatpush2.msra.mxu0 0.0
        %2189 = vmatprep.subr.mxu0 0.0
        %2190 = vmatpush2.msra.mxu0 0.0
        %2191 = vmatprep.subr.mxu0 0.0
        %2192 = vmatpush2.msra.mxu0 0.0
        %2193 = vmatprep.subr.mxu0 0.0
        %2194 = vmatpush2.msra.mxu0 0.0
        %2195 = vmatprep.subr.mxu0 0.0
        %2196 = vmatpush2.msra.mxu0 0.0
        %2197 = vmatprep.subr.mxu0 0.0
        %2198 = vmatpush2.msra.mxu0 0.0
        %2199 = vmatprep.subr.mxu0 0.0
        %2200 = vmatpush2.msra.mxu0 0.0
        %2201 = vmatprep.subr.mxu0 0.0
        %2202 = vmatpush2.msra.mxu0 0.0
        %2203 = vmatprep.subr.mxu0 0.0
        %2204 = vmatpush2.msra.mxu0 0.0
        %2205 = vmatprep.subr.mxu0 0.0
        %2206 = vmatpush2.msra.mxu0 0.0
        %2207 = vmatprep.subr.mxu0 0.0
        %2208 = vmatpush2.msra.mxu0 0.0
        %2209 = vmatprep.subr.mxu0 0.0
        %2210 = vmatpush2.msra.mxu0 0.0
        %2211 = vmatprep.subr.mxu0 0.0
        %2212 = vmatpush2.msra.mxu0 0.0
        %2213 = vmatprep.mubr.f32.mxu0 0.0
        %2214 = vmatmul.mubr.f32.gmra.mxu0 %v2140
        %v2215 = vpop.f32.mrf.mxu0
        %v2216 = vadd.f32 0.0, %v2215
        %v2217 = vpop.f32.mrf.mxu0
        %v2218 = vadd.f32 0.0, %v2217
        %2219 = vdwg.mxu0
        %s2220 = scalar_lea.vmem %s7, 8
        %v2221 = vld [vmem:[%s2220] sm:$0x1f]
        %v2223 = vsel %vm2138, %v2221, 0
        %2225 = vmatprep.subr.mxu0 0.0
        %2226 = vmatpush1.msra.mxu0 0.0
        %2227 = vmatprep.subr.mxu0 0.0
        %2228 = vmatpush1.msra.mxu0 0.0
        %2229 = vmatprep.subr.mxu0 0.0
        %2230 = vmatpush1.msra.mxu0 0.0
        %2231 = vmatprep.subr.mxu0 0.0
        %2232 = vmatpush1.msra.mxu0 0.0
        %2233 = vmatprep.subr.mxu0 0.0
        %2234 = vmatpush1.msra.mxu0 0.0
        %2235 = vmatprep.subr.mxu0 0.0
        %2236 = vmatpush1.msra.mxu0 0.0
        %2237 = vmatprep.subr.mxu0 0.0
        %2238 = vmatpush1.msra.mxu0 0.0
        %2239 = vmatprep.subr.mxu0 0.0
        %2240 = vmatpush1.msra.mxu0 0.0
        %2241 = vmatprep.subr.mxu0 0.0
        %2242 = vmatpush1.msra.mxu0 0.0
        %2243 = vmatprep.subr.mxu0 0.0
        %2244 = vmatpush1.msra.mxu0 0.0
        %2245 = vmatprep.subr.mxu0 0.0
        %2246 = vmatpush1.msra.mxu0 0.0
        %2247 = vmatprep.subr.mxu0 0.0
        %2248 = vmatpush1.msra.mxu0 0.0
        %2249 = vmatprep.subr.mxu0 0.0
        %2250 = vmatpush1.msra.mxu0 0.0
        %2251 = vmatprep.subr.mxu0 0.0
        %2252 = vmatpush1.msra.mxu0 0.0
        %2253 = vmatprep.subr.mxu0 %v2147
        %2254 = vmatpush1.msra.mxu0 %v2144
        %2255 = vmatprep.subr.mxu0 %v2134
        %2256 = vmatpush1.msra.mxu0 %v2133
        %2257 = vmatprep.subr.mxu0 0.0
        %2258 = vmatpush2.msra.mxu0 0.0
        %2259 = vmatprep.subr.mxu0 0.0
        %2260 = vmatpush2.msra.mxu0 0.0
        %2261 = vmatprep.subr.mxu0 0.0
        %2262 = vmatpush2.msra.mxu0 0.0
        %2263 = vmatprep.subr.mxu0 0.0
        %2264 = vmatpush2.msra.mxu0 0.0
        %2265 = vmatprep.subr.mxu0 0.0
        %2266 = vmatpush2.msra.mxu0 0.0
        %2267 = vmatprep.subr.mxu0 0.0
        %2268 = vmatpush2.msra.mxu0 0.0
        %2269 = vmatprep.subr.mxu0 0.0
        %2270 = vmatpush2.msra.mxu0 0.0
        %2271 = vmatprep.subr.mxu0 0.0
        %2272 = vmatpush2.msra.mxu0 0.0
        %2273 = vmatprep.subr.mxu0 0.0
        %2274 = vmatpush2.msra.mxu0 0.0
        %2275 = vmatprep.subr.mxu0 0.0
        %2276 = vmatpush2.msra.mxu0 0.0
        %2277 = vmatprep.subr.mxu0 0.0
        %2278 = vmatpush2.msra.mxu0 0.0
        %2279 = vmatprep.subr.mxu0 0.0
        %2280 = vmatpush2.msra.mxu0 0.0
        %2281 = vmatprep.subr.mxu0 0.0
        %2282 = vmatpush2.msra.mxu0 0.0
        %2283 = vmatprep.subr.mxu0 0.0
        %2284 = vmatpush2.msra.mxu0 0.0
        %2285 = vmatprep.subr.mxu0 0.0
        %2286 = vmatpush2.msra.mxu0 0.0
        %2287 = vmatprep.subr.mxu0 0.0
        %2288 = vmatpush2.msra.mxu0 0.0
        %2289 = vmatprep.mubr.f32.mxu0 0.0
        %2290 = vmatmul.mubr.f32.gmra.mxu0 %v2223
        %v2291 = vpop.f32.mrf.mxu0
        %v2292 = vadd.f32 0.0, %v2291
        %v2293 = vpop.f32.mrf.mxu0
        %v2294 = vadd.f32 0.0, %v2293
        %2295 = vdwg.mxu0
        %v2296 = vmax.f32 %v2216, %v2292
        %v2297 = vmax.f32 %v2218, %v2294
        %v2298 = vld [vmem:[%s8] sm:$0xff]
        %v2299 = vld [vmem:[%s8 + $0x8] sm:$0xff]
        %v2300 = vld [vmem:[%s8 + $0x10] sm:$0xff]
        %v2301 = vld [vmem:[%s8 + $0x18] sm:$0xff]
        %v2302 = vld [vmem:[%s8 + $0x20] sm:$0xff]
        %v2303 = vld [vmem:[%s8 + $0x28] sm:$0xff]
        %v2304 = vld [vmem:[%s8 + $0x30] sm:$0xff]
        %v2305 = vld [vmem:[%s8 + $0x38] sm:$0xff]
        %v2306 = vld [vmem:[%s8 + $0x40] sm:$0xff]
        %v2307 = vld [vmem:[%s8 + $0x48] sm:$0xff]
        %v2308 = vld [vmem:[%s8 + $0x50] sm:$0xff]
        %v2309 = vld [vmem:[%s8 + $0x58] sm:$0xff]
        %v2310 = vld [vmem:[%s8 + $0x60] sm:$0xff]
        %v2311 = vld [vmem:[%s8 + $0x68] sm:$0xff]
        %v2312 = vld [vmem:[%s8 + $0x70] sm:$0xff]
        %v2313 = vld [vmem:[%s8 + $0x78] sm:$0xff]
        %v2314 = vld [vmem:[%s8 + $0x80] sm:$0xff]
        %v2315 = vld [vmem:[%s8 + $0x88] sm:$0xff]
        %v2316 = vld [vmem:[%s8 + $0x90] sm:$0xff]
        %v2317 = vld [vmem:[%s8 + $0x98] sm:$0xff]
        %vm2318 = vcmask 261120
        %v2320 = vsel %vm2318, %v2297, 0
        %2322 = vmatprep.subr.mxu0 0.0
        %2323 = vmatpush1.msra.mxu0 %v2313
        %2324 = vmatprep.subr.mxu0 0.0
        %2325 = vmatpush1.msra.mxu0 %v2312
        %2326 = vmatprep.subr.mxu0 0.0
        %2327 = vmatpush1.msra.mxu0 %v2311
        %2328 = vmatprep.subr.mxu0 0.0
        %2329 = vmatpush1.msra.mxu0 %v2310
        %2330 = vmatprep.subr.mxu0 0.0
        %2331 = vmatpush1.msra.mxu0 %v2309
        %2332 = vmatprep.subr.mxu0 0.0
        %2333 = vmatpush1.msra.mxu0 %v2308
        %2334 = vmatprep.subr.mxu0 0.0
        %2335 = vmatpush1.msra.mxu0 %v2307
        %2336 = vmatprep.subr.mxu0 0.0
        %2337 = vmatpush1.msra.mxu0 %v2306
        %2338 = vmatprep.subr.mxu0 0.0
        %2339 = vmatpush1.msra.mxu0 %v2305
        %2340 = vmatprep.subr.mxu0 0.0
        %2341 = vmatpush1.msra.mxu0 %v2304
        %2342 = vmatprep.subr.mxu0 0.0
        %2343 = vmatpush1.msra.mxu0 %v2303
        %2344 = vmatprep.subr.mxu0 0.0
        %2345 = vmatpush1.msra.mxu0 %v2302
        %2346 = vmatprep.subr.mxu0 0.0
        %2347 = vmatpush1.msra.mxu0 %v2301
        %2348 = vmatprep.subr.mxu0 0.0
        %2349 = vmatpush1.msra.mxu0 %v2300
        %2350 = vmatprep.subr.mxu0 0.0
        %2351 = vmatpush1.msra.mxu0 %v2299
        %2352 = vmatprep.subr.mxu0 0.0
        %2353 = vmatpush1.msra.mxu0 %v2298
        %2354 = vmatprep.subr.mxu0 0.0
        %2355 = vmatpush2.msra.mxu0 0.0
        %2356 = vmatprep.subr.mxu0 0.0
        %2357 = vmatpush2.msra.mxu0 0.0
        %2358 = vmatprep.subr.mxu0 0.0
        %2359 = vmatpush2.msra.mxu0 0.0
        %2360 = vmatprep.subr.mxu0 0.0
        %2361 = vmatpush2.msra.mxu0 0.0
        %2362 = vmatprep.subr.mxu0 0.0
        %2363 = vmatpush2.msra.mxu0 0.0
        %2364 = vmatprep.subr.mxu0 0.0
        %2365 = vmatpush2.msra.mxu0 0.0
        %2366 = vmatprep.subr.mxu0 0.0
        %2367 = vmatpush2.msra.mxu0 0.0
        %2368 = vmatprep.subr.mxu0 0.0
        %2369 = vmatpush2.msra.mxu0 0.0
        %2370 = vmatprep.subr.mxu0 0.0
        %2371 = vmatpush2.msra.mxu0 0.0
        %2372 = vmatprep.subr.mxu0 0.0
        %2373 = vmatpush2.msra.mxu0 0.0
        %2374 = vmatprep.subr.mxu0 0.0
        %2375 = vmatpush2.msra.mxu0 0.0
        %2376 = vmatprep.subr.mxu0 0.0
        %2377 = vmatpush2.msra.mxu0 0.0
        %2378 = vmatprep.subr.mxu0 0.0
        %2379 = vmatpush2.msra.mxu0 %v2317
        %2380 = vmatprep.subr.mxu0 0.0
        %2381 = vmatpush2.msra.mxu0 %v2316
        %2382 = vmatprep.subr.mxu0 0.0
        %2383 = vmatpush2.msra.mxu0 %v2315
        %2384 = vmatprep.subr.mxu0 0.0
        %2385 = vmatpush2.msra.mxu0 %v2314
        %2386 = vmatprep.mubr.f32.mxu0 %v2320
        %2387 = vmatmul.mubr.f32.gmra.mxu0 %v2296
        %v2388 = vpop.f32.mrf.mxu0
        %v2389 = vadd.f32 0.0, %v2388
        %v2390 = vpop.f32.mrf.mxu0
        %2391 = vdwg.mxu0
        %s2392 = scalar_lea.vmem %s8, 160
        %v2393 = vld [vmem:[%s2392] sm:$0xff]
        %v2394 = vld [vmem:[%s2392 + $0x8] sm:$0xff]
        %v2395 = vld [vmem:[%s2392 + $0x10] sm:$0xff]
        %v2396 = vld [vmem:[%s2392 + $0x18] sm:$0xff]
        %v2397 = vld [vmem:[%s2392 + $0x20] sm:$0xff]
        %v2398 = vld [vmem:[%s2392 + $0x28] sm:$0xff]
        %v2399 = vld [vmem:[%s2392 + $0x30] sm:$0xff]
        %v2400 = vld [vmem:[%s2392 + $0x38] sm:$0xff]
        %v2401 = vld [vmem:[%s2392 + $0x40] sm:$0xff]
        %v2402 = vld [vmem:[%s2392 + $0x48] sm:$0xff]
        %v2403 = vld [vmem:[%s2392 + $0x50] sm:$0xff]
        %v2404 = vld [vmem:[%s2392 + $0x58] sm:$0xff]
        %v2405 = vld [vmem:[%s2392 + $0x60] sm:$0xff]
        %v2406 = vld [vmem:[%s2392 + $0x68] sm:$0xff]
        %v2407 = vld [vmem:[%s2392 + $0x70] sm:$0xff]
        %v2408 = vld [vmem:[%s2392 + $0x78] sm:$0xff]
        %v2409 = vld [vmem:[%s2392 + $0x80] sm:$0xff]
        %v2410 = vld [vmem:[%s2392 + $0x88] sm:$0xff]
        %v2411 = vld [vmem:[%s2392 + $0x90] sm:$0xff]
        %v2412 = vld [vmem:[%s2392 + $0x98] sm:$0xff]
        %2413 = vmatprep.subr.mxu0 0.0
        %2414 = vmatpush1.msra.mxu0 %v2408
        %2415 = vmatprep.subr.mxu0 0.0
        %2416 = vmatpush1.msra.mxu0 %v2407
        %2417 = vmatprep.subr.mxu0 0.0
        %2418 = vmatpush1.msra.mxu0 %v2406
        %2419 = vmatprep.subr.mxu0 0.0
        %2420 = vmatpush1.msra.mxu0 %v2405
        %2421 = vmatprep.subr.mxu0 0.0
        %2422 = vmatpush1.msra.mxu0 %v2404
        %2423 = vmatprep.subr.mxu0 0.0
        %2424 = vmatpush1.msra.mxu0 %v2403
        %2425 = vmatprep.subr.mxu0 0.0
        %2426 = vmatpush1.msra.mxu0 %v2402
        %2427 = vmatprep.subr.mxu0 0.0
        %2428 = vmatpush1.msra.mxu0 %v2401
        %2429 = vmatprep.subr.mxu0 0.0
        %2430 = vmatpush1.msra.mxu0 %v2400
        %2431 = vmatprep.subr.mxu0 0.0
        %2432 = vmatpush1.msra.mxu0 %v2399
        %2433 = vmatprep.subr.mxu0 0.0
        %2434 = vmatpush1.msra.mxu0 %v2398
        %2435 = vmatprep.subr.mxu0 0.0
        %2436 = vmatpush1.msra.mxu0 %v2397
        %2437 = vmatprep.subr.mxu0 0.0
        %2438 = vmatpush1.msra.mxu0 %v2396
        %2439 = vmatprep.subr.mxu0 0.0
        %2440 = vmatpush1.msra.mxu0 %v2395
        %2441 = vmatprep.subr.mxu0 0.0
        %2442 = vmatpush1.msra.mxu0 %v2394
        %2443 = vmatprep.subr.mxu0 0.0
        %2444 = vmatpush1.msra.mxu0 %v2393
        %2445 = vmatprep.subr.mxu0 0.0
        %2446 = vmatpush2.msra.mxu0 0.0
        %2447 = vmatprep.subr.mxu0 0.0
        %2448 = vmatpush2.msra.mxu0 0.0
        %2449 = vmatprep.subr.mxu0 0.0
        %2450 = vmatpush2.msra.mxu0 0.0
        %2451 = vmatprep.subr.mxu0 0.0
        %2452 = vmatpush2.msra.mxu0 0.0
        %2453 = vmatprep.subr.mxu0 0.0
        %2454 = vmatpush2.msra.mxu0 0.0
        %2455 = vmatprep.subr.mxu0 0.0
        %2456 = vmatpush2.msra.mxu0 0.0
        %2457 = vmatprep.subr.mxu0 0.0
        %2458 = vmatpush2.msra.mxu0 0.0
        %2459 = vmatprep.subr.mxu0 0.0
        %2460 = vmatpush2.msra.mxu0 0.0
        %2461 = vmatprep.subr.mxu0 0.0
        %2462 = vmatpush2.msra.mxu0 0.0
        %2463 = vmatprep.subr.mxu0 0.0
        %2464 = vmatpush2.msra.mxu0 0.0
        %2465 = vmatprep.subr.mxu0 0.0
        %2466 = vmatpush2.msra.mxu0 0.0
        %2467 = vmatprep.subr.mxu0 0.0
        %2468 = vmatpush2.msra.mxu0 0.0
        %2469 = vmatprep.subr.mxu0 0.0
        %2470 = vmatpush2.msra.mxu0 %v2412
        %2471 = vmatprep.subr.mxu0 0.0
        %2472 = vmatpush2.msra.mxu0 %v2411
        %2473 = vmatprep.subr.mxu0 0.0
        %2474 = vmatpush2.msra.mxu0 %v2410
        %2475 = vmatprep.subr.mxu0 0.0
        %2476 = vmatpush2.msra.mxu0 %v2409
        %2477 = vmatprep.mubr.f32.mxu0 %v2320
        %2478 = vmatmul.mubr.f32.gmra.mxu0 %v2296
        %v2479 = vpop.f32.mrf.mxu0
        %v2480 = vadd.f32 0.0, %v2479
        %v2481 = vpop.f32.mrf.mxu0
        %2482 = vdwg.mxu0
        %v2483 = vmax.f32 %v2389, %v2480
        %v2484 = vld [vmem:[%s6] sm:$0x1]
        %v2486 = vlaneseq
        %v2487 = vshrl.u32 %v2486, 7
        %v2488 = vsub.s32 0, %v2487
        %v2489 = vrot.slane %v2484, %v2488
        %v2491 = vadd.f32 %v2483, %v2489
        %v2492 = vmax.f32 %v2491, 0.0
        %v2493 = vld [vmem:[%s9] sm:$0xff]
        %v2494 = vld [vmem:[%s9 + $0x8] sm:$0xff]
        %v2495 = vld [vmem:[%s9 + $0x10] sm:$0xff]
        %v2496 = vld [vmem:[%s9 + $0x18] sm:$0xff]
        %v2497 = vld [vmem:[%s9 + $0x20] sm:$0xff]
        %v2498 = vld [vmem:[%s9 + $0x28] sm:$0xff]
        %v2499 = vld [vmem:[%s9 + $0x30] sm:$0xff]
        %v2500 = vld [vmem:[%s9 + $0x38] sm:$0xff]
        %v2501 = vld [vmem:[%s9 + $0x40] sm:$0xff]
        %v2502 = vld [vmem:[%s9 + $0x48] sm:$0xff]
        %v2503 = vld [vmem:[%s9 + $0x50] sm:$0xff]
        %v2504 = vld [vmem:[%s9 + $0x58] sm:$0xff]
        %v2505 = vld [vmem:[%s9 + $0x60] sm:$0xff]
        %v2506 = vld [vmem:[%s9 + $0x68] sm:$0xff]
        %v2507 = vld [vmem:[%s9 + $0x70] sm:$0xff]
        %v2508 = vld [vmem:[%s9 + $0x78] sm:$0xff]
        %v2509 = vld [vmem:[%s9 + $0x80] sm:$0xff]
        %v2510 = vld [vmem:[%s9 + $0x88] sm:$0xff]
        %v2511 = vld [vmem:[%s9 + $0x90] sm:$0xff]
        %v2512 = vld [vmem:[%s9 + $0x98] sm:$0xff]
        %v2514 = vrot.slane %v2492, 1
        %vm2515 = vcmask 654336
        %v2516 = vsel %vm2515, %v2514, 0
        %2518 = vmatprep.subr.mxu0 0.0
        %2519 = vmatpush1.msra.mxu0 0.0
        %2520 = vmatprep.subr.mxu0 0.0
        %2521 = vmatpush1.msra.mxu0 0.0
        %2522 = vmatprep.subr.mxu0 0.0
        %2523 = vmatpush1.msra.mxu0 0.0
        %2524 = vmatprep.subr.mxu0 0.0
        %2525 = vmatpush1.msra.mxu0 0.0
        %2526 = vmatprep.subr.mxu0 0.0
        %2527 = vmatpush1.msra.mxu0 0.0
        %2528 = vmatprep.subr.mxu0 0.0
        %2529 = vmatpush1.msra.mxu0 0.0
        %2530 = vmatprep.subr.mxu0 0.0
        %2531 = vmatpush1.msra.mxu0 %v2512
        %2532 = vmatprep.subr.mxu0 0.0
        %2533 = vmatpush1.msra.mxu0 %v2511
        %2534 = vmatprep.subr.mxu0 0.0
        %2535 = vmatpush1.msra.mxu0 %v2510
        %2536 = vmatprep.subr.mxu0 0.0
        %2537 = vmatpush1.msra.mxu0 %v2509
        %2538 = vmatprep.subr.mxu0 0.0
        %2539 = vmatpush1.msra.mxu0 %v2508
        %2540 = vmatprep.subr.mxu0 0.0
        %2541 = vmatpush1.msra.mxu0 %v2507
        %2542 = vmatprep.subr.mxu0 0.0
        %2543 = vmatpush1.msra.mxu0 %v2506
        %2544 = vmatprep.subr.mxu0 0.0
        %2545 = vmatpush1.msra.mxu0 %v2505
        %2546 = vmatprep.subr.mxu0 0.0
        %2547 = vmatpush1.msra.mxu0 %v2504
        %2548 = vmatprep.subr.mxu0 0.0
        %2549 = vmatpush1.msra.mxu0 %v2503
        %2550 = vmatprep.subr.mxu0 0.0
        %2551 = vmatpush2.msra.mxu0 0.0
        %2552 = vmatprep.subr.mxu0 0.0
        %2553 = vmatpush2.msra.mxu0 0.0
        %2554 = vmatprep.subr.mxu0 0.0
        %2555 = vmatpush2.msra.mxu0 0.0
        %2556 = vmatprep.subr.mxu0 0.0
        %2557 = vmatpush2.msra.mxu0 0.0
        %2558 = vmatprep.subr.mxu0 0.0
        %2559 = vmatpush2.msra.mxu0 0.0
        %2560 = vmatprep.subr.mxu0 0.0
        %2561 = vmatpush2.msra.mxu0 0.0
        %2562 = vmatprep.subr.mxu0 0.0
        %2563 = vmatpush2.msra.mxu0 0.0
        %2564 = vmatprep.subr.mxu0 0.0
        %2565 = vmatpush2.msra.mxu0 0.0
        %2566 = vmatprep.subr.mxu0 0.0
        %2567 = vmatpush2.msra.mxu0 0.0
        %2568 = vmatprep.subr.mxu0 0.0
        %2569 = vmatpush2.msra.mxu0 0.0
        %2570 = vmatprep.subr.mxu0 0.0
        %2571 = vmatpush2.msra.mxu0 0.0
        %2572 = vmatprep.subr.mxu0 0.0
        %2573 = vmatpush2.msra.mxu0 0.0
        %2574 = vmatprep.subr.mxu0 0.0
        %2575 = vmatpush2.msra.mxu0 0.0
        %2576 = vmatprep.subr.mxu0 0.0
        %2577 = vmatpush2.msra.mxu0 0.0
        %2578 = vmatprep.subr.mxu0 0.0
        %2579 = vmatpush2.msra.mxu0 0.0
        %2580 = vmatprep.subr.mxu0 0.0
        %2581 = vmatpush2.msra.mxu0 0.0
        %2582 = vmatprep.mubr.f32.mxu0 0.0
        %2583 = vmatmul.mubr.f32.gmra.mxu0 %v2516
        %v2584 = vpop.f32.mrf.mxu0
        %v2585 = vadd.f32 0.0, %v2584
        %v2586 = vpop.f32.mrf.mxu0
        %2587 = vdwg.mxu0
        %v2588 = vsel %vm2515, %v2492, 0
        %2590 = vmatprep.subr.mxu0 0.0
        %2591 = vmatpush1.msra.mxu0 0.0
        %2592 = vmatprep.subr.mxu0 0.0
        %2593 = vmatpush1.msra.mxu0 0.0
        %2594 = vmatprep.subr.mxu0 0.0
        %2595 = vmatpush1.msra.mxu0 0.0
        %2596 = vmatprep.subr.mxu0 0.0
        %2597 = vmatpush1.msra.mxu0 0.0
        %2598 = vmatprep.subr.mxu0 0.0
        %2599 = vmatpush1.msra.mxu0 0.0
        %2600 = vmatprep.subr.mxu0 0.0
        %2601 = vmatpush1.msra.mxu0 0.0
        %2602 = vmatprep.subr.mxu0 0.0
        %2603 = vmatpush1.msra.mxu0 %v2502
        %2604 = vmatprep.subr.mxu0 0.0
        %2605 = vmatpush1.msra.mxu0 %v2501
        %2606 = vmatprep.subr.mxu0 0.0
        %2607 = vmatpush1.msra.mxu0 %v2500
        %2608 = vmatprep.subr.mxu0 0.0
        %2609 = vmatpush1.msra.mxu0 %v2499
        %2610 = vmatprep.subr.mxu0 0.0
        %2611 = vmatpush1.msra.mxu0 %v2498
        %2612 = vmatprep.subr.mxu0 0.0
        %2613 = vmatpush1.msra.mxu0 %v2497
        %2614 = vmatprep.subr.mxu0 0.0
        %2615 = vmatpush1.msra.mxu0 %v2496
        %2616 = vmatprep.subr.mxu0 0.0
        %2617 = vmatpush1.msra.mxu0 %v2495
        %2618 = vmatprep.subr.mxu0 0.0
        %2619 = vmatpush1.msra.mxu0 %v2494
        %2620 = vmatprep.subr.mxu0 0.0
        %2621 = vmatpush1.msra.mxu0 %v2493
        %2622 = vmatprep.subr.mxu0 0.0
        %2623 = vmatpush2.msra.mxu0 0.0
        %2624 = vmatprep.subr.mxu0 0.0
        %2625 = vmatpush2.msra.mxu0 0.0
        %2626 = vmatprep.subr.mxu0 0.0
        %2627 = vmatpush2.msra.mxu0 0.0
        %2628 = vmatprep.subr.mxu0 0.0
        %2629 = vmatpush2.msra.mxu0 0.0
        %2630 = vmatprep.subr.mxu0 0.0
        %2631 = vmatpush2.msra.mxu0 0.0
        %2632 = vmatprep.subr.mxu0 0.0
        %2633 = vmatpush2.msra.mxu0 0.0
        %2634 = vmatprep.subr.mxu0 0.0
        %2635 = vmatpush2.msra.mxu0 0.0
        %2636 = vmatprep.subr.mxu0 0.0
        %2637 = vmatpush2.msra.mxu0 0.0
        %2638 = vmatprep.subr.mxu0 0.0
        %2639 = vmatpush2.msra.mxu0 0.0
        %2640 = vmatprep.subr.mxu0 0.0
        %2641 = vmatpush2.msra.mxu0 0.0
        %2642 = vmatprep.subr.mxu0 0.0
        %2643 = vmatpush2.msra.mxu0 0.0
        %2644 = vmatprep.subr.mxu0 0.0
        %2645 = vmatpush2.msra.mxu0 0.0
        %2646 = vmatprep.subr.mxu0 0.0
        %2647 = vmatpush2.msra.mxu0 0.0
        %2648 = vmatprep.subr.mxu0 0.0
        %2649 = vmatpush2.msra.mxu0 0.0
        %2650 = vmatprep.subr.mxu0 0.0
        %2651 = vmatpush2.msra.mxu0 0.0
        %2652 = vmatprep.subr.mxu0 0.0
        %2653 = vmatpush2.msra.mxu0 0.0
        %2654 = vmatprep.mubr.f32.mxu0 0.0
        %2655 = vmatmul.mubr.f32.gmra.mxu0 %v2588
        %v2656 = vpop.f32.mrf.mxu0
        %v2657 = vadd.f32 %v2585, %v2656
        %v2658 = vpop.f32.mrf.mxu0
        %2659 = vdwg.mxu0
        %v2660 = vld [vmem:[%s9 + $0xa0] sm:$0xff]
        %v2661 = vld [vmem:[%s9 + $0xa8] sm:$0xff]
        %v2662 = vld [vmem:[%s9 + $0xb0] sm:$0xff]
        %v2663 = vld [vmem:[%s9 + $0xb8] sm:$0xff]
        %v2664 = vld [vmem:[%s9 + $0xc0] sm:$0xff]
        %v2665 = vld [vmem:[%s9 + $0xc8] sm:$0xff]
        %v2666 = vld [vmem:[%s9 + $0xd0] sm:$0xff]
        %v2667 = vld [vmem:[%s9 + $0xd8] sm:$0xff]
        %v2668 = vld [vmem:[%s9 + $0xe0] sm:$0xff]
        %v2669 = vld [vmem:[%s9 + $0xe8] sm:$0xff]
        %v2670 = vrot.slane %v2492, 2
        %v2671 = vsel %vm2515, %v2670, 0
        %2673 = vmatprep.subr.mxu0 0.0
        %2674 = vmatpush1.msra.mxu0 0.0
        %2675 = vmatprep.subr.mxu0 0.0
        %2676 = vmatpush1.msra.mxu0 0.0
        %2677 = vmatprep.subr.mxu0 0.0
        %2678 = vmatpush1.msra.mxu0 0.0
        %2679 = vmatprep.subr.mxu0 0.0
        %2680 = vmatpush1.msra.mxu0 0.0
        %2681 = vmatprep.subr.mxu0 0.0
        %2682 = vmatpush1.msra.mxu0 0.0
        %2683 = vmatprep.subr.mxu0 0.0
        %2684 = vmatpush1.msra.mxu0 0.0
        %2685 = vmatprep.subr.mxu0 0.0
        %2686 = vmatpush1.msra.mxu0 %v2669
        %2687 = vmatprep.subr.mxu0 0.0
        %2688 = vmatpush1.msra.mxu0 %v2668
        %2689 = vmatprep.subr.mxu0 0.0
        %2690 = vmatpush1.msra.mxu0 %v2667
        %2691 = vmatprep.subr.mxu0 0.0
        %2692 = vmatpush1.msra.mxu0 %v2666
        %2693 = vmatprep.subr.mxu0 0.0
        %2694 = vmatpush1.msra.mxu0 %v2665
        %2695 = vmatprep.subr.mxu0 0.0
        %2696 = vmatpush1.msra.mxu0 %v2664
        %2697 = vmatprep.subr.mxu0 0.0
        %2698 = vmatpush1.msra.mxu0 %v2663
        %2699 = vmatprep.subr.mxu0 0.0
        %2700 = vmatpush1.msra.mxu0 %v2662
        %2701 = vmatprep.subr.mxu0 0.0
        %2702 = vmatpush1.msra.mxu0 %v2661
        %2703 = vmatprep.subr.mxu0 0.0
        %2704 = vmatpush1.msra.mxu0 %v2660
        %2705 = vmatprep.subr.mxu0 0.0
        %2706 = vmatpush2.msra.mxu0 0.0
        %2707 = vmatprep.subr.mxu0 0.0
        %2708 = vmatpush2.msra.mxu0 0.0
        %2709 = vmatprep.subr.mxu0 0.0
        %2710 = vmatpush2.msra.mxu0 0.0
        %2711 = vmatprep.subr.mxu0 0.0
        %2712 = vmatpush2.msra.mxu0 0.0
        %2713 = vmatprep.subr.mxu0 0.0
        %2714 = vmatpush2.msra.mxu0 0.0
        %2715 = vmatprep.subr.mxu0 0.0
        %2716 = vmatpush2.msra.mxu0 0.0
        %2717 = vmatprep.subr.mxu0 0.0
        %2718 = vmatpush2.msra.mxu0 0.0
        %2719 = vmatprep.subr.mxu0 0.0
        %2720 = vmatpush2.msra.mxu0 0.0
        %2721 = vmatprep.subr.mxu0 0.0
        %2722 = vmatpush2.msra.mxu0 0.0
        %2723 = vmatprep.subr.mxu0 0.0
        %2724 = vmatpush2.msra.mxu0 0.0
        %2725 = vmatprep.subr.mxu0 0.0
        %2726 = vmatpush2.msra.mxu0 0.0
        %2727 = vmatprep.subr.mxu0 0.0
        %2728 = vmatpush2.msra.mxu0 0.0
        %2729 = vmatprep.subr.mxu0 0.0
        %2730 = vmatpush2.msra.mxu0 0.0
        %2731 = vmatprep.subr.mxu0 0.0
        %2732 = vmatpush2.msra.mxu0 0.0
        %2733 = vmatprep.subr.mxu0 0.0
        %2734 = vmatpush2.msra.mxu0 0.0
        %2735 = vmatprep.subr.mxu0 0.0
        %2736 = vmatpush2.msra.mxu0 0.0
        %2737 = vmatprep.mubr.f32.mxu0 0.0
        %2738 = vmatmul.mubr.f32.gmra.mxu0 %v2671
        %v2739 = vpop.f32.mrf.mxu0
        %v2740 = vadd.f32 0.0, %v2739
        %v2741 = vpop.f32.mrf.mxu0
        %2742 = vdwg.mxu0
        %v2743 = vadd.f32 %v2657, %v2740
        %v2744 = vld [vmem:[%s9 + $0xf0] sm:$0xff]
        %v2745 = vld [vmem:[%s9 + $0xf8] sm:$0xff]
        %v2746 = vld [vmem:[%s9 + $0x100] sm:$0xff]
        %v2747 = vld [vmem:[%s9 + $0x108] sm:$0xff]
        %v2748 = vld [vmem:[%s9 + $0x110] sm:$0xff]
        %v2749 = vld [vmem:[%s9 + $0x118] sm:$0xff]
        %v2750 = vld [vmem:[%s9 + $0x120] sm:$0xff]
        %v2751 = vld [vmem:[%s9 + $0x128] sm:$0xff]
        %v2752 = vld [vmem:[%s9 + $0x130] sm:$0xff]
        %v2753 = vld [vmem:[%s9 + $0x138] sm:$0xff]
        %v2754 = vrot.slane %v2492, 3
        %v2755 = vsel %vm2515, %v2754, 0
        %2757 = vmatprep.subr.mxu0 0.0
        %2758 = vmatpush1.msra.mxu0 0.0
        %2759 = vmatprep.subr.mxu0 0.0
        %2760 = vmatpush1.msra.mxu0 0.0
        %2761 = vmatprep.subr.mxu0 0.0
        %2762 = vmatpush1.msra.mxu0 0.0
        %2763 = vmatprep.subr.mxu0 0.0
        %2764 = vmatpush1.msra.mxu0 0.0
        %2765 = vmatprep.subr.mxu0 0.0
        %2766 = vmatpush1.msra.mxu0 0.0
        %2767 = vmatprep.subr.mxu0 0.0
        %2768 = vmatpush1.msra.mxu0 0.0
        %2769 = vmatprep.subr.mxu0 0.0
        %2770 = vmatpush1.msra.mxu0 %v2753
        %2771 = vmatprep.subr.mxu0 0.0
        %2772 = vmatpush1.msra.mxu0 %v2752
        %2773 = vmatprep.subr.mxu0 0.0
        %2774 = vmatpush1.msra.mxu0 %v2751
        %2775 = vmatprep.subr.mxu0 0.0
        %2776 = vmatpush1.msra.mxu0 %v2750
        %2777 = vmatprep.subr.mxu0 0.0
        %2778 = vmatpush1.msra.mxu0 %v2749
        %2779 = vmatprep.subr.mxu0 0.0
        %2780 = vmatpush1.msra.mxu0 %v2748
        %2781 = vmatprep.subr.mxu0 0.0
        %2782 = vmatpush1.msra.mxu0 %v2747
        %2783 = vmatprep.subr.mxu0 0.0
        %2784 = vmatpush1.msra.mxu0 %v2746
        %2785 = vmatprep.subr.mxu0 0.0
        %2786 = vmatpush1.msra.mxu0 %v2745
        %2787 = vmatprep.subr.mxu0 0.0
        %2788 = vmatpush1.msra.mxu0 %v2744
        %2789 = vmatprep.subr.mxu0 0.0
        %2790 = vmatpush2.msra.mxu0 0.0
        %2791 = vmatprep.subr.mxu0 0.0
        %2792 = vmatpush2.msra.mxu0 0.0
        %2793 = vmatprep.subr.mxu0 0.0
        %2794 = vmatpush2.msra.mxu0 0.0
        %2795 = vmatprep.subr.mxu0 0.0
        %2796 = vmatpush2.msra.mxu0 0.0
        %2797 = vmatprep.subr.mxu0 0.0
        %2798 = vmatpush2.msra.mxu0 0.0
        %2799 = vmatprep.subr.mxu0 0.0
        %2800 = vmatpush2.msra.mxu0 0.0
        %2801 = vmatprep.subr.mxu0 0.0
        %2802 = vmatpush2.msra.mxu0 0.0
        %2803 = vmatprep.subr.mxu0 0.0
        %2804 = vmatpush2.msra.mxu0 0.0
        %2805 = vmatprep.subr.mxu0 0.0
        %2806 = vmatpush2.msra.mxu0 0.0
        %2807 = vmatprep.subr.mxu0 0.0
        %2808 = vmatpush2.msra.mxu0 0.0
        %2809 = vmatprep.subr.mxu0 0.0
        %2810 = vmatpush2.msra.mxu0 0.0
        %2811 = vmatprep.subr.mxu0 0.0
        %2812 = vmatpush2.msra.mxu0 0.0
        %2813 = vmatprep.subr.mxu0 0.0
        %2814 = vmatpush2.msra.mxu0 0.0
        %2815 = vmatprep.subr.mxu0 0.0
        %2816 = vmatpush2.msra.mxu0 0.0
        %2817 = vmatprep.subr.mxu0 0.0
        %2818 = vmatpush2.msra.mxu0 0.0
        %2819 = vmatprep.subr.mxu0 0.0
        %2820 = vmatpush2.msra.mxu0 0.0
        %2821 = vmatprep.mubr.f32.mxu0 0.0
        %2822 = vmatmul.mubr.f32.gmra.mxu0 %v2755
        %v2823 = vpop.f32.mrf.mxu0
        %v2824 = vadd.f32 0.0, %v2823
        %v2825 = vpop.f32.mrf.mxu0
        %2826 = vdwg.mxu0
        %v2827 = vadd.f32 %v2743, %v2824
        %v2828 = vld [vmem:[%s9 + $0x140] sm:$0xff]
        %v2829 = vld [vmem:[%s9 + $0x148] sm:$0xff]
        %v2830 = vld [vmem:[%s9 + $0x150] sm:$0xff]
        %v2831 = vld [vmem:[%s9 + $0x158] sm:$0xff]
        %v2832 = vld [vmem:[%s9 + $0x160] sm:$0xff]
        %v2833 = vld [vmem:[%s9 + $0x168] sm:$0xff]
        %v2834 = vld [vmem:[%s9 + $0x170] sm:$0xff]
        %v2835 = vld [vmem:[%s9 + $0x178] sm:$0xff]
        %v2836 = vld [vmem:[%s9 + $0x180] sm:$0xff]
        %v2837 = vld [vmem:[%s9 + $0x188] sm:$0xff]
        %v2838 = vrot.slane %v2492, 4
        %v2839 = vsel %vm2515, %v2838, 0
        %2841 = vmatprep.subr.mxu0 0.0
        %2842 = vmatpush1.msra.mxu0 0.0
        %2843 = vmatprep.subr.mxu0 0.0
        %2844 = vmatpush1.msra.mxu0 0.0
        %2845 = vmatprep.subr.mxu0 0.0
        %2846 = vmatpush1.msra.mxu0 0.0
        %2847 = vmatprep.subr.mxu0 0.0
        %2848 = vmatpush1.msra.mxu0 0.0
        %2849 = vmatprep.subr.mxu0 0.0
        %2850 = vmatpush1.msra.mxu0 0.0
        %2851 = vmatprep.subr.mxu0 0.0
        %2852 = vmatpush1.msra.mxu0 0.0
        %2853 = vmatprep.subr.mxu0 0.0
        %2854 = vmatpush1.msra.mxu0 %v2837
        %2855 = vmatprep.subr.mxu0 0.0
        %2856 = vmatpush1.msra.mxu0 %v2836
        %2857 = vmatprep.subr.mxu0 0.0
        %2858 = vmatpush1.msra.mxu0 %v2835
        %2859 = vmatprep.subr.mxu0 0.0
        %2860 = vmatpush1.msra.mxu0 %v2834
        %2861 = vmatprep.subr.mxu0 0.0
        %2862 = vmatpush1.msra.mxu0 %v2833
        %2863 = vmatprep.subr.mxu0 0.0
        %2864 = vmatpush1.msra.mxu0 %v2832
        %2865 = vmatprep.subr.mxu0 0.0
        %2866 = vmatpush1.msra.mxu0 %v2831
        %2867 = vmatprep.subr.mxu0 0.0
        %2868 = vmatpush1.msra.mxu0 %v2830
        %2869 = vmatprep.subr.mxu0 0.0
        %2870 = vmatpush1.msra.mxu0 %v2829
        %2871 = vmatprep.subr.mxu0 0.0
        %2872 = vmatpush1.msra.mxu0 %v2828
        %2873 = vmatprep.subr.mxu0 0.0
        %2874 = vmatpush2.msra.mxu0 0.0
        %2875 = vmatprep.subr.mxu0 0.0
        %2876 = vmatpush2.msra.mxu0 0.0
        %2877 = vmatprep.subr.mxu0 0.0
        %2878 = vmatpush2.msra.mxu0 0.0
        %2879 = vmatprep.subr.mxu0 0.0
        %2880 = vmatpush2.msra.mxu0 0.0
        %2881 = vmatprep.subr.mxu0 0.0
        %2882 = vmatpush2.msra.mxu0 0.0
        %2883 = vmatprep.subr.mxu0 0.0
        %2884 = vmatpush2.msra.mxu0 0.0
        %2885 = vmatprep.subr.mxu0 0.0
        %2886 = vmatpush2.msra.mxu0 0.0
        %2887 = vmatprep.subr.mxu0 0.0
        %2888 = vmatpush2.msra.mxu0 0.0
        %2889 = vmatprep.subr.mxu0 0.0
        %2890 = vmatpush2.msra.mxu0 0.0
        %2891 = vmatprep.subr.mxu0 0.0
        %2892 = vmatpush2.msra.mxu0 0.0
        %2893 = vmatprep.subr.mxu0 0.0
        %2894 = vmatpush2.msra.mxu0 0.0
        %2895 = vmatprep.subr.mxu0 0.0
        %2896 = vmatpush2.msra.mxu0 0.0
        %2897 = vmatprep.subr.mxu0 0.0
        %2898 = vmatpush2.msra.mxu0 0.0
        %2899 = vmatprep.subr.mxu0 0.0
        %2900 = vmatpush2.msra.mxu0 0.0
        %2901 = vmatprep.subr.mxu0 0.0
        %2902 = vmatpush2.msra.mxu0 0.0
        %2903 = vmatprep.subr.mxu0 0.0
        %2904 = vmatpush2.msra.mxu0 0.0
        %2905 = vmatprep.mubr.f32.mxu0 0.0
        %2906 = vmatmul.mubr.f32.gmra.mxu0 %v2839
        %v2907 = vpop.f32.mrf.mxu0
        %v2908 = vadd.f32 0.0, %v2907
        %v2909 = vpop.f32.mrf.mxu0
        %2910 = vdwg.mxu0
        %v2911 = vadd.f32 %v2827, %v2908
        %v2912 = vld [vmem:[%s10] sm:$0x1]
        %v2913 = vadd.f32 %v2911, %v2912
        %v2914 = vmax.f32 %v2913, 0.0
        %v2915 = vld [vmem:[%s11] sm:$0xff]
        %v2916 = vld [vmem:[%s11 + $0x8] sm:$0xff]
        %v2917 = vld [vmem:[%s11 + $0x10] sm:$0xff]
        %v2918 = vld [vmem:[%s11 + $0x18] sm:$0xff]
        %v2919 = vld [vmem:[%s11 + $0x20] sm:$0xff]
        %v2920 = vld [vmem:[%s11 + $0x28] sm:$0xff]
        %v2921 = vld [vmem:[%s11 + $0x30] sm:$0xff]
        %v2922 = vld [vmem:[%s11 + $0x38] sm:$0xff]
        %v2923 = vld [vmem:[%s11 + $0x40] sm:$0xff]
        %v2924 = vld [vmem:[%s11 + $0x48] sm:$0xff]
        %v2925 = vld [vmem:[%s11 + $0x50] sm:$0xff]
        %v2926 = vld [vmem:[%s11 + $0x58] sm:$0xff]
        %v2927 = vld [vmem:[%s11 + $0x60] sm:$0xff]
        %v2928 = vld [vmem:[%s11 + $0x68] sm:$0xff]
        %v2929 = vld [vmem:[%s11 + $0x70] sm:$0xff]
        %v2930 = vld [vmem:[%s12] sm:$0x1]
        %vm2931 = vcmask 982016
        %v2933 = vsel %vm2931, %v2914, 0
        %2935 = vmatprep.subr.mxu0 0.0
        %2936 = vmatpush1.msra.mxu0 0.0
        %2937 = vmatprep.subr.mxu0 0.0
        %2938 = vmatpush1.msra.mxu0 %v2929
        %2939 = vmatprep.subr.mxu0 0.0
        %2940 = vmatpush1.msra.mxu0 %v2928
        %2941 = vmatprep.subr.mxu0 0.0
        %2942 = vmatpush1.msra.mxu0 %v2927
        %2943 = vmatprep.subr.mxu0 0.0
        %2944 = vmatpush1.msra.mxu0 %v2926
        %2945 = vmatprep.subr.mxu0 0.0
        %2946 = vmatpush1.msra.mxu0 %v2925
        %2947 = vmatprep.subr.mxu0 0.0
        %2948 = vmatpush1.msra.mxu0 %v2924
        %2949 = vmatprep.subr.mxu0 0.0
        %2950 = vmatpush1.msra.mxu0 %v2923
        %2951 = vmatprep.subr.mxu0 0.0
        %2952 = vmatpush1.msra.mxu0 %v2922
        %2953 = vmatprep.subr.mxu0 0.0
        %2954 = vmatpush1.msra.mxu0 %v2921
        %2955 = vmatprep.subr.mxu0 0.0
        %2956 = vmatpush1.msra.mxu0 %v2920
        %2957 = vmatprep.subr.mxu0 0.0
        %2958 = vmatpush1.msra.mxu0 %v2919
        %2959 = vmatprep.subr.mxu0 0.0
        %2960 = vmatpush1.msra.mxu0 %v2918
        %2961 = vmatprep.subr.mxu0 0.0
        %2962 = vmatpush1.msra.mxu0 %v2917
        %2963 = vmatprep.subr.mxu0 0.0
        %2964 = vmatpush1.msra.mxu0 %v2916
        %2965 = vmatprep.subr.mxu0 0.0
        %2966 = vmatpush1.msra.mxu0 %v2915
        %2967 = vmatprep.subr.mxu0 0.0
        %2968 = vmatpush2.msra.mxu0 0.0
        %2969 = vmatprep.subr.mxu0 0.0
        %2970 = vmatpush2.msra.mxu0 0.0
        %2971 = vmatprep.subr.mxu0 0.0
        %2972 = vmatpush2.msra.mxu0 0.0
        %2973 = vmatprep.subr.mxu0 0.0
        %2974 = vmatpush2.msra.mxu0 0.0
        %2975 = vmatprep.subr.mxu0 0.0
        %2976 = vmatpush2.msra.mxu0 0.0
        %2977 = vmatprep.subr.mxu0 0.0
        %2978 = vmatpush2.msra.mxu0 0.0
        %2979 = vmatprep.subr.mxu0 0.0
        %2980 = vmatpush2.msra.mxu0 0.0
        %2981 = vmatprep.subr.mxu0 0.0
        %2982 = vmatpush2.msra.mxu0 0.0
        %2983 = vmatprep.subr.mxu0 0.0
        %2984 = vmatpush2.msra.mxu0 0.0
        %2985 = vmatprep.subr.mxu0 0.0
        %2986 = vmatpush2.msra.mxu0 0.0
        %2987 = vmatprep.subr.mxu0 0.0
        %2988 = vmatpush2.msra.mxu0 0.0
        %2989 = vmatprep.subr.mxu0 0.0
        %2990 = vmatpush2.msra.mxu0 0.0
        %2991 = vmatprep.subr.mxu0 0.0
        %2992 = vmatpush2.msra.mxu0 0.0
        %2993 = vmatprep.subr.mxu0 0.0
        %2994 = vmatpush2.msra.mxu0 0.0
        %2995 = vmatprep.subr.mxu0 0.0
        %2996 = vmatpush2.msra.mxu0 0.0
        %2997 = vmatprep.subr.mxu0 0.0
        %2998 = vmatpush2.msra.mxu0 0.0
        %2999 = vmatprep.mubr.f32.mxu0 0.0
        %3000 = vmatmul.mubr.f32.gmra.mxu0 %v2933
        %v3001 = vpop.f32.mrf.mxu0
        %v3002 = vadd.f32 %v2930, %v3001
        %v3003 = vpop.f32.mrf.mxu0
        %3004 = vdwg.mxu0
        %v3005 = vmax.f32 %v3002, 0.0
        %v3006 = vld [vmem:[%s13] sm:$0xff]
        %v3007 = vld [vmem:[%s13 + $0x8] sm:$0xff]
        %v3008 = vld [vmem:[%s13 + $0x10] sm:$0xff]
        %v3009 = vld [vmem:[%s13 + $0x18] sm:$0xff]
        %v3010 = vld [vmem:[%s13 + $0x20] sm:$0xff]
        %v3011 = vld [vmem:[%s13 + $0x28] sm:$0xff]
        %v3012 = vld [vmem:[%s13 + $0x30] sm:$0xff]
        %v3013 = vld [vmem:[%s13 + $0x38] sm:$0xff]
        %v3014 = vld [vmem:[%s13 + $0x40] sm:$0xff]
        %v3015 = vld [vmem:[%s13 + $0x48] sm:$0xff]
        %v3016 = vld [vmem:[%s13 + $0x50] sm:$0xf]
        %v3017 = vld [vmem:[%s14] sm:$0x1]
        %v3019 = vsel %vm1611, %v3005, 0
        %v3022 = vsel %vm1053, %v3016, 0
        %3024 = vmatprep.subr.mxu0 0.0
        %3025 = vmatpush1.msra.mxu0 0.0
        %3026 = vmatprep.subr.mxu0 0.0
        %3027 = vmatpush1.msra.mxu0 0.0
        %3028 = vmatprep.subr.mxu0 0.0
        %3029 = vmatpush1.msra.mxu0 0.0
        %3030 = vmatprep.subr.mxu0 0.0
        %3031 = vmatpush1.msra.mxu0 0.0
        %3032 = vmatprep.subr.mxu0 0.0
        %3033 = vmatpush1.msra.mxu0 0.0
        %3034 = vmatprep.subr.mxu0 0.0
        %3035 = vmatpush1.msra.mxu0 %v3022
        %3036 = vmatprep.subr.mxu0 0.0
        %3037 = vmatpush1.msra.mxu0 %v3015
        %3038 = vmatprep.subr.mxu0 0.0
        %3039 = vmatpush1.msra.mxu0 %v3014
        %3040 = vmatprep.subr.mxu0 0.0
        %3041 = vmatpush1.msra.mxu0 %v3013
        %3042 = vmatprep.subr.mxu0 0.0
        %3043 = vmatpush1.msra.mxu0 %v3012
        %3044 = vmatprep.subr.mxu0 0.0
        %3045 = vmatpush1.msra.mxu0 %v3011
        %3046 = vmatprep.subr.mxu0 0.0
        %3047 = vmatpush1.msra.mxu0 %v3010
        %3048 = vmatprep.subr.mxu0 0.0
        %3049 = vmatpush1.msra.mxu0 %v3009
        %3050 = vmatprep.subr.mxu0 0.0
        %3051 = vmatpush1.msra.mxu0 %v3008
        %3052 = vmatprep.subr.mxu0 0.0
        %3053 = vmatpush1.msra.mxu0 %v3007
        %3054 = vmatprep.subr.mxu0 0.0
        %3055 = vmatpush1.msra.mxu0 %v3006
        %3056 = vmatprep.subr.mxu0 0.0
        %3057 = vmatpush2.msra.mxu0 0.0
        %3058 = vmatprep.subr.mxu0 0.0
        %3059 = vmatpush2.msra.mxu0 0.0
        %3060 = vmatprep.subr.mxu0 0.0
        %3061 = vmatpush2.msra.mxu0 0.0
        %3062 = vmatprep.subr.mxu0 0.0
        %3063 = vmatpush2.msra.mxu0 0.0
        %3064 = vmatprep.subr.mxu0 0.0
        %3065 = vmatpush2.msra.mxu0 0.0
        %3066 = vmatprep.subr.mxu0 0.0
        %3067 = vmatpush2.msra.mxu0 0.0
        %3068 = vmatprep.subr.mxu0 0.0
        %3069 = vmatpush2.msra.mxu0 0.0
        %3070 = vmatprep.subr.mxu0 0.0
        %3071 = vmatpush2.msra.mxu0 0.0
        %3072 = vmatprep.subr.mxu0 0.0
        %3073 = vmatpush2.msra.mxu0 0.0
        %3074 = vmatprep.subr.mxu0 0.0
        %3075 = vmatpush2.msra.mxu0 0.0
        %3076 = vmatprep.subr.mxu0 0.0
        %3077 = vmatpush2.msra.mxu0 0.0
        %3078 = vmatprep.subr.mxu0 0.0
        %3079 = vmatpush2.msra.mxu0 0.0
        %3080 = vmatprep.subr.mxu0 0.0
        %3081 = vmatpush2.msra.mxu0 0.0
        %3082 = vmatprep.subr.mxu0 0.0
        %3083 = vmatpush2.msra.mxu0 0.0
        %3084 = vmatprep.subr.mxu0 0.0
        %3085 = vmatpush2.msra.mxu0 0.0
        %3086 = vmatprep.subr.mxu0 0.0
        %3087 = vmatpush2.msra.mxu0 0.0
        %3088 = vmatprep.mubr.f32.mxu0 0.0
        %3089 = vmatmul.mubr.f32.gmra.mxu0 %v3019
        %v3090 = vpop.f32.mrf.mxu0
        %v3091 = vadd.f32 %v3017, %v3090
        %v3092 = vpop.f32.mrf.mxu0
        %3093 = vdwg.mxu0
        %3094 = vst [vmem:[%s486] sm:$0x1] %v3091
        %s3095 = sand.u32 %s357, 1
        %s3096 = scalar_lea.sflag [#allocation3], %s3095
        %s3097 = sand.u32 %s357, 1
        %s3098 = scalar_lea.vmem [#allocation2], %s3097
        // Predicated region
        $region81: #{net_forward.1} parent=79 // pred_check
          %p3099 = pneg %p367
        $region82: #{net_forward.1} parent=79 // pred_check_branch
          %3101 = sbr.rel (%p3099) target = $region84
        $region83: #{net_forward.1} parent=79 // pred_region
          %s3103 = ssub.s32 16, 16
          %3104 = vsyncadd %s3096, %s3103
          %s3105 = smul.addr %s29, 16
          %s3106 = scalar_lea.hbm %s15, %s3105
          %s3108 = sshll.u32 %s3098, 4
          %s3109 = int_to_ptr.vmem [resolvable:$true] %s3108
          %3111 = dma.vmem_to_hbm [thread:$0]  %s3109, 16, %s3106, %s3096
        $region84: #{net_forward.1} parent=79 // pred_fallthru
          _
      $region80: #{net_forward.1} parent=5 // pred_fallthru
        _
      %p3112 = scmp.le.s32.totalorder 2, %s24
      // Predicated region
      $region85: #{net_forward.1} parent=5 // pred_check
        %p3113 = pneg %p3112
      $region86: #{net_forward.1} parent=5 // pred_check_branch
        %3115 = sbr.rel (%p3113) target = $region88
      $region87: #{net_forward.1} parent=5 // pred_region
        %s3116 = ssub.s32 %s24, 2
        // Predicated region
        $region89: #{net_forward.1} parent=87 // pred_check
          %p3117 = pneg %p373
        $region90: #{net_forward.1} parent=87 // pred_check_branch
          %3119 = sbr.rel (%p3117) target = $region92
        $region91: #{net_forward.1} parent=87 // pred_region
          %s3120 = sand.u32 %s358, 1
          %s3121 = scalar_lea.sflag [#allocation3], %s3120
          %s3122 = sand.u32 %s358, 1
          %s3123 = scalar_lea.vmem [#allocation2], %s3122
          %3124 = dma.done %s3121, 16
        $region92: #{net_forward.1} parent=87 // pred_fallthru
          _
      $region88: #{net_forward.1} parent=5 // pred_fallthru
        _
    $region6: #{net_forward.1} parent=1 // loop_footer
      %s28 = sadd.s32 1, %s24
    $region7: #{net_forward.1} parent=1 // loop_footer_branch
      %23 = sbr.rel target = $region3
    $region8: #{net_forward.1} parent=1 // loop_exit
      _
    %3125 = vsyncpa [#allocation3], 1
    %s3126 = scalar_lea.sflag [#allocation3], 1
    %3127 = vsyncpa %s3126, 1

</llo_original>
